<compile_context>
chip_gen: v5e
topology: v5e:2x2
jax: 0.10.0
libtpu: 0.0.40
codegen_flags: <defaults>
</compile_context>

<pallas_src>
import functools
import math

import jax
import jax.numpy as jnp
from jax import lax
from jax.experimental import pallas as pl
from jax.experimental.pallas import tpu as pltpu

NEG_INF = -1e30
BN_EPS = 1e-5
LEAKY_SLOPE = 0.2

_VMEM = pl.BlockSpec(memory_space=pltpu.MemorySpace.VMEM)


# ----------------------------- in-kernel helpers ------------------------------
def _gat(x, adj, w, a_src, a_dst, bias, final_sigmoid):
    """Single-head GATConv + fused relu/sigmoid on VMEM-resident values."""
    h = jnp.dot(x, w, preferred_element_type=jnp.float32)             # (N, Fo)
    # destination scores stay sublane-oriented
    s_dst = jnp.sum(h * a_dst, axis=-1, keepdims=True)                # (N, 1)
    # source scores computed directly in lane orientation (1, N) by
    # contracting the feature axis -> no sublane<->lane transpose emitted.
    s_src = lax.dot_general(a_src, h, (((1,), (1,)), ((), ())),
                            preferred_element_type=jnp.float32)       # (1, N)
    # e[i, j] = LeakyReLU(s_dst_i + s_src_j) for edge j -> i
    e = s_dst + s_src                                                  # (N, N)
    e = jnp.where(e > 0, e, LEAKY_SLOPE * e)
    e = jnp.where(adj > 0, e, NEG_INF)
    e = e - jnp.max(e, axis=-1, keepdims=True)
    p = jnp.where(adj > 0, jnp.exp(e), 0.0)
    alpha = p / jnp.sum(p, axis=-1, keepdims=True)                     # rows have self-loops
    out = jnp.dot(alpha, h, preferred_element_type=jnp.float32) + bias
    return jax.nn.sigmoid(out) if final_sigmoid else jnp.maximum(out, 0.0)


def _ta(temp, xj, wc_ref, bc_ref, gamma_ref, beta_ref, mod_idx, n_layers_ta):
    """One TA module (n_layers_ta Conv1d(k=1)+BN blocks), fused with x[j]*mask."""
    h = temp
    mask = None
    for b in range(n_layers_ta):
        k = mod_idx * n_layers_ta + b        # static index into stacked params
        y = (jnp.dot(wc_ref[k], h, preferred_element_type=jnp.float32)
             + bc_ref[k])
        # training-mode BatchNorm1d over the gene (sublane) axis, per-feature
        # affine; single-pass biased variance.
        mean = jnp.mean(y, axis=0, keepdims=True)
        var = jnp.mean(y * y, axis=0, keepdims=True) - mean * mean
        y = (y - mean) * lax.rsqrt(var + BN_EPS) * gamma_ref[k] + beta_ref[k]
        if b == n_layers_ta - 1:
            mask = jax.nn.sigmoid(y)
        else:
            h = jnp.maximum(y, 0.0)
    return xj * mask


# ------------------------------ fused encoder kernel ---------------------------
def _encoder_kernel(*refs, n_layers, n_ts, n_layers_ta):
    x_ref, adj_ref = refs[0], refs[1]
    gat_p, ta_p = [], []
    idx = 2
    for _ in range(n_layers):
        gat_p.append(refs[idx:idx + 4]); idx += 4      # w, att_src, att_dst, bias
        ta_p.append(refs[idx:idx + 4]); idx += 4       # wc, bc, gamma, beta
    o_ref = refs[idx]

    tm1 = n_ts - 1
    x_list = [x_ref[j] for j in range(tm1)]
    adj_list = [adj_ref[j] for j in range(tm1)]

    # stacked GAT layers (Python-unrolled; shapes differ per layer)
    for i in range(n_layers):
        final = i == n_layers - 1
        w_r, asrc_r, adst_r, bias_r = gat_p[i]
        new_list = []
        temp = None
        for j in range(tm1):
            if i == 0 or j == 0:
                temp = x_list[j]
            else:
                wc_r, bc_r, g_r, be_r = ta_p[i - 1]
                temp = _ta(temp, x_list[j], wc_r, bc_r, g_r, be_r,
                           j - 1, n_layers_ta)
            new_list.append(
                _gat(temp, adj_list[j], w_r[j], asrc_r[j], adst_r[j],
                     bias_r[j], final))
        x_list = new_list

    # final TA chain on the last layer's (sigmoid) outputs
    wc_r, bc_r, g_r, be_r = ta_p[n_layers - 1]
    temp = x_list[0]
    o_ref[0] = temp
    for j in range(n_ts - 2):
        temp = _ta(temp, x_list[j + 1], wc_r, bc_r, g_r, be_r, j, n_layers_ta)
        o_ref[j + 1] = temp


def ta_gat_encoder_forward(x, adj, params, filter_dims, n_timestamps,
                           n_layers_ta):
    n_layers = len(filter_dims) - 1
    n = x.shape[1]
    args = [x, adj]
    for i in range(n_layers):
        g, t = params["gat"][i], params["ta"][i]
        args += [g["w"], g["att_src"], g["att_dst"], g["bias"],
                 t["wc"], t["bc"], t["gamma"], t["beta"]]
    kernel = functools.partial(_encoder_kernel, n_layers=n_layers,
                               n_ts=n_timestamps, n_layers_ta=n_layers_ta)
    # TODO(synk): if N_GENES/F ever grow to realistic sizes, split the dense
    # (N,N) attention into a flash-style row/col grid instead of one VMEM tile.
    return pl.pallas_call(
        kernel,
        out_shape=jax.ShapeDtypeStruct((n_timestamps - 1, n, filter_dims[-1]),
                                       jnp.float32),
        in_specs=[_VMEM] * len(args),
        out_specs=_VMEM,
    )(*args)


# ----------------------- parameter initialization -----------------------------
def _kaiming_uniform(key, shape, fan_in):
    bound = math.sqrt(6.0 / fan_in)
    return jax.random.uniform(key, shape, jnp.float32, -bound, bound)


def init_params(key, filter_dims, n_genes, n_timestamps, n_layers_ta):
    n_layers = len(filter_dims) - 1
    tm1, tm2 = n_timestamps - 1, n_timestamps - 2
    params = {"gat": [], "ta": []}
    for i in range(n_layers):
        fin, fout = filter_dims[i], filter_dims[i + 1]
        key, kw, ks, kd = jax.random.split(key, 4)
        params["gat"].append({
            # torch lin.weight is (out, in); stored transposed as (in, out),
            # stacked over the T-1 timestamps.
            "w": _kaiming_uniform(kw, (tm1, fin, fout), fan_in=fin),
            "att_src": 0.1 * jax.random.normal(ks, (tm1, 1, fout), jnp.float32),
            "att_dst": 0.1 * jax.random.normal(kd, (tm1, 1, fout), jnp.float32),
            "bias": jnp.zeros((tm1, 1, fout), jnp.float32),
        })
        key, kc, kb = jax.random.split(key, 3)
        nb = tm2 * n_layers_ta           # (module, block) flattened to one axis
        params["ta"].append({
            # Conv1d weight (N, N, 1) -> (N, N); kaiming fan_in = N
            "wc": _kaiming_uniform(kc, (nb, n_genes, n_genes), fan_in=n_genes),
            "bc": 0.05 * jax.random.normal(kb, (nb, n_genes, 1), jnp.float32),
            "gamma": jnp.ones((nb, 1, fout), jnp.float32),
            "beta": jnp.zeros((nb, 1, fout), jnp.float32),
        })
    return params


# ------------------------------------ main --------------------------------------
if __name__ == "__main__":
    FILTER = [8, 16, 8]          # feature dims per layer
    N_GENES = 16
    N_TIMESTAMPS = 4             # -> T-1 = 3 graphs per layer
    N_LAYERS_TA = 2

    key = jax.random.PRNGKey(0)
    key, kx, ka = jax.random.split(key, 3)

    x = jax.random.normal(kx, (N_TIMESTAMPS - 1, N_GENES, FILTER[0]),
                          jnp.float32)
    adj = (jax.random.uniform(ka, (N_TIMESTAMPS - 1, N_GENES, N_GENES))
           < 0.3).astype(jnp.float32)
    adj = jnp.maximum(adj, jnp.eye(N_GENES, dtype=jnp.float32)[None])  # self-loops

    params = init_params(key, FILTER, N_GENES, N_TIMESTAMPS, N_LAYERS_TA)

    out = ta_gat_encoder_forward(x, adj, params, FILTER, N_TIMESTAMPS,
                                 N_LAYERS_TA)
    out = jax.block_until_ready(out)

    assert out.shape == (N_TIMESTAMPS - 1, N_GENES, FILTER[-1])
    assert bool(jnp.all(jnp.isfinite(out)))
    print("KERNEL_OK")
</pallas_src>

<mosaic_0001>
module attributes {stable_mosaic.version = 11 : i64} {
  func.func @_encoder_kernel(%arg0: memref<3x16x8xf32, #tpu.memory_space<vmem>>, %arg1: memref<3x16x16xf32, #tpu.memory_space<vmem>>, %arg2: memref<3x8x16xf32, #tpu.memory_space<vmem>>, %arg3: memref<3x1x16xf32, #tpu.memory_space<vmem>>, %arg4: memref<3x1x16xf32, #tpu.memory_space<vmem>>, %arg5: memref<3x1x16xf32, #tpu.memory_space<vmem>>, %arg6: memref<4x16x16xf32, #tpu.memory_space<vmem>>, %arg7: memref<4x16x1xf32, #tpu.memory_space<vmem>>, %arg8: memref<4x1x16xf32, #tpu.memory_space<vmem>>, %arg9: memref<4x1x16xf32, #tpu.memory_space<vmem>>, %arg10: memref<3x16x8xf32, #tpu.memory_space<vmem>>, %arg11: memref<3x1x8xf32, #tpu.memory_space<vmem>>, %arg12: memref<3x1x8xf32, #tpu.memory_space<vmem>>, %arg13: memref<3x1x8xf32, #tpu.memory_space<vmem>>, %arg14: memref<4x16x16xf32, #tpu.memory_space<vmem>>, %arg15: memref<4x16x1xf32, #tpu.memory_space<vmem>>, %arg16: memref<4x1x8xf32, #tpu.memory_space<vmem>>, %arg17: memref<4x1x8xf32, #tpu.memory_space<vmem>>, %arg18: memref<3x16x8xf32, #tpu.memory_space<vmem>>) attributes {dimension_semantics = [], scalar_prefetch = 0 : i64, scratch_operands = 0 : i64, tpu.core_type = #tpu.core_type<tc>} {
    %c0 = arith.constant 0 : index
    %c0_0 = arith.constant 0 : index
    %c0_1 = arith.constant 0 : index
    %0 = vector.load %arg0[%c0, %c0_0, %c0_1] : memref<3x16x8xf32, #tpu.memory_space<vmem>>, vector<1x16x8xf32>
    %1 = vector.shape_cast %0 : vector<1x16x8xf32> to vector<16x8xf32>
    %c1 = arith.constant 1 : index
    %c0_2 = arith.constant 0 : index
    %c0_3 = arith.constant 0 : index
    %2 = vector.load %arg0[%c1, %c0_2, %c0_3] : memref<3x16x8xf32, #tpu.memory_space<vmem>>, vector<1x16x8xf32>
    %3 = vector.shape_cast %2 : vector<1x16x8xf32> to vector<16x8xf32>
    %c2 = arith.constant 2 : index
    %c0_4 = arith.constant 0 : index
    %c0_5 = arith.constant 0 : index
    %4 = vector.load %arg0[%c2, %c0_4, %c0_5] : memref<3x16x8xf32, #tpu.memory_space<vmem>>, vector<1x16x8xf32>
    %5 = vector.shape_cast %4 : vector<1x16x8xf32> to vector<16x8xf32>
    %c0_6 = arith.constant 0 : index
    %c0_7 = arith.constant 0 : index
    %c0_8 = arith.constant 0 : index
    %6 = vector.load %arg1[%c0_6, %c0_7, %c0_8] : memref<3x16x16xf32, #tpu.memory_space<vmem>>, vector<1x16x16xf32>
    %7 = vector.shape_cast %6 : vector<1x16x16xf32> to vector<16x16xf32>
    %c1_9 = arith.constant 1 : index
    %c0_10 = arith.constant 0 : index
    %c0_11 = arith.constant 0 : index
    %8 = vector.load %arg1[%c1_9, %c0_10, %c0_11] : memref<3x16x16xf32, #tpu.memory_space<vmem>>, vector<1x16x16xf32>
    %9 = vector.shape_cast %8 : vector<1x16x16xf32> to vector<16x16xf32>
    %c2_12 = arith.constant 2 : index
    %c0_13 = arith.constant 0 : index
    %c0_14 = arith.constant 0 : index
    %10 = vector.load %arg1[%c2_12, %c0_13, %c0_14] : memref<3x16x16xf32, #tpu.memory_space<vmem>>, vector<1x16x16xf32>
    %11 = vector.shape_cast %10 : vector<1x16x16xf32> to vector<16x16xf32>
    %c0_15 = arith.constant 0 : index
    %c0_16 = arith.constant 0 : index
    %c0_17 = arith.constant 0 : index
    %12 = vector.load %arg2[%c0_15, %c0_16, %c0_17] : memref<3x8x16xf32, #tpu.memory_space<vmem>>, vector<1x8x16xf32>
    %13 = vector.shape_cast %12 : vector<1x8x16xf32> to vector<8x16xf32>
    %c0_18 = arith.constant 0 : index
    %c0_19 = arith.constant 0 : index
    %c0_20 = arith.constant 0 : index
    %14 = vector.load %arg3[%c0_18, %c0_19, %c0_20] : memref<3x1x16xf32, #tpu.memory_space<vmem>>, vector<1x1x16xf32>
    %15 = vector.shape_cast %14 : vector<1x1x16xf32> to vector<1x16xf32>
    %c0_21 = arith.constant 0 : index
    %c0_22 = arith.constant 0 : index
    %c0_23 = arith.constant 0 : index
    %16 = vector.load %arg4[%c0_21, %c0_22, %c0_23] : memref<3x1x16xf32, #tpu.memory_space<vmem>>, vector<1x1x16xf32>
    %17 = vector.shape_cast %16 : vector<1x1x16xf32> to vector<1x16xf32>
    %c0_24 = arith.constant 0 : index
    %c0_25 = arith.constant 0 : index
    %c0_26 = arith.constant 0 : index
    %18 = vector.load %arg5[%c0_24, %c0_25, %c0_26] : memref<3x1x16xf32, #tpu.memory_space<vmem>>, vector<1x1x16xf32>
    %19 = vector.shape_cast %18 : vector<1x1x16xf32> to vector<1x16xf32>
    %cst = arith.constant dense<0.000000e+00> : vector<16x16xf32>
    %20 = tpu.matmul %1, %13, %cst {dimension_numbers = #tpu.dot_dimension_numbers<[1], [0], [0], [1], [0, 0, 1, 1], [], []>} : vector<16x8xf32>, vector<8x16xf32>, vector<16x16xf32> -> vector<16x16xf32>
    %21 = vector.broadcast %17 : vector<1x16xf32> to vector<16x16xf32>
    %22 = arith.mulf %20, %21 : vector<16x16xf32>
    %cst_27 = arith.constant dense<0.000000e+00> : vector<16xf32>
    %23 = vector.multi_reduction <add>, %22, %cst_27 [1] : vector<16x16xf32> to vector<16xf32>
    %24 = vector.shape_cast %23 : vector<16xf32> to vector<16x1xf32>
    %cst_28 = arith.constant dense<0.000000e+00> : vector<1x16xf32>
    %25 = tpu.matmul %15, %20, %cst_28 {dimension_numbers = #tpu.dot_dimension_numbers<[1], [1], [0], [0], [0, 0, 1, 0], [], []>} : vector<1x16xf32>, vector<16x16xf32>, vector<1x16xf32> -> vector<1x16xf32>
    %26 = vector.broadcast %24 : vector<16x1xf32> to vector<16x16xf32>
    %27 = vector.broadcast %25 : vector<1x16xf32> to vector<16x16xf32>
    %28 = arith.addf %26, %27 : vector<16x16xf32>
    %cst_29 = arith.constant 0.000000e+00 : f32
    %29 = vector.broadcast %cst_29 : f32 to vector<16x16xf32>
    %30 = arith.cmpf ogt, %28, %29 : vector<16x16xf32>
    %cst_30 = arith.constant 2.000000e-01 : f32
    %31 = vector.broadcast %cst_30 : f32 to vector<16x16xf32>
    %32 = arith.mulf %31, %28 : vector<16x16xf32>
    %33 = arith.select %30, %28, %32 : vector<16x16xi1>, vector<16x16xf32>
    %cst_31 = arith.constant 0.000000e+00 : f32
    %34 = vector.broadcast %cst_31 : f32 to vector<16x16xf32>
    %35 = arith.cmpf ogt, %7, %34 : vector<16x16xf32>
    %cst_32 = arith.constant -1.000000e+30 : f32
    %36 = vector.broadcast %cst_32 : f32 to vector<16x16xf32>
    %37 = arith.select %35, %33, %36 : vector<16x16xi1>, vector<16x16xf32>
    %cst_33 = arith.constant dense<0xFF800000> : vector<16xf32>
    %38 = vector.multi_reduction <maximumf>, %37, %cst_33 [1] : vector<16x16xf32> to vector<16xf32>
    %39 = vector.shape_cast %38 : vector<16xf32> to vector<16x1xf32>
    %40 = vector.broadcast %39 : vector<16x1xf32> to vector<16x16xf32>
    %41 = arith.subf %37, %40 : vector<16x16xf32>
    %cst_34 = arith.constant 0.000000e+00 : f32
    %42 = vector.broadcast %cst_34 : f32 to vector<16x16xf32>
    %43 = arith.cmpf ogt, %7, %42 : vector<16x16xf32>
    %44 = math.exp %41 : vector<16x16xf32>
    %cst_35 = arith.constant 0.000000e+00 : f32
    %45 = vector.broadcast %cst_35 : f32 to vector<16x16xf32>
    %46 = arith.select %43, %44, %45 : vector<16x16xi1>, vector<16x16xf32>
    %cst_36 = arith.constant dense<0.000000e+00> : vector<16xf32>
    %47 = vector.multi_reduction <add>, %46, %cst_36 [1] : vector<16x16xf32> to vector<16xf32>
    %48 = vector.shape_cast %47 : vector<16xf32> to vector<16x1xf32>
    %49 = vector.broadcast %48 : vector<16x1xf32> to vector<16x16xf32>
    %50 = arith.divf %46, %49 : vector<16x16xf32>
    %cst_37 = arith.constant dense<0.000000e+00> : vector<16x16xf32>
    %51 = tpu.matmul %50, %20, %cst_37 {dimension_numbers = #tpu.dot_dimension_numbers<[1], [0], [0], [1], [0, 0, 1, 1], [], []>} : vector<16x16xf32>, vector<16x16xf32>, vector<16x16xf32> -> vector<16x16xf32>
    %52 = vector.broadcast %19 : vector<1x16xf32> to vector<16x16xf32>
    %53 = arith.addf %51, %52 : vector<16x16xf32>
    %cst_38 = arith.constant 0.000000e+00 : f32
    %54 = vector.broadcast %cst_38 : f32 to vector<16x16xf32>
    %55 = arith.maximumf %53, %54 : vector<16x16xf32>
    %c1_39 = arith.constant 1 : index
    %c0_40 = arith.constant 0 : index
    %c0_41 = arith.constant 0 : index
    %56 = vector.load %arg2[%c1_39, %c0_40, %c0_41] : memref<3x8x16xf32, #tpu.memory_space<vmem>>, vector<1x8x16xf32>
    %57 = vector.shape_cast %56 : vector<1x8x16xf32> to vector<8x16xf32>
    %c1_42 = arith.constant 1 : index
    %c0_43 = arith.constant 0 : index
    %c0_44 = arith.constant 0 : index
    %58 = vector.load %arg3[%c1_42, %c0_43, %c0_44] : memref<3x1x16xf32, #tpu.memory_space<vmem>>, vector<1x1x16xf32>
    %59 = vector.shape_cast %58 : vector<1x1x16xf32> to vector<1x16xf32>
    %c1_45 = arith.constant 1 : index
    %c0_46 = arith.constant 0 : index
    %c0_47 = arith.constant 0 : index
    %60 = vector.load %arg4[%c1_45, %c0_46, %c0_47] : memref<3x1x16xf32, #tpu.memory_space<vmem>>, vector<1x1x16xf32>
    %61 = vector.shape_cast %60 : vector<1x1x16xf32> to vector<1x16xf32>
    %c1_48 = arith.constant 1 : index
    %c0_49 = arith.constant 0 : index
    %c0_50 = arith.constant 0 : index
    %62 = vector.load %arg5[%c1_48, %c0_49, %c0_50] : memref<3x1x16xf32, #tpu.memory_space<vmem>>, vector<1x1x16xf32>
    %63 = vector.shape_cast %62 : vector<1x1x16xf32> to vector<1x16xf32>
    %cst_51 = arith.constant dense<0.000000e+00> : vector<16x16xf32>
    %64 = tpu.matmul %3, %57, %cst_51 {dimension_numbers = #tpu.dot_dimension_numbers<[1], [0], [0], [1], [0, 0, 1, 1], [], []>} : vector<16x8xf32>, vector<8x16xf32>, vector<16x16xf32> -> vector<16x16xf32>
    %65 = vector.broadcast %61 : vector<1x16xf32> to vector<16x16xf32>
    %66 = arith.mulf %64, %65 : vector<16x16xf32>
    %cst_52 = arith.constant dense<0.000000e+00> : vector<16xf32>
    %67 = vector.multi_reduction <add>, %66, %cst_52 [1] : vector<16x16xf32> to vector<16xf32>
    %68 = vector.shape_cast %67 : vector<16xf32> to vector<16x1xf32>
    %cst_53 = arith.constant dense<0.000000e+00> : vector<1x16xf32>
    %69 = tpu.matmul %59, %64, %cst_53 {dimension_numbers = #tpu.dot_dimension_numbers<[1], [1], [0], [0], [0, 0, 1, 0], [], []>} : vector<1x16xf32>, vector<16x16xf32>, vector<1x16xf32> -> vector<1x16xf32>
    %70 = vector.broadcast %68 : vector<16x1xf32> to vector<16x16xf32>
    %71 = vector.broadcast %69 : vector<1x16xf32> to vector<16x16xf32>
    %72 = arith.addf %70, %71 : vector<16x16xf32>
    %cst_54 = arith.constant 0.000000e+00 : f32
    %73 = vector.broadcast %cst_54 : f32 to vector<16x16xf32>
    %74 = arith.cmpf ogt, %72, %73 : vector<16x16xf32>
    %cst_55 = arith.constant 2.000000e-01 : f32
    %75 = vector.broadcast %cst_55 : f32 to vector<16x16xf32>
    %76 = arith.mulf %75, %72 : vector<16x16xf32>
    %77 = arith.select %74, %72, %76 : vector<16x16xi1>, vector<16x16xf32>
    %cst_56 = arith.constant 0.000000e+00 : f32
    %78 = vector.broadcast %cst_56 : f32 to vector<16x16xf32>
    %79 = arith.cmpf ogt, %9, %78 : vector<16x16xf32>
    %cst_57 = arith.constant -1.000000e+30 : f32
    %80 = vector.broadcast %cst_57 : f32 to vector<16x16xf32>
    %81 = arith.select %79, %77, %80 : vector<16x16xi1>, vector<16x16xf32>
    %cst_58 = arith.constant dense<0xFF800000> : vector<16xf32>
    %82 = vector.multi_reduction <maximumf>, %81, %cst_58 [1] : vector<16x16xf32> to vector<16xf32>
    %83 = vector.shape_cast %82 : vector<16xf32> to vector<16x1xf32>
    %84 = vector.broadcast %83 : vector<16x1xf32> to vector<16x16xf32>
    %85 = arith.subf %81, %84 : vector<16x16xf32>
    %cst_59 = arith.constant 0.000000e+00 : f32
    %86 = vector.broadcast %cst_59 : f32 to vector<16x16xf32>
    %87 = arith.cmpf ogt, %9, %86 : vector<16x16xf32>
    %88 = math.exp %85 : vector<16x16xf32>
    %cst_60 = arith.constant 0.000000e+00 : f32
    %89 = vector.broadcast %cst_60 : f32 to vector<16x16xf32>
    %90 = arith.select %87, %88, %89 : vector<16x16xi1>, vector<16x16xf32>
    %cst_61 = arith.constant dense<0.000000e+00> : vector<16xf32>
    %91 = vector.multi_reduction <add>, %90, %cst_61 [1] : vector<16x16xf32> to vector<16xf32>
    %92 = vector.shape_cast %91 : vector<16xf32> to vector<16x1xf32>
    %93 = vector.broadcast %92 : vector<16x1xf32> to vector<16x16xf32>
    %94 = arith.divf %90, %93 : vector<16x16xf32>
    %cst_62 = arith.constant dense<0.000000e+00> : vector<16x16xf32>
    %95 = tpu.matmul %94, %64, %cst_62 {dimension_numbers = #tpu.dot_dimension_numbers<[1], [0], [0], [1], [0, 0, 1, 1], [], []>} : vector<16x16xf32>, vector<16x16xf32>, vector<16x16xf32> -> vector<16x16xf32>
    %96 = vector.broadcast %63 : vector<1x16xf32> to vector<16x16xf32>
    %97 = arith.addf %95, %96 : vector<16x16xf32>
    %cst_63 = arith.constant 0.000000e+00 : f32
    %98 = vector.broadcast %cst_63 : f32 to vector<16x16xf32>
    %99 = arith.maximumf %97, %98 : vector<16x16xf32>
    %c2_64 = arith.constant 2 : index
    %c0_65 = arith.constant 0 : index
    %c0_66 = arith.constant 0 : index
    %100 = vector.load %arg2[%c2_64, %c0_65, %c0_66] : memref<3x8x16xf32, #tpu.memory_space<vmem>>, vector<1x8x16xf32>
    %101 = vector.shape_cast %100 : vector<1x8x16xf32> to vector<8x16xf32>
    %c2_67 = arith.constant 2 : index
    %c0_68 = arith.constant 0 : index
    %c0_69 = arith.constant 0 : index
    %102 = vector.load %arg3[%c2_67, %c0_68, %c0_69] : memref<3x1x16xf32, #tpu.memory_space<vmem>>, vector<1x1x16xf32>
    %103 = vector.shape_cast %102 : vector<1x1x16xf32> to vector<1x16xf32>
    %c2_70 = arith.constant 2 : index
    %c0_71 = arith.constant 0 : index
    %c0_72 = arith.constant 0 : index
    %104 = vector.load %arg4[%c2_70, %c0_71, %c0_72] : memref<3x1x16xf32, #tpu.memory_space<vmem>>, vector<1x1x16xf32>
    %105 = vector.shape_cast %104 : vector<1x1x16xf32> to vector<1x16xf32>
    %c2_73 = arith.constant 2 : index
    %c0_74 = arith.constant 0 : index
    %c0_75 = arith.constant 0 : index
    %106 = vector.load %arg5[%c2_73, %c0_74, %c0_75] : memref<3x1x16xf32, #tpu.memory_space<vmem>>, vector<1x1x16xf32>
    %107 = vector.shape_cast %106 : vector<1x1x16xf32> to vector<1x16xf32>
    %cst_76 = arith.constant dense<0.000000e+00> : vector<16x16xf32>
    %108 = tpu.matmul %5, %101, %cst_76 {dimension_numbers = #tpu.dot_dimension_numbers<[1], [0], [0], [1], [0, 0, 1, 1], [], []>} : vector<16x8xf32>, vector<8x16xf32>, vector<16x16xf32> -> vector<16x16xf32>
    %109 = vector.broadcast %105 : vector<1x16xf32> to vector<16x16xf32>
    %110 = arith.mulf %108, %109 : vector<16x16xf32>
    %cst_77 = arith.constant dense<0.000000e+00> : vector<16xf32>
    %111 = vector.multi_reduction <add>, %110, %cst_77 [1] : vector<16x16xf32> to vector<16xf32>
    %112 = vector.shape_cast %111 : vector<16xf32> to vector<16x1xf32>
    %cst_78 = arith.constant dense<0.000000e+00> : vector<1x16xf32>
    %113 = tpu.matmul %103, %108, %cst_78 {dimension_numbers = #tpu.dot_dimension_numbers<[1], [1], [0], [0], [0, 0, 1, 0], [], []>} : vector<1x16xf32>, vector<16x16xf32>, vector<1x16xf32> -> vector<1x16xf32>
    %114 = vector.broadcast %112 : vector<16x1xf32> to vector<16x16xf32>
    %115 = vector.broadcast %113 : vector<1x16xf32> to vector<16x16xf32>
    %116 = arith.addf %114, %115 : vector<16x16xf32>
    %cst_79 = arith.constant 0.000000e+00 : f32
    %117 = vector.broadcast %cst_79 : f32 to vector<16x16xf32>
    %118 = arith.cmpf ogt, %116, %117 : vector<16x16xf32>
    %cst_80 = arith.constant 2.000000e-01 : f32
    %119 = vector.broadcast %cst_80 : f32 to vector<16x16xf32>
    %120 = arith.mulf %119, %116 : vector<16x16xf32>
    %121 = arith.select %118, %116, %120 : vector<16x16xi1>, vector<16x16xf32>
    %cst_81 = arith.constant 0.000000e+00 : f32
    %122 = vector.broadcast %cst_81 : f32 to vector<16x16xf32>
    %123 = arith.cmpf ogt, %11, %122 : vector<16x16xf32>
    %cst_82 = arith.constant -1.000000e+30 : f32
    %124 = vector.broadcast %cst_82 : f32 to vector<16x16xf32>
    %125 = arith.select %123, %121, %124 : vector<16x16xi1>, vector<16x16xf32>
    %cst_83 = arith.constant dense<0xFF800000> : vector<16xf32>
    %126 = vector.multi_reduction <maximumf>, %125, %cst_83 [1] : vector<16x16xf32> to vector<16xf32>
    %127 = vector.shape_cast %126 : vector<16xf32> to vector<16x1xf32>
    %128 = vector.broadcast %127 : vector<16x1xf32> to vector<16x16xf32>
    %129 = arith.subf %125, %128 : vector<16x16xf32>
    %cst_84 = arith.constant 0.000000e+00 : f32
    %130 = vector.broadcast %cst_84 : f32 to vector<16x16xf32>
    %131 = arith.cmpf ogt, %11, %130 : vector<16x16xf32>
    %132 = math.exp %129 : vector<16x16xf32>
    %cst_85 = arith.constant 0.000000e+00 : f32
    %133 = vector.broadcast %cst_85 : f32 to vector<16x16xf32>
    %134 = arith.select %131, %132, %133 : vector<16x16xi1>, vector<16x16xf32>
    %cst_86 = arith.constant dense<0.000000e+00> : vector<16xf32>
    %135 = vector.multi_reduction <add>, %134, %cst_86 [1] : vector<16x16xf32> to vector<16xf32>
    %136 = vector.shape_cast %135 : vector<16xf32> to vector<16x1xf32>
    %137 = vector.broadcast %136 : vector<16x1xf32> to vector<16x16xf32>
    %138 = arith.divf %134, %137 : vector<16x16xf32>
    %cst_87 = arith.constant dense<0.000000e+00> : vector<16x16xf32>
    %139 = tpu.matmul %138, %108, %cst_87 {dimension_numbers = #tpu.dot_dimension_numbers<[1], [0], [0], [1], [0, 0, 1, 1], [], []>} : vector<16x16xf32>, vector<16x16xf32>, vector<16x16xf32> -> vector<16x16xf32>
    %140 = vector.broadcast %107 : vector<1x16xf32> to vector<16x16xf32>
    %141 = arith.addf %139, %140 : vector<16x16xf32>
    %cst_88 = arith.constant 0.000000e+00 : f32
    %142 = vector.broadcast %cst_88 : f32 to vector<16x16xf32>
    %143 = arith.maximumf %141, %142 : vector<16x16xf32>
    %c0_89 = arith.constant 0 : index
    %c0_90 = arith.constant 0 : index
    %c0_91 = arith.constant 0 : index
    %144 = vector.load %arg10[%c0_89, %c0_90, %c0_91] : memref<3x16x8xf32, #tpu.memory_space<vmem>>, vector<1x16x8xf32>
    %145 = vector.shape_cast %144 : vector<1x16x8xf32> to vector<16x8xf32>
    %c0_92 = arith.constant 0 : index
    %c0_93 = arith.constant 0 : index
    %c0_94 = arith.constant 0 : index
    %146 = vector.load %arg11[%c0_92, %c0_93, %c0_94] : memref<3x1x8xf32, #tpu.memory_space<vmem>>, vector<1x1x8xf32>
    %147 = vector.shape_cast %146 : vector<1x1x8xf32> to vector<1x8xf32>
    %c0_95 = arith.constant 0 : index
    %c0_96 = arith.constant 0 : index
    %c0_97 = arith.constant 0 : index
    %148 = vector.load %arg12[%c0_95, %c0_96, %c0_97] : memref<3x1x8xf32, #tpu.memory_space<vmem>>, vector<1x1x8xf32>
    %149 = vector.shape_cast %148 : vector<1x1x8xf32> to vector<1x8xf32>
    %c0_98 = arith.constant 0 : index
    %c0_99 = arith.constant 0 : index
    %c0_100 = arith.constant 0 : index
    %150 = vector.load %arg13[%c0_98, %c0_99, %c0_100] : memref<3x1x8xf32, #tpu.memory_space<vmem>>, vector<1x1x8xf32>
    %151 = vector.shape_cast %150 : vector<1x1x8xf32> to vector<1x8xf32>
    %cst_101 = arith.constant dense<0.000000e+00> : vector<16x8xf32>
    %152 = tpu.matmul %55, %145, %cst_101 {dimension_numbers = #tpu.dot_dimension_numbers<[1], [0], [0], [1], [0, 0, 1, 1], [], []>} : vector<16x16xf32>, vector<16x8xf32>, vector<16x8xf32> -> vector<16x8xf32>
    %153 = vector.broadcast %149 : vector<1x8xf32> to vector<16x8xf32>
    %154 = arith.mulf %152, %153 : vector<16x8xf32>
    %cst_102 = arith.constant dense<0.000000e+00> : vector<16xf32>
    %155 = vector.multi_reduction <add>, %154, %cst_102 [1] : vector<16x8xf32> to vector<16xf32>
    %156 = vector.shape_cast %155 : vector<16xf32> to vector<16x1xf32>
    %cst_103 = arith.constant dense<0.000000e+00> : vector<1x16xf32>
    %157 = tpu.matmul %147, %152, %cst_103 {dimension_numbers = #tpu.dot_dimension_numbers<[1], [1], [0], [0], [0, 0, 1, 0], [], []>} : vector<1x8xf32>, vector<16x8xf32>, vector<1x16xf32> -> vector<1x16xf32>
    %158 = vector.broadcast %156 : vector<16x1xf32> to vector<16x16xf32>
    %159 = vector.broadcast %157 : vector<1x16xf32> to vector<16x16xf32>
    %160 = arith.addf %158, %159 : vector<16x16xf32>
    %cst_104 = arith.constant 0.000000e+00 : f32
    %161 = vector.broadcast %cst_104 : f32 to vector<16x16xf32>
    %162 = arith.cmpf ogt, %160, %161 : vector<16x16xf32>
    %cst_105 = arith.constant 2.000000e-01 : f32
    %163 = vector.broadcast %cst_105 : f32 to vector<16x16xf32>
    %164 = arith.mulf %163, %160 : vector<16x16xf32>
    %165 = arith.select %162, %160, %164 : vector<16x16xi1>, vector<16x16xf32>
    %cst_106 = arith.constant 0.000000e+00 : f32
    %166 = vector.broadcast %cst_106 : f32 to vector<16x16xf32>
    %167 = arith.cmpf ogt, %7, %166 : vector<16x16xf32>
    %cst_107 = arith.constant -1.000000e+30 : f32
    %168 = vector.broadcast %cst_107 : f32 to vector<16x16xf32>
    %169 = arith.select %167, %165, %168 : vector<16x16xi1>, vector<16x16xf32>
    %cst_108 = arith.constant dense<0xFF800000> : vector<16xf32>
    %170 = vector.multi_reduction <maximumf>, %169, %cst_108 [1] : vector<16x16xf32> to vector<16xf32>
    %171 = vector.shape_cast %170 : vector<16xf32> to vector<16x1xf32>
    %172 = vector.broadcast %171 : vector<16x1xf32> to vector<16x16xf32>
    %173 = arith.subf %169, %172 : vector<16x16xf32>
    %cst_109 = arith.constant 0.000000e+00 : f32
    %174 = vector.broadcast %cst_109 : f32 to vector<16x16xf32>
    %175 = arith.cmpf ogt, %7, %174 : vector<16x16xf32>
    %176 = math.exp %173 : vector<16x16xf32>
    %cst_110 = arith.constant 0.000000e+00 : f32
    %177 = vector.broadcast %cst_110 : f32 to vector<16x16xf32>
    %178 = arith.select %175, %176, %177 : vector<16x16xi1>, vector<16x16xf32>
    %cst_111 = arith.constant dense<0.000000e+00> : vector<16xf32>
    %179 = vector.multi_reduction <add>, %178, %cst_111 [1] : vector<16x16xf32> to vector<16xf32>
    %180 = vector.shape_cast %179 : vector<16xf32> to vector<16x1xf32>
    %181 = vector.broadcast %180 : vector<16x1xf32> to vector<16x16xf32>
    %182 = arith.divf %178, %181 : vector<16x16xf32>
    %cst_112 = arith.constant dense<0.000000e+00> : vector<16x8xf32>
    %183 = tpu.matmul %182, %152, %cst_112 {dimension_numbers = #tpu.dot_dimension_numbers<[1], [0], [0], [1], [0, 0, 1, 1], [], []>} : vector<16x16xf32>, vector<16x8xf32>, vector<16x8xf32> -> vector<16x8xf32>
    %184 = vector.broadcast %151 : vector<1x8xf32> to vector<16x8xf32>
    %185 = arith.addf %183, %184 : vector<16x8xf32>
    %186 = arith.negf %185 : vector<16x8xf32>
    %187 = math.exp %186 : vector<16x8xf32>
    %cst_113 = arith.constant 1.000000e+00 : f32
    %188 = vector.broadcast %cst_113 : f32 to vector<16x8xf32>
    %189 = arith.addf %188, %187 : vector<16x8xf32>
    %190 = arith.divf %188, %189 : vector<16x8xf32>
    %c0_114 = arith.constant 0 : index
    %c0_115 = arith.constant 0 : index
    %c0_116 = arith.constant 0 : index
    %191 = vector.load %arg6[%c0_114, %c0_115, %c0_116] : memref<4x16x16xf32, #tpu.memory_space<vmem>>, vector<1x16x16xf32>
    %192 = vector.shape_cast %191 : vector<1x16x16xf32> to vector<16x16xf32>
    %cst_117 = arith.constant dense<0.000000e+00> : vector<16x16xf32>
    %193 = tpu.matmul %192, %55, %cst_117 {dimension_numbers = #tpu.dot_dimension_numbers<[1], [0], [0], [1], [0, 0, 1, 1], [], []>} : vector<16x16xf32>, vector<16x16xf32>, vector<16x16xf32> -> vector<16x16xf32>
    %c0_118 = arith.constant 0 : index
    %c0_119 = arith.constant 0 : index
    %c0_120 = arith.constant 0 : index
    %194 = vector.load %arg7[%c0_118, %c0_119, %c0_120] : memref<4x16x1xf32, #tpu.memory_space<vmem>>, vector<1x16x1xf32>
    %195 = vector.shape_cast %194 : vector<1x16x1xf32> to vector<16x1xf32>
    %196 = vector.broadcast %195 : vector<16x1xf32> to vector<16x16xf32>
    %197 = arith.addf %193, %196 : vector<16x16xf32>
    %cst_121 = arith.constant dense<0.000000e+00> : vector<16xf32>
    %198 = vector.multi_reduction <add>, %197, %cst_121 [0] : vector<16x16xf32> to vector<16xf32>
    %199 = vector.shape_cast %198 : vector<16xf32> to vector<1x16xf32>
    %cst_122 = arith.constant 1.600000e+01 : f32
    %200 = vector.broadcast %cst_122 : f32 to vector<1x16xf32>
    %201 = arith.divf %199, %200 : vector<1x16xf32>
    %202 = arith.mulf %197, %197 : vector<16x16xf32>
    %cst_123 = arith.constant dense<0.000000e+00> : vector<16xf32>
    %203 = vector.multi_reduction <add>, %202, %cst_123 [0] : vector<16x16xf32> to vector<16xf32>
    %204 = vector.shape_cast %203 : vector<16xf32> to vector<1x16xf32>
    %cst_124 = arith.constant 1.600000e+01 : f32
    %205 = vector.broadcast %cst_124 : f32 to vector<1x16xf32>
    %206 = arith.divf %204, %205 : vector<1x16xf32>
    %207 = arith.mulf %201, %201 : vector<1x16xf32>
    %208 = arith.subf %206, %207 : vector<1x16xf32>
    %209 = vector.broadcast %201 : vector<1x16xf32> to vector<16x16xf32>
    %210 = arith.subf %197, %209 : vector<16x16xf32>
    %cst_125 = arith.constant 9.99999974E-6 : f32
    %211 = vector.broadcast %cst_125 : f32 to vector<1x16xf32>
    %212 = arith.addf %208, %211 : vector<1x16xf32>
    %213 = math.rsqrt %212 : vector<1x16xf32>
    %214 = vector.broadcast %213 : vector<1x16xf32> to vector<16x16xf32>
    %215 = arith.mulf %210, %214 : vector<16x16xf32>
    %c0_126 = arith.constant 0 : index
    %c0_127 = arith.constant 0 : index
    %c0_128 = arith.constant 0 : index
    %216 = vector.load %arg8[%c0_126, %c0_127, %c0_128] : memref<4x1x16xf32, #tpu.memory_space<vmem>>, vector<1x1x16xf32>
    %217 = vector.shape_cast %216 : vector<1x1x16xf32> to vector<1x16xf32>
    %218 = vector.broadcast %217 : vector<1x16xf32> to vector<16x16xf32>
    %219 = arith.mulf %215, %218 : vector<16x16xf32>
    %c0_129 = arith.constant 0 : index
    %c0_130 = arith.constant 0 : index
    %c0_131 = arith.constant 0 : index
    %220 = vector.load %arg9[%c0_129, %c0_130, %c0_131] : memref<4x1x16xf32, #tpu.memory_space<vmem>>, vector<1x1x16xf32>
    %221 = vector.shape_cast %220 : vector<1x1x16xf32> to vector<1x16xf32>
    %222 = vector.broadcast %221 : vector<1x16xf32> to vector<16x16xf32>
    %223 = arith.addf %219, %222 : vector<16x16xf32>
    %cst_132 = arith.constant 0.000000e+00 : f32
    %224 = vector.broadcast %cst_132 : f32 to vector<16x16xf32>
    %225 = arith.maximumf %223, %224 : vector<16x16xf32>
    %c1_133 = arith.constant 1 : index
    %c0_134 = arith.constant 0 : index
    %c0_135 = arith.constant 0 : index
    %226 = vector.load %arg6[%c1_133, %c0_134, %c0_135] : memref<4x16x16xf32, #tpu.memory_space<vmem>>, vector<1x16x16xf32>
    %227 = vector.shape_cast %226 : vector<1x16x16xf32> to vector<16x16xf32>
    %cst_136 = arith.constant dense<0.000000e+00> : vector<16x16xf32>
    %228 = tpu.matmul %227, %225, %cst_136 {dimension_numbers = #tpu.dot_dimension_numbers<[1], [0], [0], [1], [0, 0, 1, 1], [], []>} : vector<16x16xf32>, vector<16x16xf32>, vector<16x16xf32> -> vector<16x16xf32>
    %c1_137 = arith.constant 1 : index
    %c0_138 = arith.constant 0 : index
    %c0_139 = arith.constant 0 : index
    %229 = vector.load %arg7[%c1_137, %c0_138, %c0_139] : memref<4x16x1xf32, #tpu.memory_space<vmem>>, vector<1x16x1xf32>
    %230 = vector.shape_cast %229 : vector<1x16x1xf32> to vector<16x1xf32>
    %231 = vector.broadcast %230 : vector<16x1xf32> to vector<16x16xf32>
    %232 = arith.addf %228, %231 : vector<16x16xf32>
    %cst_140 = arith.constant dense<0.000000e+00> : vector<16xf32>
    %233 = vector.multi_reduction <add>, %232, %cst_140 [0] : vector<16x16xf32> to vector<16xf32>
    %234 = vector.shape_cast %233 : vector<16xf32> to vector<1x16xf32>
    %cst_141 = arith.constant 1.600000e+01 : f32
    %235 = vector.broadcast %cst_141 : f32 to vector<1x16xf32>
    %236 = arith.divf %234, %235 : vector<1x16xf32>
    %237 = arith.mulf %232, %232 : vector<16x16xf32>
    %cst_142 = arith.constant dense<0.000000e+00> : vector<16xf32>
    %238 = vector.multi_reduction <add>, %237, %cst_142 [0] : vector<16x16xf32> to vector<16xf32>
    %239 = vector.shape_cast %238 : vector<16xf32> to vector<1x16xf32>
    %cst_143 = arith.constant 1.600000e+01 : f32
    %240 = vector.broadcast %cst_143 : f32 to vector<1x16xf32>
    %241 = arith.divf %239, %240 : vector<1x16xf32>
    %242 = arith.mulf %236, %236 : vector<1x16xf32>
    %243 = arith.subf %241, %242 : vector<1x16xf32>
    %244 = vector.broadcast %236 : vector<1x16xf32> to vector<16x16xf32>
    %245 = arith.subf %232, %244 : vector<16x16xf32>
    %cst_144 = arith.constant 9.99999974E-6 : f32
    %246 = vector.broadcast %cst_144 : f32 to vector<1x16xf32>
    %247 = arith.addf %243, %246 : vector<1x16xf32>
    %248 = math.rsqrt %247 : vector<1x16xf32>
    %249 = vector.broadcast %248 : vector<1x16xf32> to vector<16x16xf32>
    %250 = arith.mulf %245, %249 : vector<16x16xf32>
    %c1_145 = arith.constant 1 : index
    %c0_146 = arith.constant 0 : index
    %c0_147 = arith.constant 0 : index
    %251 = vector.load %arg8[%c1_145, %c0_146, %c0_147] : memref<4x1x16xf32, #tpu.memory_space<vmem>>, vector<1x1x16xf32>
    %252 = vector.shape_cast %251 : vector<1x1x16xf32> to vector<1x16xf32>
    %253 = vector.broadcast %252 : vector<1x16xf32> to vector<16x16xf32>
    %254 = arith.mulf %250, %253 : vector<16x16xf32>
    %c1_148 = arith.constant 1 : index
    %c0_149 = arith.constant 0 : index
    %c0_150 = arith.constant 0 : index
    %255 = vector.load %arg9[%c1_148, %c0_149, %c0_150] : memref<4x1x16xf32, #tpu.memory_space<vmem>>, vector<1x1x16xf32>
    %256 = vector.shape_cast %255 : vector<1x1x16xf32> to vector<1x16xf32>
    %257 = vector.broadcast %256 : vector<1x16xf32> to vector<16x16xf32>
    %258 = arith.addf %254, %257 : vector<16x16xf32>
    %259 = arith.negf %258 : vector<16x16xf32>
    %260 = math.exp %259 : vector<16x16xf32>
    %cst_151 = arith.constant 1.000000e+00 : f32
    %261 = vector.broadcast %cst_151 : f32 to vector<16x16xf32>
    %262 = arith.addf %261, %260 : vector<16x16xf32>
    %263 = arith.divf %261, %262 : vector<16x16xf32>
    %264 = arith.mulf %99, %263 : vector<16x16xf32>
    %c1_152 = arith.constant 1 : index
    %c0_153 = arith.constant 0 : index
    %c0_154 = arith.constant 0 : index
    %265 = vector.load %arg10[%c1_152, %c0_153, %c0_154] : memref<3x16x8xf32, #tpu.memory_space<vmem>>, vector<1x16x8xf32>
    %266 = vector.shape_cast %265 : vector<1x16x8xf32> to vector<16x8xf32>
    %c1_155 = arith.constant 1 : index
    %c0_156 = arith.constant 0 : index
    %c0_157 = arith.constant 0 : index
    %267 = vector.load %arg11[%c1_155, %c0_156, %c0_157] : memref<3x1x8xf32, #tpu.memory_space<vmem>>, vector<1x1x8xf32>
    %268 = vector.shape_cast %267 : vector<1x1x8xf32> to vector<1x8xf32>
    %c1_158 = arith.constant 1 : index
    %c0_159 = arith.constant 0 : index
    %c0_160 = arith.constant 0 : index
    %269 = vector.load %arg12[%c1_158, %c0_159, %c0_160] : memref<3x1x8xf32, #tpu.memory_space<vmem>>, vector<1x1x8xf32>
    %270 = vector.shape_cast %269 : vector<1x1x8xf32> to vector<1x8xf32>
    %c1_161 = arith.constant 1 : index
    %c0_162 = arith.constant 0 : index
    %c0_163 = arith.constant 0 : index
    %271 = vector.load %arg13[%c1_161, %c0_162, %c0_163] : memref<3x1x8xf32, #tpu.memory_space<vmem>>, vector<1x1x8xf32>
    %272 = vector.shape_cast %271 : vector<1x1x8xf32> to vector<1x8xf32>
    %cst_164 = arith.constant dense<0.000000e+00> : vector<16x8xf32>
    %273 = tpu.matmul %264, %266, %cst_164 {dimension_numbers = #tpu.dot_dimension_numbers<[1], [0], [0], [1], [0, 0, 1, 1], [], []>} : vector<16x16xf32>, vector<16x8xf32>, vector<16x8xf32> -> vector<16x8xf32>
    %274 = vector.broadcast %270 : vector<1x8xf32> to vector<16x8xf32>
    %275 = arith.mulf %273, %274 : vector<16x8xf32>
    %cst_165 = arith.constant dense<0.000000e+00> : vector<16xf32>
    %276 = vector.multi_reduction <add>, %275, %cst_165 [1] : vector<16x8xf32> to vector<16xf32>
    %277 = vector.shape_cast %276 : vector<16xf32> to vector<16x1xf32>
    %cst_166 = arith.constant dense<0.000000e+00> : vector<1x16xf32>
    %278 = tpu.matmul %268, %273, %cst_166 {dimension_numbers = #tpu.dot_dimension_numbers<[1], [1], [0], [0], [0, 0, 1, 0], [], []>} : vector<1x8xf32>, vector<16x8xf32>, vector<1x16xf32> -> vector<1x16xf32>
    %279 = vector.broadcast %277 : vector<16x1xf32> to vector<16x16xf32>
    %280 = vector.broadcast %278 : vector<1x16xf32> to vector<16x16xf32>
    %281 = arith.addf %279, %280 : vector<16x16xf32>
    %cst_167 = arith.constant 0.000000e+00 : f32
    %282 = vector.broadcast %cst_167 : f32 to vector<16x16xf32>
    %283 = arith.cmpf ogt, %281, %282 : vector<16x16xf32>
    %cst_168 = arith.constant 2.000000e-01 : f32
    %284 = vector.broadcast %cst_168 : f32 to vector<16x16xf32>
    %285 = arith.mulf %284, %281 : vector<16x16xf32>
    %286 = arith.select %283, %281, %285 : vector<16x16xi1>, vector<16x16xf32>
    %cst_169 = arith.constant 0.000000e+00 : f32
    %287 = vector.broadcast %cst_169 : f32 to vector<16x16xf32>
    %288 = arith.cmpf ogt, %9, %287 : vector<16x16xf32>
    %cst_170 = arith.constant -1.000000e+30 : f32
    %289 = vector.broadcast %cst_170 : f32 to vector<16x16xf32>
    %290 = arith.select %288, %286, %289 : vector<16x16xi1>, vector<16x16xf32>
    %cst_171 = arith.constant dense<0xFF800000> : vector<16xf32>
    %291 = vector.multi_reduction <maximumf>, %290, %cst_171 [1] : vector<16x16xf32> to vector<16xf32>
    %292 = vector.shape_cast %291 : vector<16xf32> to vector<16x1xf32>
    %293 = vector.broadcast %292 : vector<16x1xf32> to vector<16x16xf32>
    %294 = arith.subf %290, %293 : vector<16x16xf32>
    %cst_172 = arith.constant 0.000000e+00 : f32
    %295 = vector.broadcast %cst_172 : f32 to vector<16x16xf32>
    %296 = arith.cmpf ogt, %9, %295 : vector<16x16xf32>
    %297 = math.exp %294 : vector<16x16xf32>
    %cst_173 = arith.constant 0.000000e+00 : f32
    %298 = vector.broadcast %cst_173 : f32 to vector<16x16xf32>
    %299 = arith.select %296, %297, %298 : vector<16x16xi1>, vector<16x16xf32>
    %cst_174 = arith.constant dense<0.000000e+00> : vector<16xf32>
    %300 = vector.multi_reduction <add>, %299, %cst_174 [1] : vector<16x16xf32> to vector<16xf32>
    %301 = vector.shape_cast %300 : vector<16xf32> to vector<16x1xf32>
    %302 = vector.broadcast %301 : vector<16x1xf32> to vector<16x16xf32>
    %303 = arith.divf %299, %302 : vector<16x16xf32>
    %cst_175 = arith.constant dense<0.000000e+00> : vector<16x8xf32>
    %304 = tpu.matmul %303, %273, %cst_175 {dimension_numbers = #tpu.dot_dimension_numbers<[1], [0], [0], [1], [0, 0, 1, 1], [], []>} : vector<16x16xf32>, vector<16x8xf32>, vector<16x8xf32> -> vector<16x8xf32>
    %305 = vector.broadcast %272 : vector<1x8xf32> to vector<16x8xf32>
    %306 = arith.addf %304, %305 : vector<16x8xf32>
    %307 = arith.negf %306 : vector<16x8xf32>
    %308 = math.exp %307 : vector<16x8xf32>
    %cst_176 = arith.constant 1.000000e+00 : f32
    %309 = vector.broadcast %cst_176 : f32 to vector<16x8xf32>
    %310 = arith.addf %309, %308 : vector<16x8xf32>
    %311 = arith.divf %309, %310 : vector<16x8xf32>
    %c2_177 = arith.constant 2 : index
    %c0_178 = arith.constant 0 : index
    %c0_179 = arith.constant 0 : index
    %312 = vector.load %arg6[%c2_177, %c0_178, %c0_179] : memref<4x16x16xf32, #tpu.memory_space<vmem>>, vector<1x16x16xf32>
    %313 = vector.shape_cast %312 : vector<1x16x16xf32> to vector<16x16xf32>
    %cst_180 = arith.constant dense<0.000000e+00> : vector<16x16xf32>
    %314 = tpu.matmul %313, %264, %cst_180 {dimension_numbers = #tpu.dot_dimension_numbers<[1], [0], [0], [1], [0, 0, 1, 1], [], []>} : vector<16x16xf32>, vector<16x16xf32>, vector<16x16xf32> -> vector<16x16xf32>
    %c2_181 = arith.constant 2 : index
    %c0_182 = arith.constant 0 : index
    %c0_183 = arith.constant 0 : index
    %315 = vector.load %arg7[%c2_181, %c0_182, %c0_183] : memref<4x16x1xf32, #tpu.memory_space<vmem>>, vector<1x16x1xf32>
    %316 = vector.shape_cast %315 : vector<1x16x1xf32> to vector<16x1xf32>
    %317 = vector.broadcast %316 : vector<16x1xf32> to vector<16x16xf32>
    %318 = arith.addf %314, %317 : vector<16x16xf32>
    %cst_184 = arith.constant dense<0.000000e+00> : vector<16xf32>
    %319 = vector.multi_reduction <add>, %318, %cst_184 [0] : vector<16x16xf32> to vector<16xf32>
    %320 = vector.shape_cast %319 : vector<16xf32> to vector<1x16xf32>
    %cst_185 = arith.constant 1.600000e+01 : f32
    %321 = vector.broadcast %cst_185 : f32 to vector<1x16xf32>
    %322 = arith.divf %320, %321 : vector<1x16xf32>
    %323 = arith.mulf %318, %318 : vector<16x16xf32>
    %cst_186 = arith.constant dense<0.000000e+00> : vector<16xf32>
    %324 = vector.multi_reduction <add>, %323, %cst_186 [0] : vector<16x16xf32> to vector<16xf32>
    %325 = vector.shape_cast %324 : vector<16xf32> to vector<1x16xf32>
    %cst_187 = arith.constant 1.600000e+01 : f32
    %326 = vector.broadcast %cst_187 : f32 to vector<1x16xf32>
    %327 = arith.divf %325, %326 : vector<1x16xf32>
    %328 = arith.mulf %322, %322 : vector<1x16xf32>
    %329 = arith.subf %327, %328 : vector<1x16xf32>
    %330 = vector.broadcast %322 : vector<1x16xf32> to vector<16x16xf32>
    %331 = arith.subf %318, %330 : vector<16x16xf32>
    %cst_188 = arith.constant 9.99999974E-6 : f32
    %332 = vector.broadcast %cst_188 : f32 to vector<1x16xf32>
    %333 = arith.addf %329, %332 : vector<1x16xf32>
    %334 = math.rsqrt %333 : vector<1x16xf32>
    %335 = vector.broadcast %334 : vector<1x16xf32> to vector<16x16xf32>
    %336 = arith.mulf %331, %335 : vector<16x16xf32>
    %c2_189 = arith.constant 2 : index
    %c0_190 = arith.constant 0 : index
    %c0_191 = arith.constant 0 : index
    %337 = vector.load %arg8[%c2_189, %c0_190, %c0_191] : memref<4x1x16xf32, #tpu.memory_space<vmem>>, vector<1x1x16xf32>
    %338 = vector.shape_cast %337 : vector<1x1x16xf32> to vector<1x16xf32>
    %339 = vector.broadcast %338 : vector<1x16xf32> to vector<16x16xf32>
    %340 = arith.mulf %336, %339 : vector<16x16xf32>
    %c2_192 = arith.constant 2 : index
    %c0_193 = arith.constant 0 : index
    %c0_194 = arith.constant 0 : index
    %341 = vector.load %arg9[%c2_192, %c0_193, %c0_194] : memref<4x1x16xf32, #tpu.memory_space<vmem>>, vector<1x1x16xf32>
    %342 = vector.shape_cast %341 : vector<1x1x16xf32> to vector<1x16xf32>
    %343 = vector.broadcast %342 : vector<1x16xf32> to vector<16x16xf32>
    %344 = arith.addf %340, %343 : vector<16x16xf32>
    %cst_195 = arith.constant 0.000000e+00 : f32
    %345 = vector.broadcast %cst_195 : f32 to vector<16x16xf32>
    %346 = arith.maximumf %344, %345 : vector<16x16xf32>
    %c3 = arith.constant 3 : index
    %c0_196 = arith.constant 0 : index
    %c0_197 = arith.constant 0 : index
    %347 = vector.load %arg6[%c3, %c0_196, %c0_197] : memref<4x16x16xf32, #tpu.memory_space<vmem>>, vector<1x16x16xf32>
    %348 = vector.shape_cast %347 : vector<1x16x16xf32> to vector<16x16xf32>
    %cst_198 = arith.constant dense<0.000000e+00> : vector<16x16xf32>
    %349 = tpu.matmul %348, %346, %cst_198 {dimension_numbers = #tpu.dot_dimension_numbers<[1], [0], [0], [1], [0, 0, 1, 1], [], []>} : vector<16x16xf32>, vector<16x16xf32>, vector<16x16xf32> -> vector<16x16xf32>
    %c3_199 = arith.constant 3 : index
    %c0_200 = arith.constant 0 : index
    %c0_201 = arith.constant 0 : index
    %350 = vector.load %arg7[%c3_199, %c0_200, %c0_201] : memref<4x16x1xf32, #tpu.memory_space<vmem>>, vector<1x16x1xf32>
    %351 = vector.shape_cast %350 : vector<1x16x1xf32> to vector<16x1xf32>
    %352 = vector.broadcast %351 : vector<16x1xf32> to vector<16x16xf32>
    %353 = arith.addf %349, %352 : vector<16x16xf32>
    %cst_202 = arith.constant dense<0.000000e+00> : vector<16xf32>
    %354 = vector.multi_reduction <add>, %353, %cst_202 [0] : vector<16x16xf32> to vector<16xf32>
    %355 = vector.shape_cast %354 : vector<16xf32> to vector<1x16xf32>
    %cst_203 = arith.constant 1.600000e+01 : f32
    %356 = vector.broadcast %cst_203 : f32 to vector<1x16xf32>
    %357 = arith.divf %355, %356 : vector<1x16xf32>
    %358 = arith.mulf %353, %353 : vector<16x16xf32>
    %cst_204 = arith.constant dense<0.000000e+00> : vector<16xf32>
    %359 = vector.multi_reduction <add>, %358, %cst_204 [0] : vector<16x16xf32> to vector<16xf32>
    %360 = vector.shape_cast %359 : vector<16xf32> to vector<1x16xf32>
    %cst_205 = arith.constant 1.600000e+01 : f32
    %361 = vector.broadcast %cst_205 : f32 to vector<1x16xf32>
    %362 = arith.divf %360, %361 : vector<1x16xf32>
    %363 = arith.mulf %357, %357 : vector<1x16xf32>
    %364 = arith.subf %362, %363 : vector<1x16xf32>
    %365 = vector.broadcast %357 : vector<1x16xf32> to vector<16x16xf32>
    %366 = arith.subf %353, %365 : vector<16x16xf32>
    %cst_206 = arith.constant 9.99999974E-6 : f32
    %367 = vector.broadcast %cst_206 : f32 to vector<1x16xf32>
    %368 = arith.addf %364, %367 : vector<1x16xf32>
    %369 = math.rsqrt %368 : vector<1x16xf32>
    %370 = vector.broadcast %369 : vector<1x16xf32> to vector<16x16xf32>
    %371 = arith.mulf %366, %370 : vector<16x16xf32>
    %c3_207 = arith.constant 3 : index
    %c0_208 = arith.constant 0 : index
    %c0_209 = arith.constant 0 : index
    %372 = vector.load %arg8[%c3_207, %c0_208, %c0_209] : memref<4x1x16xf32, #tpu.memory_space<vmem>>, vector<1x1x16xf32>
    %373 = vector.shape_cast %372 : vector<1x1x16xf32> to vector<1x16xf32>
    %374 = vector.broadcast %373 : vector<1x16xf32> to vector<16x16xf32>
    %375 = arith.mulf %371, %374 : vector<16x16xf32>
    %c3_210 = arith.constant 3 : index
    %c0_211 = arith.constant 0 : index
    %c0_212 = arith.constant 0 : index
    %376 = vector.load %arg9[%c3_210, %c0_211, %c0_212] : memref<4x1x16xf32, #tpu.memory_space<vmem>>, vector<1x1x16xf32>
    %377 = vector.shape_cast %376 : vector<1x1x16xf32> to vector<1x16xf32>
    %378 = vector.broadcast %377 : vector<1x16xf32> to vector<16x16xf32>
    %379 = arith.addf %375, %378 : vector<16x16xf32>
    %380 = arith.negf %379 : vector<16x16xf32>
    %381 = math.exp %380 : vector<16x16xf32>
    %cst_213 = arith.constant 1.000000e+00 : f32
    %382 = vector.broadcast %cst_213 : f32 to vector<16x16xf32>
    %383 = arith.addf %382, %381 : vector<16x16xf32>
    %384 = arith.divf %382, %383 : vector<16x16xf32>
    %385 = arith.mulf %143, %384 : vector<16x16xf32>
    %c2_214 = arith.constant 2 : index
    %c0_215 = arith.constant 0 : index
    %c0_216 = arith.constant 0 : index
    %386 = vector.load %arg10[%c2_214, %c0_215, %c0_216] : memref<3x16x8xf32, #tpu.memory_space<vmem>>, vector<1x16x8xf32>
    %387 = vector.shape_cast %386 : vector<1x16x8xf32> to vector<16x8xf32>
    %c2_217 = arith.constant 2 : index
    %c0_218 = arith.constant 0 : index
    %c0_219 = arith.constant 0 : index
    %388 = vector.load %arg11[%c2_217, %c0_218, %c0_219] : memref<3x1x8xf32, #tpu.memory_space<vmem>>, vector<1x1x8xf32>
    %389 = vector.shape_cast %388 : vector<1x1x8xf32> to vector<1x8xf32>
    %c2_220 = arith.constant 2 : index
    %c0_221 = arith.constant 0 : index
    %c0_222 = arith.constant 0 : index
    %390 = vector.load %arg12[%c2_220, %c0_221, %c0_222] : memref<3x1x8xf32, #tpu.memory_space<vmem>>, vector<1x1x8xf32>
    %391 = vector.shape_cast %390 : vector<1x1x8xf32> to vector<1x8xf32>
    %c2_223 = arith.constant 2 : index
    %c0_224 = arith.constant 0 : index
    %c0_225 = arith.constant 0 : index
    %392 = vector.load %arg13[%c2_223, %c0_224, %c0_225] : memref<3x1x8xf32, #tpu.memory_space<vmem>>, vector<1x1x8xf32>
    %393 = vector.shape_cast %392 : vector<1x1x8xf32> to vector<1x8xf32>
    %cst_226 = arith.constant dense<0.000000e+00> : vector<16x8xf32>
    %394 = tpu.matmul %385, %387, %cst_226 {dimension_numbers = #tpu.dot_dimension_numbers<[1], [0], [0], [1], [0, 0, 1, 1], [], []>} : vector<16x16xf32>, vector<16x8xf32>, vector<16x8xf32> -> vector<16x8xf32>
    %395 = vector.broadcast %391 : vector<1x8xf32> to vector<16x8xf32>
    %396 = arith.mulf %394, %395 : vector<16x8xf32>
    %cst_227 = arith.constant dense<0.000000e+00> : vector<16xf32>
    %397 = vector.multi_reduction <add>, %396, %cst_227 [1] : vector<16x8xf32> to vector<16xf32>
    %398 = vector.shape_cast %397 : vector<16xf32> to vector<16x1xf32>
    %cst_228 = arith.constant dense<0.000000e+00> : vector<1x16xf32>
    %399 = tpu.matmul %389, %394, %cst_228 {dimension_numbers = #tpu.dot_dimension_numbers<[1], [1], [0], [0], [0, 0, 1, 0], [], []>} : vector<1x8xf32>, vector<16x8xf32>, vector<1x16xf32> -> vector<1x16xf32>
    %400 = vector.broadcast %398 : vector<16x1xf32> to vector<16x16xf32>
    %401 = vector.broadcast %399 : vector<1x16xf32> to vector<16x16xf32>
    %402 = arith.addf %400, %401 : vector<16x16xf32>
    %cst_229 = arith.constant 0.000000e+00 : f32
    %403 = vector.broadcast %cst_229 : f32 to vector<16x16xf32>
    %404 = arith.cmpf ogt, %402, %403 : vector<16x16xf32>
    %cst_230 = arith.constant 2.000000e-01 : f32
    %405 = vector.broadcast %cst_230 : f32 to vector<16x16xf32>
    %406 = arith.mulf %405, %402 : vector<16x16xf32>
    %407 = arith.select %404, %402, %406 : vector<16x16xi1>, vector<16x16xf32>
    %cst_231 = arith.constant 0.000000e+00 : f32
    %408 = vector.broadcast %cst_231 : f32 to vector<16x16xf32>
    %409 = arith.cmpf ogt, %11, %408 : vector<16x16xf32>
    %cst_232 = arith.constant -1.000000e+30 : f32
    %410 = vector.broadcast %cst_232 : f32 to vector<16x16xf32>
    %411 = arith.select %409, %407, %410 : vector<16x16xi1>, vector<16x16xf32>
    %cst_233 = arith.constant dense<0xFF800000> : vector<16xf32>
    %412 = vector.multi_reduction <maximumf>, %411, %cst_233 [1] : vector<16x16xf32> to vector<16xf32>
    %413 = vector.shape_cast %412 : vector<16xf32> to vector<16x1xf32>
    %414 = vector.broadcast %413 : vector<16x1xf32> to vector<16x16xf32>
    %415 = arith.subf %411, %414 : vector<16x16xf32>
    %cst_234 = arith.constant 0.000000e+00 : f32
    %416 = vector.broadcast %cst_234 : f32 to vector<16x16xf32>
    %417 = arith.cmpf ogt, %11, %416 : vector<16x16xf32>
    %418 = math.exp %415 : vector<16x16xf32>
    %cst_235 = arith.constant 0.000000e+00 : f32
    %419 = vector.broadcast %cst_235 : f32 to vector<16x16xf32>
    %420 = arith.select %417, %418, %419 : vector<16x16xi1>, vector<16x16xf32>
    %cst_236 = arith.constant dense<0.000000e+00> : vector<16xf32>
    %421 = vector.multi_reduction <add>, %420, %cst_236 [1] : vector<16x16xf32> to vector<16xf32>
    %422 = vector.shape_cast %421 : vector<16xf32> to vector<16x1xf32>
    %423 = vector.broadcast %422 : vector<16x1xf32> to vector<16x16xf32>
    %424 = arith.divf %420, %423 : vector<16x16xf32>
    %cst_237 = arith.constant dense<0.000000e+00> : vector<16x8xf32>
    %425 = tpu.matmul %424, %394, %cst_237 {dimension_numbers = #tpu.dot_dimension_numbers<[1], [0], [0], [1], [0, 0, 1, 1], [], []>} : vector<16x16xf32>, vector<16x8xf32>, vector<16x8xf32> -> vector<16x8xf32>
    %426 = vector.broadcast %393 : vector<1x8xf32> to vector<16x8xf32>
    %427 = arith.addf %425, %426 : vector<16x8xf32>
    %428 = arith.negf %427 : vector<16x8xf32>
    %429 = math.exp %428 : vector<16x8xf32>
    %cst_238 = arith.constant 1.000000e+00 : f32
    %430 = vector.broadcast %cst_238 : f32 to vector<16x8xf32>
    %431 = arith.addf %430, %429 : vector<16x8xf32>
    %432 = arith.divf %430, %431 : vector<16x8xf32>
    %c0_239 = arith.constant 0 : index
    %c0_240 = arith.constant 0 : index
    %c0_241 = arith.constant 0 : index
    %433 = vector.load %arg18[%c0_239, %c0_240, %c0_241] : memref<3x16x8xf32, #tpu.memory_space<vmem>>, vector<1x16x8xf32>
    %434 = vector.shape_cast %433 : vector<1x16x8xf32> to vector<16x8xf32>
    %435 = vector.shape_cast %190 : vector<16x8xf32> to vector<1x16x8xf32>
    tpu.vector_store %arg18[%c0_239, %c0_240, %c0_241], %435 {strides = array<i32>} : memref<3x16x8xf32, #tpu.memory_space<vmem>>, vector<1x16x8xf32>,
    %c0_242 = arith.constant 0 : index
    %c0_243 = arith.constant 0 : index
    %c0_244 = arith.constant 0 : index
    %436 = vector.load %arg14[%c0_242, %c0_243, %c0_244] : memref<4x16x16xf32, #tpu.memory_space<vmem>>, vector<1x16x16xf32>
    %437 = vector.shape_cast %436 : vector<1x16x16xf32> to vector<16x16xf32>
    %cst_245 = arith.constant dense<0.000000e+00> : vector<16x8xf32>
    %438 = tpu.matmul %437, %190, %cst_245 {dimension_numbers = #tpu.dot_dimension_numbers<[1], [0], [0], [1], [0, 0, 1, 1], [], []>} : vector<16x16xf32>, vector<16x8xf32>, vector<16x8xf32> -> vector<16x8xf32>
    %c0_246 = arith.constant 0 : index
    %c0_247 = arith.constant 0 : index
    %c0_248 = arith.constant 0 : index
    %439 = vector.load %arg15[%c0_246, %c0_247, %c0_248] : memref<4x16x1xf32, #tpu.memory_space<vmem>>, vector<1x16x1xf32>
    %440 = vector.shape_cast %439 : vector<1x16x1xf32> to vector<16x1xf32>
    %441 = vector.broadcast %440 : vector<16x1xf32> to vector<16x8xf32>
    %442 = arith.addf %438, %441 : vector<16x8xf32>
    %cst_249 = arith.constant dense<0.000000e+00> : vector<8xf32>
    %443 = vector.multi_reduction <add>, %442, %cst_249 [0] : vector<16x8xf32> to vector<8xf32>
    %444 = vector.shape_cast %443 : vector<8xf32> to vector<1x8xf32>
    %cst_250 = arith.constant 1.600000e+01 : f32
    %445 = vector.broadcast %cst_250 : f32 to vector<1x8xf32>
    %446 = arith.divf %444, %445 : vector<1x8xf32>
    %447 = arith.mulf %442, %442 : vector<16x8xf32>
    %cst_251 = arith.constant dense<0.000000e+00> : vector<8xf32>
    %448 = vector.multi_reduction <add>, %447, %cst_251 [0] : vector<16x8xf32> to vector<8xf32>
    %449 = vector.shape_cast %448 : vector<8xf32> to vector<1x8xf32>
    %cst_252 = arith.constant 1.600000e+01 : f32
    %450 = vector.broadcast %cst_252 : f32 to vector<1x8xf32>
    %451 = arith.divf %449, %450 : vector<1x8xf32>
    %452 = arith.mulf %446, %446 : vector<1x8xf32>
    %453 = arith.subf %451, %452 : vector<1x8xf32>
    %454 = vector.broadcast %446 : vector<1x8xf32> to vector<16x8xf32>
    %455 = arith.subf %442, %454 : vector<16x8xf32>
    %cst_253 = arith.constant 9.99999974E-6 : f32
    %456 = vector.broadcast %cst_253 : f32 to vector<1x8xf32>
    %457 = arith.addf %453, %456 : vector<1x8xf32>
    %458 = math.rsqrt %457 : vector<1x8xf32>
    %459 = vector.broadcast %458 : vector<1x8xf32> to vector<16x8xf32>
    %460 = arith.mulf %455, %459 : vector<16x8xf32>
    %c0_254 = arith.constant 0 : index
    %c0_255 = arith.constant 0 : index
    %c0_256 = arith.constant 0 : index
    %461 = vector.load %arg16[%c0_254, %c0_255, %c0_256] : memref<4x1x8xf32, #tpu.memory_space<vmem>>, vector<1x1x8xf32>
    %462 = vector.shape_cast %461 : vector<1x1x8xf32> to vector<1x8xf32>
    %463 = vector.broadcast %462 : vector<1x8xf32> to vector<16x8xf32>
    %464 = arith.mulf %460, %463 : vector<16x8xf32>
    %c0_257 = arith.constant 0 : index
    %c0_258 = arith.constant 0 : index
    %c0_259 = arith.constant 0 : index
    %465 = vector.load %arg17[%c0_257, %c0_258, %c0_259] : memref<4x1x8xf32, #tpu.memory_space<vmem>>, vector<1x1x8xf32>
    %466 = vector.shape_cast %465 : vector<1x1x8xf32> to vector<1x8xf32>
    %467 = vector.broadcast %466 : vector<1x8xf32> to vector<16x8xf32>
    %468 = arith.addf %464, %467 : vector<16x8xf32>
    %cst_260 = arith.constant 0.000000e+00 : f32
    %469 = vector.broadcast %cst_260 : f32 to vector<16x8xf32>
    %470 = arith.maximumf %468, %469 : vector<16x8xf32>
    %c1_261 = arith.constant 1 : index
    %c0_262 = arith.constant 0 : index
    %c0_263 = arith.constant 0 : index
    %471 = vector.load %arg14[%c1_261, %c0_262, %c0_263] : memref<4x16x16xf32, #tpu.memory_space<vmem>>, vector<1x16x16xf32>
    %472 = vector.shape_cast %471 : vector<1x16x16xf32> to vector<16x16xf32>
    %cst_264 = arith.constant dense<0.000000e+00> : vector<16x8xf32>
    %473 = tpu.matmul %472, %470, %cst_264 {dimension_numbers = #tpu.dot_dimension_numbers<[1], [0], [0], [1], [0, 0, 1, 1], [], []>} : vector<16x16xf32>, vector<16x8xf32>, vector<16x8xf32> -> vector<16x8xf32>
    %c1_265 = arith.constant 1 : index
    %c0_266 = arith.constant 0 : index
    %c0_267 = arith.constant 0 : index
    %474 = vector.load %arg15[%c1_265, %c0_266, %c0_267] : memref<4x16x1xf32, #tpu.memory_space<vmem>>, vector<1x16x1xf32>
    %475 = vector.shape_cast %474 : vector<1x16x1xf32> to vector<16x1xf32>
    %476 = vector.broadcast %475 : vector<16x1xf32> to vector<16x8xf32>
    %477 = arith.addf %473, %476 : vector<16x8xf32>
    %cst_268 = arith.constant dense<0.000000e+00> : vector<8xf32>
    %478 = vector.multi_reduction <add>, %477, %cst_268 [0] : vector<16x8xf32> to vector<8xf32>
    %479 = vector.shape_cast %478 : vector<8xf32> to vector<1x8xf32>
    %cst_269 = arith.constant 1.600000e+01 : f32
    %480 = vector.broadcast %cst_269 : f32 to vector<1x8xf32>
    %481 = arith.divf %479, %480 : vector<1x8xf32>
    %482 = arith.mulf %477, %477 : vector<16x8xf32>
    %cst_270 = arith.constant dense<0.000000e+00> : vector<8xf32>
    %483 = vector.multi_reduction <add>, %482, %cst_270 [0] : vector<16x8xf32> to vector<8xf32>
    %484 = vector.shape_cast %483 : vector<8xf32> to vector<1x8xf32>
    %cst_271 = arith.constant 1.600000e+01 : f32
    %485 = vector.broadcast %cst_271 : f32 to vector<1x8xf32>
    %486 = arith.divf %484, %485 : vector<1x8xf32>
    %487 = arith.mulf %481, %481 : vector<1x8xf32>
    %488 = arith.subf %486, %487 : vector<1x8xf32>
    %489 = vector.broadcast %481 : vector<1x8xf32> to vector<16x8xf32>
    %490 = arith.subf %477, %489 : vector<16x8xf32>
    %cst_272 = arith.constant 9.99999974E-6 : f32
    %491 = vector.broadcast %cst_272 : f32 to vector<1x8xf32>
    %492 = arith.addf %488, %491 : vector<1x8xf32>
    %493 = math.rsqrt %492 : vector<1x8xf32>
    %494 = vector.broadcast %493 : vector<1x8xf32> to vector<16x8xf32>
    %495 = arith.mulf %490, %494 : vector<16x8xf32>
    %c1_273 = arith.constant 1 : index
    %c0_274 = arith.constant 0 : index
    %c0_275 = arith.constant 0 : index
    %496 = vector.load %arg16[%c1_273, %c0_274, %c0_275] : memref<4x1x8xf32, #tpu.memory_space<vmem>>, vector<1x1x8xf32>
    %497 = vector.shape_cast %496 : vector<1x1x8xf32> to vector<1x8xf32>
    %498 = vector.broadcast %497 : vector<1x8xf32> to vector<16x8xf32>
    %499 = arith.mulf %495, %498 : vector<16x8xf32>
    %c1_276 = arith.constant 1 : index
    %c0_277 = arith.constant 0 : index
    %c0_278 = arith.constant 0 : index
    %500 = vector.load %arg17[%c1_276, %c0_277, %c0_278] : memref<4x1x8xf32, #tpu.memory_space<vmem>>, vector<1x1x8xf32>
    %501 = vector.shape_cast %500 : vector<1x1x8xf32> to vector<1x8xf32>
    %502 = vector.broadcast %501 : vector<1x8xf32> to vector<16x8xf32>
    %503 = arith.addf %499, %502 : vector<16x8xf32>
    %504 = arith.negf %503 : vector<16x8xf32>
    %505 = math.exp %504 : vector<16x8xf32>
    %cst_279 = arith.constant 1.000000e+00 : f32
    %506 = vector.broadcast %cst_279 : f32 to vector<16x8xf32>
    %507 = arith.addf %506, %505 : vector<16x8xf32>
    %508 = arith.divf %506, %507 : vector<16x8xf32>
    %509 = arith.mulf %311, %508 : vector<16x8xf32>
    %c1_280 = arith.constant 1 : index
    %c0_281 = arith.constant 0 : index
    %c0_282 = arith.constant 0 : index
    %510 = vector.load %arg18[%c1_280, %c0_281, %c0_282] : memref<3x16x8xf32, #tpu.memory_space<vmem>>, vector<1x16x8xf32>
    %511 = vector.shape_cast %510 : vector<1x16x8xf32> to vector<16x8xf32>
    %512 = vector.shape_cast %509 : vector<16x8xf32> to vector<1x16x8xf32>
    tpu.vector_store %arg18[%c1_280, %c0_281, %c0_282], %512 {strides = array<i32>} : memref<3x16x8xf32, #tpu.memory_space<vmem>>, vector<1x16x8xf32>,
    %c2_283 = arith.constant 2 : index
    %c0_284 = arith.constant 0 : index
    %c0_285 = arith.constant 0 : index
    %513 = vector.load %arg14[%c2_283, %c0_284, %c0_285] : memref<4x16x16xf32, #tpu.memory_space<vmem>>, vector<1x16x16xf32>
    %514 = vector.shape_cast %513 : vector<1x16x16xf32> to vector<16x16xf32>
    %cst_286 = arith.constant dense<0.000000e+00> : vector<16x8xf32>
    %515 = tpu.matmul %514, %509, %cst_286 {dimension_numbers = #tpu.dot_dimension_numbers<[1], [0], [0], [1], [0, 0, 1, 1], [], []>} : vector<16x16xf32>, vector<16x8xf32>, vector<16x8xf32> -> vector<16x8xf32>
    %c2_287 = arith.constant 2 : index
    %c0_288 = arith.constant 0 : index
    %c0_289 = arith.constant 0 : index
    %516 = vector.load %arg15[%c2_287, %c0_288, %c0_289] : memref<4x16x1xf32, #tpu.memory_space<vmem>>, vector<1x16x1xf32>
    %517 = vector.shape_cast %516 : vector<1x16x1xf32> to vector<16x1xf32>
    %518 = vector.broadcast %517 : vector<16x1xf32> to vector<16x8xf32>
    %519 = arith.addf %515, %518 : vector<16x8xf32>
    %cst_290 = arith.constant dense<0.000000e+00> : vector<8xf32>
    %520 = vector.multi_reduction <add>, %519, %cst_290 [0] : vector<16x8xf32> to vector<8xf32>
    %521 = vector.shape_cast %520 : vector<8xf32> to vector<1x8xf32>
    %cst_291 = arith.constant 1.600000e+01 : f32
    %522 = vector.broadcast %cst_291 : f32 to vector<1x8xf32>
    %523 = arith.divf %521, %522 : vector<1x8xf32>
    %524 = arith.mulf %519, %519 : vector<16x8xf32>
    %cst_292 = arith.constant dense<0.000000e+00> : vector<8xf32>
    %525 = vector.multi_reduction <add>, %524, %cst_292 [0] : vector<16x8xf32> to vector<8xf32>
    %526 = vector.shape_cast %525 : vector<8xf32> to vector<1x8xf32>
    %cst_293 = arith.constant 1.600000e+01 : f32
    %527 = vector.broadcast %cst_293 : f32 to vector<1x8xf32>
    %528 = arith.divf %526, %527 : vector<1x8xf32>
    %529 = arith.mulf %523, %523 : vector<1x8xf32>
    %530 = arith.subf %528, %529 : vector<1x8xf32>
    %531 = vector.broadcast %523 : vector<1x8xf32> to vector<16x8xf32>
    %532 = arith.subf %519, %531 : vector<16x8xf32>
    %cst_294 = arith.constant 9.99999974E-6 : f32
    %533 = vector.broadcast %cst_294 : f32 to vector<1x8xf32>
    %534 = arith.addf %530, %533 : vector<1x8xf32>
    %535 = math.rsqrt %534 : vector<1x8xf32>
    %536 = vector.broadcast %535 : vector<1x8xf32> to vector<16x8xf32>
    %537 = arith.mulf %532, %536 : vector<16x8xf32>
    %c2_295 = arith.constant 2 : index
    %c0_296 = arith.constant 0 : index
    %c0_297 = arith.constant 0 : index
    %538 = vector.load %arg16[%c2_295, %c0_296, %c0_297] : memref<4x1x8xf32, #tpu.memory_space<vmem>>, vector<1x1x8xf32>
    %539 = vector.shape_cast %538 : vector<1x1x8xf32> to vector<1x8xf32>
    %540 = vector.broadcast %539 : vector<1x8xf32> to vector<16x8xf32>
    %541 = arith.mulf %537, %540 : vector<16x8xf32>
    %c2_298 = arith.constant 2 : index
    %c0_299 = arith.constant 0 : index
    %c0_300 = arith.constant 0 : index
    %542 = vector.load %arg17[%c2_298, %c0_299, %c0_300] : memref<4x1x8xf32, #tpu.memory_space<vmem>>, vector<1x1x8xf32>
    %543 = vector.shape_cast %542 : vector<1x1x8xf32> to vector<1x8xf32>
    %544 = vector.broadcast %543 : vector<1x8xf32> to vector<16x8xf32>
    %545 = arith.addf %541, %544 : vector<16x8xf32>
    %cst_301 = arith.constant 0.000000e+00 : f32
    %546 = vector.broadcast %cst_301 : f32 to vector<16x8xf32>
    %547 = arith.maximumf %545, %546 : vector<16x8xf32>
    %c3_302 = arith.constant 3 : index
    %c0_303 = arith.constant 0 : index
    %c0_304 = arith.constant 0 : index
    %548 = vector.load %arg14[%c3_302, %c0_303, %c0_304] : memref<4x16x16xf32, #tpu.memory_space<vmem>>, vector<1x16x16xf32>
    %549 = vector.shape_cast %548 : vector<1x16x16xf32> to vector<16x16xf32>
    %cst_305 = arith.constant dense<0.000000e+00> : vector<16x8xf32>
    %550 = tpu.matmul %549, %547, %cst_305 {dimension_numbers = #tpu.dot_dimension_numbers<[1], [0], [0], [1], [0, 0, 1, 1], [], []>} : vector<16x16xf32>, vector<16x8xf32>, vector<16x8xf32> -> vector<16x8xf32>
    %c3_306 = arith.constant 3 : index
    %c0_307 = arith.constant 0 : index
    %c0_308 = arith.constant 0 : index
    %551 = vector.load %arg15[%c3_306, %c0_307, %c0_308] : memref<4x16x1xf32, #tpu.memory_space<vmem>>, vector<1x16x1xf32>
    %552 = vector.shape_cast %551 : vector<1x16x1xf32> to vector<16x1xf32>
    %553 = vector.broadcast %552 : vector<16x1xf32> to vector<16x8xf32>
    %554 = arith.addf %550, %553 : vector<16x8xf32>
    %cst_309 = arith.constant dense<0.000000e+00> : vector<8xf32>
    %555 = vector.multi_reduction <add>, %554, %cst_309 [0] : vector<16x8xf32> to vector<8xf32>
    %556 = vector.shape_cast %555 : vector<8xf32> to vector<1x8xf32>
    %cst_310 = arith.constant 1.600000e+01 : f32
    %557 = vector.broadcast %cst_310 : f32 to vector<1x8xf32>
    %558 = arith.divf %556, %557 : vector<1x8xf32>
    %559 = arith.mulf %554, %554 : vector<16x8xf32>
    %cst_311 = arith.constant dense<0.000000e+00> : vector<8xf32>
    %560 = vector.multi_reduction <add>, %559, %cst_311 [0] : vector<16x8xf32> to vector<8xf32>
    %561 = vector.shape_cast %560 : vector<8xf32> to vector<1x8xf32>
    %cst_312 = arith.constant 1.600000e+01 : f32
    %562 = vector.broadcast %cst_312 : f32 to vector<1x8xf32>
    %563 = arith.divf %561, %562 : vector<1x8xf32>
    %564 = arith.mulf %558, %558 : vector<1x8xf32>
    %565 = arith.subf %563, %564 : vector<1x8xf32>
    %566 = vector.broadcast %558 : vector<1x8xf32> to vector<16x8xf32>
    %567 = arith.subf %554, %566 : vector<16x8xf32>
    %cst_313 = arith.constant 9.99999974E-6 : f32
    %568 = vector.broadcast %cst_313 : f32 to vector<1x8xf32>
    %569 = arith.addf %565, %568 : vector<1x8xf32>
    %570 = math.rsqrt %569 : vector<1x8xf32>
    %571 = vector.broadcast %570 : vector<1x8xf32> to vector<16x8xf32>
    %572 = arith.mulf %567, %571 : vector<16x8xf32>
    %c3_314 = arith.constant 3 : index
    %c0_315 = arith.constant 0 : index
    %c0_316 = arith.constant 0 : index
    %573 = vector.load %arg16[%c3_314, %c0_315, %c0_316] : memref<4x1x8xf32, #tpu.memory_space<vmem>>, vector<1x1x8xf32>
    %574 = vector.shape_cast %573 : vector<1x1x8xf32> to vector<1x8xf32>
    %575 = vector.broadcast %574 : vector<1x8xf32> to vector<16x8xf32>
    %576 = arith.mulf %572, %575 : vector<16x8xf32>
    %c3_317 = arith.constant 3 : index
    %c0_318 = arith.constant 0 : index
    %c0_319 = arith.constant 0 : index
    %577 = vector.load %arg17[%c3_317, %c0_318, %c0_319] : memref<4x1x8xf32, #tpu.memory_space<vmem>>, vector<1x1x8xf32>
    %578 = vector.shape_cast %577 : vector<1x1x8xf32> to vector<1x8xf32>
    %579 = vector.broadcast %578 : vector<1x8xf32> to vector<16x8xf32>
    %580 = arith.addf %576, %579 : vector<16x8xf32>
    %581 = arith.negf %580 : vector<16x8xf32>
    %582 = math.exp %581 : vector<16x8xf32>
    %cst_320 = arith.constant 1.000000e+00 : f32
    %583 = vector.broadcast %cst_320 : f32 to vector<16x8xf32>
    %584 = arith.addf %583, %582 : vector<16x8xf32>
    %585 = arith.divf %583, %584 : vector<16x8xf32>
    %586 = arith.mulf %432, %585 : vector<16x8xf32>
    %c2_321 = arith.constant 2 : index
    %c0_322 = arith.constant 0 : index
    %c0_323 = arith.constant 0 : index
    %587 = vector.load %arg18[%c2_321, %c0_322, %c0_323] : memref<3x16x8xf32, #tpu.memory_space<vmem>>, vector<1x16x8xf32>
    %588 = vector.shape_cast %587 : vector<1x16x8xf32> to vector<16x8xf32>
    %589 = vector.shape_cast %586 : vector<16x8xf32> to vector<1x16x8xf32>
    tpu.vector_store %arg18[%c2_321, %c0_322, %c0_323], %589 {strides = array<i32>} : memref<3x16x8xf32, #tpu.memory_space<vmem>>, vector<1x16x8xf32>,
    return
  }
}

</mosaic_0001>

<llo_original>
// kernel: tpu_custom_call.1
$region0: #{tpu_custom_call.1}
  #allocation0 [shape = 'u32[]', space=smem, size = 0x4, offset = 0x4, fixed_abs, tag = 'smem constant byte address 0x4 - core index']
  #allocation1 [shape = 'u32[72,128]{1,0:T(1,128)}', space=vmem, size = 0x9000, scoped, tag = 'internal scratch']
  %s0 = inlined_call_operand.vmem [shape: f32[3,16,8], index: 0, kind: input, shape index: {}]
  %s1 = inlined_call_operand.vmem [shape: f32[3,16,16], index: 1, kind: input, shape index: {}]
  %s2 = inlined_call_operand.vmem [shape: f32[3,8,16], index: 2, kind: input, shape index: {}]
  %s3 = inlined_call_operand.vmem [shape: f32[3,1,16], index: 3, kind: input, shape index: {}]
  %s4 = inlined_call_operand.vmem [shape: f32[3,1,16], index: 4, kind: input, shape index: {}]
  %s5 = inlined_call_operand.vmem [shape: f32[3,1,16], index: 5, kind: input, shape index: {}]
  %s6 = inlined_call_operand.vmem [shape: f32[4,16,16], index: 6, kind: input, shape index: {}]
  %s7 = inlined_call_operand.vmem [shape: f32[4,16,1], index: 7, kind: input, shape index: {}]
  %s8 = inlined_call_operand.vmem [shape: f32[4,1,16], index: 8, kind: input, shape index: {}]
  %s9 = inlined_call_operand.vmem [shape: f32[4,1,16], index: 9, kind: input, shape index: {}]
  %s10 = inlined_call_operand.vmem [shape: f32[3,16,8], index: 10, kind: input, shape index: {}]
  %s11 = inlined_call_operand.vmem [shape: f32[3,1,8], index: 11, kind: input, shape index: {}]
  %s12 = inlined_call_operand.vmem [shape: f32[3,1,8], index: 12, kind: input, shape index: {}]
  %s13 = inlined_call_operand.vmem [shape: f32[3,1,8], index: 13, kind: input, shape index: {}]
  %s14 = inlined_call_operand.vmem [shape: f32[4,16,16], index: 14, kind: input, shape index: {}]
  %s15 = inlined_call_operand.vmem [shape: f32[4,16,1], index: 15, kind: input, shape index: {}]
  %s16 = inlined_call_operand.vmem [shape: f32[4,1,8], index: 16, kind: input, shape index: {}]
  %s17 = inlined_call_operand.vmem [shape: f32[4,1,8], index: 17, kind: input, shape index: {}]
  %s18 = inlined_call_operand.vmem [shape: f32[3,16,8], index: 18, kind: output, shape index: {}]
  %s19 = sld [smem:[#allocation0]]
  $region82: #{tpu_custom_call.1} parent=0
    _
  %s21 = ssub.s32 1, %s19
  %s22 = scalar_select 0, %s21, %s19
  // Predicated region
  $region2: #{tpu_custom_call.1} parent=0 // pred_check
    _
  $region3: #{tpu_custom_call.1} parent=0 // pred_check_branch
    %24 = sbr.rel (0) target = $region5
  $region4: #{tpu_custom_call.1} parent=0 // pred_region
    _
  $region5: #{tpu_custom_call.1} parent=0 // pred_fallthru
    _
  // Predicated region
  $region6: #{tpu_custom_call.1} parent=0 // pred_check
    _
  $region7: #{tpu_custom_call.1} parent=0 // pred_check_branch
    %26 = sbr.rel (0) target = $region9
  $region8: #{tpu_custom_call.1} parent=0 // pred_region
    _
  $region9: #{tpu_custom_call.1} parent=0 // pred_fallthru
    _
  // Predicated region
  $region10: #{tpu_custom_call.1} parent=0 // pred_check
    _
  $region11: #{tpu_custom_call.1} parent=0 // pred_check_branch
    %28 = sbr.rel (0) target = $region13
  $region12: #{tpu_custom_call.1} parent=0 // pred_region
    _
  $region13: #{tpu_custom_call.1} parent=0 // pred_fallthru
    _
  // Predicated region
  $region14: #{tpu_custom_call.1} parent=0 // pred_check
    _
  $region15: #{tpu_custom_call.1} parent=0 // pred_check_branch
    %30 = sbr.rel (0) target = $region17
  $region16: #{tpu_custom_call.1} parent=0 // pred_region
    _
  $region17: #{tpu_custom_call.1} parent=0 // pred_fallthru
    _
  // Predicated region
  $region18: #{tpu_custom_call.1} parent=0 // pred_check
    _
  $region19: #{tpu_custom_call.1} parent=0 // pred_check_branch
    %32 = sbr.rel (0) target = $region21
  $region20: #{tpu_custom_call.1} parent=0 // pred_region
    _
  $region21: #{tpu_custom_call.1} parent=0 // pred_fallthru
    _
  // Predicated region
  $region22: #{tpu_custom_call.1} parent=0 // pred_check
    _
  $region23: #{tpu_custom_call.1} parent=0 // pred_check_branch
    %34 = sbr.rel (0) target = $region25
  $region24: #{tpu_custom_call.1} parent=0 // pred_region
    _
  $region25: #{tpu_custom_call.1} parent=0 // pred_fallthru
    _
  // Predicated region
  $region26: #{tpu_custom_call.1} parent=0 // pred_check
    _
  $region27: #{tpu_custom_call.1} parent=0 // pred_check_branch
    %36 = sbr.rel (0) target = $region29
  $region28: #{tpu_custom_call.1} parent=0 // pred_region
    _
  $region29: #{tpu_custom_call.1} parent=0 // pred_fallthru
    _
  // Predicated region
  $region30: #{tpu_custom_call.1} parent=0 // pred_check
    _
  $region31: #{tpu_custom_call.1} parent=0 // pred_check_branch
    %38 = sbr.rel (0) target = $region33
  $region32: #{tpu_custom_call.1} parent=0 // pred_region
    _
  $region33: #{tpu_custom_call.1} parent=0 // pred_fallthru
    _
  // Predicated region
  $region34: #{tpu_custom_call.1} parent=0 // pred_check
    _
  $region35: #{tpu_custom_call.1} parent=0 // pred_check_branch
    %40 = sbr.rel (0) target = $region37
  $region36: #{tpu_custom_call.1} parent=0 // pred_region
    _
  $region37: #{tpu_custom_call.1} parent=0 // pred_fallthru
    _
  // Predicated region
  $region38: #{tpu_custom_call.1} parent=0 // pred_check
    _
  $region39: #{tpu_custom_call.1} parent=0 // pred_check_branch
    %42 = sbr.rel (0) target = $region41
  $region40: #{tpu_custom_call.1} parent=0 // pred_region
    _
  $region41: #{tpu_custom_call.1} parent=0 // pred_fallthru
    _
  // Predicated region
  $region42: #{tpu_custom_call.1} parent=0 // pred_check
    _
  $region43: #{tpu_custom_call.1} parent=0 // pred_check_branch
    %44 = sbr.rel (0) target = $region45
  $region44: #{tpu_custom_call.1} parent=0 // pred_region
    _
  $region45: #{tpu_custom_call.1} parent=0 // pred_fallthru
    _
  // Predicated region
  $region46: #{tpu_custom_call.1} parent=0 // pred_check
    _
  $region47: #{tpu_custom_call.1} parent=0 // pred_check_branch
    %46 = sbr.rel (0) target = $region49
  $region48: #{tpu_custom_call.1} parent=0 // pred_region
    _
  $region49: #{tpu_custom_call.1} parent=0 // pred_fallthru
    _
  // Predicated region
  $region50: #{tpu_custom_call.1} parent=0 // pred_check
    _
  $region51: #{tpu_custom_call.1} parent=0 // pred_check_branch
    %48 = sbr.rel (0) target = $region53
  $region52: #{tpu_custom_call.1} parent=0 // pred_region
    _
  $region53: #{tpu_custom_call.1} parent=0 // pred_fallthru
    _
  // Predicated region
  $region54: #{tpu_custom_call.1} parent=0 // pred_check
    _
  $region55: #{tpu_custom_call.1} parent=0 // pred_check_branch
    %50 = sbr.rel (0) target = $region57
  $region56: #{tpu_custom_call.1} parent=0 // pred_region
    _
  $region57: #{tpu_custom_call.1} parent=0 // pred_fallthru
    _
  // Predicated region
  $region58: #{tpu_custom_call.1} parent=0 // pred_check
    _
  $region59: #{tpu_custom_call.1} parent=0 // pred_check_branch
    %52 = sbr.rel (0) target = $region61
  $region60: #{tpu_custom_call.1} parent=0 // pred_region
    _
  $region61: #{tpu_custom_call.1} parent=0 // pred_fallthru
    _
  // Predicated region
  $region62: #{tpu_custom_call.1} parent=0 // pred_check
    _
  $region63: #{tpu_custom_call.1} parent=0 // pred_check_branch
    %54 = sbr.rel (0) target = $region65
  $region64: #{tpu_custom_call.1} parent=0 // pred_region
    _
  $region65: #{tpu_custom_call.1} parent=0 // pred_fallthru
    _
  // Predicated region
  $region66: #{tpu_custom_call.1} parent=0 // pred_check
    _
  $region67: #{tpu_custom_call.1} parent=0 // pred_check_branch
    %56 = sbr.rel (0) target = $region69
  $region68: #{tpu_custom_call.1} parent=0 // pred_region
    _
  $region69: #{tpu_custom_call.1} parent=0 // pred_fallthru
    _
  // Predicated region
  $region70: #{tpu_custom_call.1} parent=0 // pred_check
    _
  $region71: #{tpu_custom_call.1} parent=0 // pred_check_branch
    %58 = sbr.rel (0) target = $region73
  $region72: #{tpu_custom_call.1} parent=0 // pred_region
    _
  $region73: #{tpu_custom_call.1} parent=0 // pred_fallthru
    _
  %v59 = vld [vmem:[%s0] sm:$0xff]
  %v60 = vld [vmem:[%s0 + $0x8] sm:$0xff]
  %s61 = scalar_lea.vmem %s0, 16
  %v62 = vld [vmem:[%s61] sm:$0xff]
  %v63 = vld [vmem:[%s61 + $0x8] sm:$0xff]
  %s64 = scalar_lea.vmem %s0, 32
  %v65 = vld [vmem:[%s64] sm:$0xff]
  %v66 = vld [vmem:[%s64 + $0x8] sm:$0xff]
  %v67 = vld [vmem:[%s1] sm:$0xff]
  %v68 = vld [vmem:[%s1 + $0x8] sm:$0xff]
  %s69 = scalar_lea.vmem %s1, 16
  %v70 = vld [vmem:[%s69] sm:$0xff]
  %v71 = vld [vmem:[%s69 + $0x8] sm:$0xff]
  %s72 = scalar_lea.vmem %s1, 32
  %v73 = vld [vmem:[%s72] sm:$0xff]
  %v74 = vld [vmem:[%s72 + $0x8] sm:$0xff]
  %v75 = vld [vmem:[%s2] sm:$0xff]
  %v76 = vld [vmem:[%s3] sm:$0x1]
  %v77 = vld [vmem:[%s4] sm:$0x1]
  %v78 = vld [vmem:[%s5] sm:$0x1]
  %vm79 = vcmask 64512
  %v81 = vsel %vm79, %v59, 0
  %v84 = vsel %vm79, %v60, 0
  %86 = vmatpush.msra.mxu0 0.0
  %87 = vmatpush.msra.mxu0 0.0
  %88 = vmatpush.msra.mxu0 0.0
  %89 = vmatpush.msra.mxu0 0.0
  %90 = vmatpush.msra.mxu0 0.0
  %91 = vmatpush.msra.mxu0 0.0
  %92 = vmatpush.msra.mxu0 0.0
  %93 = vmatpush.msra.mxu0 0.0
  %94 = vmatpush.msra.mxu0 0.0
  %95 = vmatpush.msra.mxu0 0.0
  %96 = vmatpush.msra.mxu0 0.0
  %97 = vmatpush.msra.mxu0 0.0
  %98 = vmatpush.msra.mxu0 0.0
  %99 = vmatpush.msra.mxu0 0.0
  %100 = vmatpush.msra.mxu0 0.0
  %101 = vmatpush.msra.mxu0 %v75
  %102 = vmatmul.f32.gmra.mxu0 %v81
  %v103 = vpop.f32.mrf.mxu0
  %v104 = vadd.f32 0.0, %v103
  %105 = vmatmul.f32.gmra.mxu0 %v84
  %v106 = vpop.f32.mrf.mxu0
  %v107 = vadd.f32 0.0, %v106
  %108 = vdwg.mxu0
  %v110 = vperm.slane %v77, 0
  %v112 = vmul.f32 %v104, %v110
  %v113 = vmul.f32 %v107, %v110
  %vm114 = vcmask 130048
  %v115 = vsel %vm114, %v112, 0.0
  %116 = vadd.xlane.f32.xlu0 %v115
  %v117 = vpop.xlane.xlu0 %116
  %v118 = vsel %vm114, %v113, 0.0
  %119 = vadd.xlane.f32.xlu0 %v118
  %v120 = vpop.xlane.xlu0 %119
  %v122 = vsel %vm114, %v76, 0
  %v125 = vsel %vm114, %v104, 0
  %v128 = vsel %vm114, %v107, 0
  %130 = vmatpush.xpose.msra.mxu0 0.0
  %131 = vmatpush.xpose.msra.mxu0 0.0
  %132 = vmatpush.xpose.msra.mxu0 0.0
  %133 = vmatpush.xpose.msra.mxu0 0.0
  %134 = vmatpush.xpose.msra.mxu0 0.0
  %135 = vmatpush.xpose.msra.mxu0 0.0
  %136 = vmatpush.xpose.msra.mxu0 0.0
  %137 = vmatpush.xpose.msra.mxu0 0.0
  %138 = vmatpush.xpose.msra.mxu0 0.0
  %139 = vmatpush.xpose.msra.mxu0 0.0
  %140 = vmatpush.xpose.msra.mxu0 0.0
  %141 = vmatpush.xpose.msra.mxu0 0.0
  %142 = vmatpush.xpose.msra.mxu0 0.0
  %143 = vmatpush.xpose.msra.mxu0 0.0
  %144 = vmatpush.xpose.msra.mxu0 %v128
  %145 = vmatpush.xpose.msra.mxu0 %v125
  %146 = vmatmul.f32.gmra.mxu0 %v122
  %v147 = vpop.f32.mrf.mxu0
  %v148 = vadd.f32 0.0, %v147
  %149 = vdwg.mxu0
  %v150 = vperm.slane %v148, 0
  %v151 = vadd.f32 %v117, %v150
  %v152 = vadd.f32 %v120, %v150
  %vm153 = vcmp.gt.f32.partialorder %v151, 0.0
  %vm154 = vcmp.gt.f32.partialorder %v152, 0.0
  %v155 = vmul.f32 %v151, 0.2
  %v156 = vmul.f32 %v152, 0.2
  %v157 = vsel %vm153, %v151, %v155
  %v158 = vsel %vm154, %v152, %v156
  %vm159 = vcmp.gt.f32.partialorder %v67, 0.0
  %vm160 = vcmp.gt.f32.partialorder %v68, 0.0
  %v161 = vsel %vm159, %v157, -1e+30
  %v162 = vsel %vm160, %v158, -1e+30
  %v163 = vsel %vm114, %v161, -inf
  %164 = vmax.xlane.f32.xlu0 %v163
  %v165 = vpop.xlane.xlu0 %164
  %v166 = vsel %vm114, %v162, -inf
  %167 = vmax.xlane.f32.xlu0 %v166
  %v168 = vpop.xlane.xlu0 %167
  %v169 = vsub.f32 %v161, %v165
  %v170 = vsub.f32 %v162, %v168
  %v171 = vmul.f32 %v169, 1.442695
  %v172 = vpow.pop %v171
  %v173 = vmul.f32 %v170, 1.442695
  %v174 = vpow.pop %v173
  %v175 = vsel %vm159, %v172, 0.0
  %v176 = vsel %vm160, %v174, 0.0
  %v177 = vsel %vm114, %v175, 0.0
  %178 = vadd.xlane.f32.xlu0 %v177
  %v179 = vpop.xlane.xlu0 %178
  %v180 = vsel %vm114, %v176, 0.0
  %181 = vadd.xlane.f32.xlu0 %v180
  %v182 = vpop.xlane.xlu0 %181
  %v183 = vrcp.pop %v179
  %v184 = vmul.f32 %v179, %v183
  %v185 = vsub.f32 1.0, %v184
  %v186 = vmul.f32 %v183, %v185
  %v187 = vadd.f32 %v183, %v186
  %vm188 = vweird.f32 %v179
  %vm189 = vweird.f32 %v183
  %vm190 = vmor %vm188, %vm189
  %v191 = vsel %vm190, %v183, %v187
  %v192 = vand.u32 2147483647, %v179
  %vm193 = vcmp.eq.f32.partialorder %v192, 8.507059e+37
  %v194 = vand.u32 %v179, 2147483648
  %v195 = vor.u32 1.1754944e-38, %v194
  %v196 = vsel %vm193, %v195, %v191
  %v197 = vmul.f32 %v175, %v196
  %v198 = vrcp.pop %v182
  %v199 = vmul.f32 %v182, %v198
  %v200 = vsub.f32 1.0, %v199
  %v201 = vmul.f32 %v198, %v200
  %v202 = vadd.f32 %v198, %v201
  %vm203 = vweird.f32 %v182
  %vm204 = vweird.f32 %v198
  %vm205 = vmor %vm203, %vm204
  %v206 = vsel %vm205, %v198, %v202
  %v207 = vand.u32 2147483647, %v182
  %vm208 = vcmp.eq.f32.partialorder %v207, 8.507059e+37
  %v209 = vand.u32 %v182, 2147483648
  %v210 = vor.u32 1.1754944e-38, %v209
  %v211 = vsel %vm208, %v210, %v206
  %v212 = vmul.f32 %v176, %v211
  %v214 = vperm.slane %v78, 0
  %v217 = vsel %vm114, %v197, 0
  %v220 = vsel %vm114, %v212, 0
  %222 = vmatpush.msra.mxu0 0.0
  %223 = vmatpush.msra.mxu0 0.0
  %224 = vmatpush.msra.mxu0 0.0
  %225 = vmatpush.msra.mxu0 0.0
  %226 = vmatpush.msra.mxu0 0.0
  %227 = vmatpush.msra.mxu0 0.0
  %228 = vmatpush.msra.mxu0 0.0
  %229 = vmatpush.msra.mxu0 0.0
  %230 = vmatpush.msra.mxu0 0.0
  %231 = vmatpush.msra.mxu0 0.0
  %232 = vmatpush.msra.mxu0 0.0
  %233 = vmatpush.msra.mxu0 0.0
  %234 = vmatpush.msra.mxu0 0.0
  %235 = vmatpush.msra.mxu0 0.0
  %236 = vmatpush.msra.mxu0 %v107
  %237 = vmatpush.msra.mxu0 %v104
  %238 = vmatmul.f32.gmra.mxu0 %v217
  %v239 = vpop.f32.mrf.mxu0
  %v240 = vadd.f32 %v214, %v239
  %241 = vmatmul.f32.gmra.mxu0 %v220
  %v242 = vpop.f32.mrf.mxu0
  %v243 = vadd.f32 %v214, %v242
  %244 = vdwg.mxu0
  %v245 = vmax.f32 %v240, 0.0
  %v246 = vmax.f32 %v243, 0.0
  %s247 = scalar_lea.vmem %s2, 8
  %v248 = vld [vmem:[%s247] sm:$0xff]
  %s249 = scalar_lea.vmem %s3, 1
  %v250 = vld [vmem:[%s249] sm:$0x1]
  %s251 = scalar_lea.vmem %s4, 1
  %v252 = vld [vmem:[%s251] sm:$0x1]
  %s253 = scalar_lea.vmem %s5, 1
  %v254 = vld [vmem:[%s253] sm:$0x1]
  %v256 = vsel %vm79, %v62, 0
  %v259 = vsel %vm79, %v63, 0
  %261 = vmatpush.msra.mxu0 0.0
  %262 = vmatpush.msra.mxu0 0.0
  %263 = vmatpush.msra.mxu0 0.0
  %264 = vmatpush.msra.mxu0 0.0
  %265 = vmatpush.msra.mxu0 0.0
  %266 = vmatpush.msra.mxu0 0.0
  %267 = vmatpush.msra.mxu0 0.0
  %268 = vmatpush.msra.mxu0 0.0
  %269 = vmatpush.msra.mxu0 0.0
  %270 = vmatpush.msra.mxu0 0.0
  %271 = vmatpush.msra.mxu0 0.0
  %272 = vmatpush.msra.mxu0 0.0
  %273 = vmatpush.msra.mxu0 0.0
  %274 = vmatpush.msra.mxu0 0.0
  %275 = vmatpush.msra.mxu0 0.0
  %276 = vmatpush.msra.mxu0 %v248
  %277 = vmatmul.f32.gmra.mxu0 %v256
  %v278 = vpop.f32.mrf.mxu0
  %v279 = vadd.f32 0.0, %v278
  %280 = vmatmul.f32.gmra.mxu0 %v259
  %v281 = vpop.f32.mrf.mxu0
  %v282 = vadd.f32 0.0, %v281
  %283 = vdwg.mxu0
  %v285 = vperm.slane %v252, 0
  %v287 = vmul.f32 %v279, %v285
  %v288 = vmul.f32 %v282, %v285
  %v289 = vsel %vm114, %v287, 0.0
  %290 = vadd.xlane.f32.xlu0 %v289
  %v291 = vpop.xlane.xlu0 %290
  %v292 = vsel %vm114, %v288, 0.0
  %293 = vadd.xlane.f32.xlu0 %v292
  %v294 = vpop.xlane.xlu0 %293
  %v296 = vsel %vm114, %v250, 0
  %v299 = vsel %vm114, %v279, 0
  %v302 = vsel %vm114, %v282, 0
  %304 = vmatpush.xpose.msra.mxu0 0.0
  %305 = vmatpush.xpose.msra.mxu0 0.0
  %306 = vmatpush.xpose.msra.mxu0 0.0
  %307 = vmatpush.xpose.msra.mxu0 0.0
  %308 = vmatpush.xpose.msra.mxu0 0.0
  %309 = vmatpush.xpose.msra.mxu0 0.0
  %310 = vmatpush.xpose.msra.mxu0 0.0
  %311 = vmatpush.xpose.msra.mxu0 0.0
  %312 = vmatpush.xpose.msra.mxu0 0.0
  %313 = vmatpush.xpose.msra.mxu0 0.0
  %314 = vmatpush.xpose.msra.mxu0 0.0
  %315 = vmatpush.xpose.msra.mxu0 0.0
  %316 = vmatpush.xpose.msra.mxu0 0.0
  %317 = vmatpush.xpose.msra.mxu0 0.0
  %318 = vmatpush.xpose.msra.mxu0 %v302
  %319 = vmatpush.xpose.msra.mxu0 %v299
  %320 = vmatmul.f32.gmra.mxu0 %v296
  %v321 = vpop.f32.mrf.mxu0
  %v322 = vadd.f32 0.0, %v321
  %323 = vdwg.mxu0
  %v324 = vperm.slane %v322, 0
  %v325 = vadd.f32 %v291, %v324
  %v326 = vadd.f32 %v294, %v324
  %vm327 = vcmp.gt.f32.partialorder %v325, 0.0
  %vm328 = vcmp.gt.f32.partialorder %v326, 0.0
  %v329 = vmul.f32 %v325, 0.2
  %v330 = vmul.f32 %v326, 0.2
  %v331 = vsel %vm327, %v325, %v329
  %v332 = vsel %vm328, %v326, %v330
  %vm333 = vcmp.gt.f32.partialorder %v70, 0.0
  %vm334 = vcmp.gt.f32.partialorder %v71, 0.0
  %v335 = vsel %vm333, %v331, -1e+30
  %v336 = vsel %vm334, %v332, -1e+30
  %v337 = vsel %vm114, %v335, -inf
  %338 = vmax.xlane.f32.xlu0 %v337
  %v339 = vpop.xlane.xlu0 %338
  %v340 = vsel %vm114, %v336, -inf
  %341 = vmax.xlane.f32.xlu0 %v340
  %v342 = vpop.xlane.xlu0 %341
  %v343 = vsub.f32 %v335, %v339
  %v344 = vsub.f32 %v336, %v342
  %v345 = vmul.f32 %v343, 1.442695
  %v346 = vpow.pop %v345
  %v347 = vmul.f32 %v344, 1.442695
  %v348 = vpow.pop %v347
  %v349 = vsel %vm333, %v346, 0.0
  %v350 = vsel %vm334, %v348, 0.0
  %v351 = vsel %vm114, %v349, 0.0
  %352 = vadd.xlane.f32.xlu0 %v351
  %v353 = vpop.xlane.xlu0 %352
  %v354 = vsel %vm114, %v350, 0.0
  %355 = vadd.xlane.f32.xlu0 %v354
  %v356 = vpop.xlane.xlu0 %355
  %v357 = vrcp.pop %v353
  %v358 = vmul.f32 %v353, %v357
  %v359 = vsub.f32 1.0, %v358
  %v360 = vmul.f32 %v357, %v359
  %v361 = vadd.f32 %v357, %v360
  %vm362 = vweird.f32 %v353
  %vm363 = vweird.f32 %v357
  %vm364 = vmor %vm362, %vm363
  %v365 = vsel %vm364, %v357, %v361
  %v366 = vand.u32 2147483647, %v353
  %vm367 = vcmp.eq.f32.partialorder %v366, 8.507059e+37
  %v368 = vand.u32 %v353, 2147483648
  %v369 = vor.u32 1.1754944e-38, %v368
  %v370 = vsel %vm367, %v369, %v365
  %v371 = vmul.f32 %v349, %v370
  %v372 = vrcp.pop %v356
  %v373 = vmul.f32 %v356, %v372
  %v374 = vsub.f32 1.0, %v373
  %v375 = vmul.f32 %v372, %v374
  %v376 = vadd.f32 %v372, %v375
  %vm377 = vweird.f32 %v356
  %vm378 = vweird.f32 %v372
  %vm379 = vmor %vm377, %vm378
  %v380 = vsel %vm379, %v372, %v376
  %v381 = vand.u32 2147483647, %v356
  %vm382 = vcmp.eq.f32.partialorder %v381, 8.507059e+37
  %v383 = vand.u32 %v356, 2147483648
  %v384 = vor.u32 1.1754944e-38, %v383
  %v385 = vsel %vm382, %v384, %v380
  %v386 = vmul.f32 %v350, %v385
  %v388 = vperm.slane %v254, 0
  %v391 = vsel %vm114, %v371, 0
  %v394 = vsel %vm114, %v386, 0
  %396 = vmatpush.msra.mxu0 0.0
  %397 = vmatpush.msra.mxu0 0.0
  %398 = vmatpush.msra.mxu0 0.0
  %399 = vmatpush.msra.mxu0 0.0
  %400 = vmatpush.msra.mxu0 0.0
  %401 = vmatpush.msra.mxu0 0.0
  %402 = vmatpush.msra.mxu0 0.0
  %403 = vmatpush.msra.mxu0 0.0
  %404 = vmatpush.msra.mxu0 0.0
  %405 = vmatpush.msra.mxu0 0.0
  %406 = vmatpush.msra.mxu0 0.0
  %407 = vmatpush.msra.mxu0 0.0
  %408 = vmatpush.msra.mxu0 0.0
  %409 = vmatpush.msra.mxu0 0.0
  %410 = vmatpush.msra.mxu0 %v282
  %411 = vmatpush.msra.mxu0 %v279
  %412 = vmatmul.f32.gmra.mxu0 %v391
  %v413 = vpop.f32.mrf.mxu0
  %v414 = vadd.f32 %v388, %v413
  %415 = vmatmul.f32.gmra.mxu0 %v394
  %v416 = vpop.f32.mrf.mxu0
  %v417 = vadd.f32 %v388, %v416
  %418 = vdwg.mxu0
  %v419 = vmax.f32 %v414, 0.0
  %v420 = vmax.f32 %v417, 0.0
  %s421 = scalar_lea.vmem %s2, 16
  %v422 = vld [vmem:[%s421] sm:$0xff]
  %s423 = scalar_lea.vmem %s3, 2
  %v424 = vld [vmem:[%s423] sm:$0x1]
  %s425 = scalar_lea.vmem %s4, 2
  %v426 = vld [vmem:[%s425] sm:$0x1]
  %s427 = scalar_lea.vmem %s5, 2
  %v428 = vld [vmem:[%s427] sm:$0x1]
  %v430 = vsel %vm79, %v65, 0
  %v433 = vsel %vm79, %v66, 0
  %435 = vmatpush.msra.mxu0 0.0
  %436 = vmatpush.msra.mxu0 0.0
  %437 = vmatpush.msra.mxu0 0.0
  %438 = vmatpush.msra.mxu0 0.0
  %439 = vmatpush.msra.mxu0 0.0
  %440 = vmatpush.msra.mxu0 0.0
  %441 = vmatpush.msra.mxu0 0.0
  %442 = vmatpush.msra.mxu0 0.0
  %443 = vmatpush.msra.mxu0 0.0
  %444 = vmatpush.msra.mxu0 0.0
  %445 = vmatpush.msra.mxu0 0.0
  %446 = vmatpush.msra.mxu0 0.0
  %447 = vmatpush.msra.mxu0 0.0
  %448 = vmatpush.msra.mxu0 0.0
  %449 = vmatpush.msra.mxu0 0.0
  %450 = vmatpush.msra.mxu0 %v422
  %451 = vmatmul.f32.gmra.mxu0 %v430
  %v452 = vpop.f32.mrf.mxu0
  %v453 = vadd.f32 0.0, %v452
  %454 = vmatmul.f32.gmra.mxu0 %v433
  %v455 = vpop.f32.mrf.mxu0
  %v456 = vadd.f32 0.0, %v455
  %457 = vdwg.mxu0
  %v459 = vperm.slane %v426, 0
  %v461 = vmul.f32 %v453, %v459
  %v462 = vmul.f32 %v456, %v459
  %v463 = vsel %vm114, %v461, 0.0
  %464 = vadd.xlane.f32.xlu0 %v463
  %v465 = vpop.xlane.xlu0 %464
  %v466 = vsel %vm114, %v462, 0.0
  %467 = vadd.xlane.f32.xlu0 %v466
  %v468 = vpop.xlane.xlu0 %467
  %v470 = vsel %vm114, %v424, 0
  %v473 = vsel %vm114, %v453, 0
  %v476 = vsel %vm114, %v456, 0
  %478 = vmatpush.xpose.msra.mxu0 0.0
  %479 = vmatpush.xpose.msra.mxu0 0.0
  %480 = vmatpush.xpose.msra.mxu0 0.0
  %481 = vmatpush.xpose.msra.mxu0 0.0
  %482 = vmatpush.xpose.msra.mxu0 0.0
  %483 = vmatpush.xpose.msra.mxu0 0.0
  %484 = vmatpush.xpose.msra.mxu0 0.0
  %485 = vmatpush.xpose.msra.mxu0 0.0
  %486 = vmatpush.xpose.msra.mxu0 0.0
  %487 = vmatpush.xpose.msra.mxu0 0.0
  %488 = vmatpush.xpose.msra.mxu0 0.0
  %489 = vmatpush.xpose.msra.mxu0 0.0
  %490 = vmatpush.xpose.msra.mxu0 0.0
  %491 = vmatpush.xpose.msra.mxu0 0.0
  %492 = vmatpush.xpose.msra.mxu0 %v476
  %493 = vmatpush.xpose.msra.mxu0 %v473
  %494 = vmatmul.f32.gmra.mxu0 %v470
  %v495 = vpop.f32.mrf.mxu0
  %v496 = vadd.f32 0.0, %v495
  %497 = vdwg.mxu0
  %v498 = vperm.slane %v496, 0
  %v499 = vadd.f32 %v465, %v498
  %v500 = vadd.f32 %v468, %v498
  %vm501 = vcmp.gt.f32.partialorder %v499, 0.0
  %vm502 = vcmp.gt.f32.partialorder %v500, 0.0
  %v503 = vmul.f32 %v499, 0.2
  %v504 = vmul.f32 %v500, 0.2
  %v505 = vsel %vm501, %v499, %v503
  %v506 = vsel %vm502, %v500, %v504
  %vm507 = vcmp.gt.f32.partialorder %v73, 0.0
  %vm508 = vcmp.gt.f32.partialorder %v74, 0.0
  %v509 = vsel %vm507, %v505, -1e+30
  %v510 = vsel %vm508, %v506, -1e+30
  %v511 = vsel %vm114, %v509, -inf
  %512 = vmax.xlane.f32.xlu0 %v511
  %v513 = vpop.xlane.xlu0 %512
  %v514 = vsel %vm114, %v510, -inf
  %515 = vmax.xlane.f32.xlu0 %v514
  %v516 = vpop.xlane.xlu0 %515
  %v517 = vsub.f32 %v509, %v513
  %v518 = vsub.f32 %v510, %v516
  %v519 = vmul.f32 %v517, 1.442695
  %v520 = vpow.pop %v519
  %v521 = vmul.f32 %v518, 1.442695
  %v522 = vpow.pop %v521
  %v523 = vsel %vm507, %v520, 0.0
  %v524 = vsel %vm508, %v522, 0.0
  %v525 = vsel %vm114, %v523, 0.0
  %526 = vadd.xlane.f32.xlu0 %v525
  %v527 = vpop.xlane.xlu0 %526
  %v528 = vsel %vm114, %v524, 0.0
  %529 = vadd.xlane.f32.xlu0 %v528
  %v530 = vpop.xlane.xlu0 %529
  %v531 = vrcp.pop %v527
  %v532 = vmul.f32 %v527, %v531
  %v533 = vsub.f32 1.0, %v532
  %v534 = vmul.f32 %v531, %v533
  %v535 = vadd.f32 %v531, %v534
  %vm536 = vweird.f32 %v527
  %vm537 = vweird.f32 %v531
  %vm538 = vmor %vm536, %vm537
  %v539 = vsel %vm538, %v531, %v535
  %v540 = vand.u32 2147483647, %v527
  %vm541 = vcmp.eq.f32.partialorder %v540, 8.507059e+37
  %v542 = vand.u32 %v527, 2147483648
  %v543 = vor.u32 1.1754944e-38, %v542
  %v544 = vsel %vm541, %v543, %v539
  %v545 = vmul.f32 %v523, %v544
  %v546 = vrcp.pop %v530
  %v547 = vmul.f32 %v530, %v546
  %v548 = vsub.f32 1.0, %v547
  %v549 = vmul.f32 %v546, %v548
  %v550 = vadd.f32 %v546, %v549
  %vm551 = vweird.f32 %v530
  %vm552 = vweird.f32 %v546
  %vm553 = vmor %vm551, %vm552
  %v554 = vsel %vm553, %v546, %v550
  %v555 = vand.u32 2147483647, %v530
  %vm556 = vcmp.eq.f32.partialorder %v555, 8.507059e+37
  %v557 = vand.u32 %v530, 2147483648
  %v558 = vor.u32 1.1754944e-38, %v557
  %v559 = vsel %vm556, %v558, %v554
  %v560 = vmul.f32 %v524, %v559
  %v562 = vperm.slane %v428, 0
  %v565 = vsel %vm114, %v545, 0
  %v568 = vsel %vm114, %v560, 0
  %570 = vmatpush.msra.mxu0 0.0
  %571 = vmatpush.msra.mxu0 0.0
  %572 = vmatpush.msra.mxu0 0.0
  %573 = vmatpush.msra.mxu0 0.0
  %574 = vmatpush.msra.mxu0 0.0
  %575 = vmatpush.msra.mxu0 0.0
  %576 = vmatpush.msra.mxu0 0.0
  %577 = vmatpush.msra.mxu0 0.0
  %578 = vmatpush.msra.mxu0 0.0
  %579 = vmatpush.msra.mxu0 0.0
  %580 = vmatpush.msra.mxu0 0.0
  %581 = vmatpush.msra.mxu0 0.0
  %582 = vmatpush.msra.mxu0 0.0
  %583 = vmatpush.msra.mxu0 0.0
  %584 = vmatpush.msra.mxu0 %v456
  %585 = vmatpush.msra.mxu0 %v453
  %586 = vmatmul.f32.gmra.mxu0 %v565
  %v587 = vpop.f32.mrf.mxu0
  %v588 = vadd.f32 %v562, %v587
  %589 = vmatmul.f32.gmra.mxu0 %v568
  %v590 = vpop.f32.mrf.mxu0
  %v591 = vadd.f32 %v562, %v590
  %592 = vdwg.mxu0
  %v593 = vmax.f32 %v588, 0.0
  %v594 = vmax.f32 %v591, 0.0
  %v595 = vld [vmem:[%s10] sm:$0xff]
  %v596 = vld [vmem:[%s10 + $0x8] sm:$0xff]
  %v597 = vld [vmem:[%s11] sm:$0x1]
  %v598 = vld [vmem:[%s12] sm:$0x1]
  %v599 = vld [vmem:[%s13] sm:$0x1]
  %v601 = vsel %vm114, %v245, 0
  %v604 = vsel %vm114, %v246, 0
  %606 = vmatpush.msra.mxu0 0.0
  %607 = vmatpush.msra.mxu0 0.0
  %608 = vmatpush.msra.mxu0 0.0
  %609 = vmatpush.msra.mxu0 0.0
  %610 = vmatpush.msra.mxu0 0.0
  %611 = vmatpush.msra.mxu0 0.0
  %612 = vmatpush.msra.mxu0 0.0
  %613 = vmatpush.msra.mxu0 0.0
  %614 = vmatpush.msra.mxu0 0.0
  %615 = vmatpush.msra.mxu0 0.0
  %616 = vmatpush.msra.mxu0 0.0
  %617 = vmatpush.msra.mxu0 0.0
  %618 = vmatpush.msra.mxu0 0.0
  %619 = vmatpush.msra.mxu0 0.0
  %620 = vmatpush.msra.mxu0 %v596
  %621 = vmatpush.msra.mxu0 %v595
  %622 = vmatmul.f32.gmra.mxu0 %v601
  %v623 = vpop.f32.mrf.mxu0
  %v624 = vadd.f32 0.0, %v623
  %625 = vmatmul.f32.gmra.mxu0 %v604
  %v626 = vpop.f32.mrf.mxu0
  %v627 = vadd.f32 0.0, %v626
  %628 = vdwg.mxu0
  %v630 = vperm.slane %v598, 0
  %v632 = vmul.f32 %v624, %v630
  %v633 = vmul.f32 %v627, %v630
  %v634 = vsel %vm79, %v632, 0.0
  %635 = vadd.xlane.f32.xlu0 %v634
  %v636 = vpop.xlane.xlu0 %635
  %v637 = vsel %vm79, %v633, 0.0
  %638 = vadd.xlane.f32.xlu0 %v637
  %v639 = vpop.xlane.xlu0 %638
  %v641 = vsel %vm79, %v597, 0
  %v644 = vsel %vm79, %v624, 0
  %v647 = vsel %vm79, %v627, 0
  %649 = vmatpush.xpose.msra.mxu0 0.0
  %650 = vmatpush.xpose.msra.mxu0 0.0
  %651 = vmatpush.xpose.msra.mxu0 0.0
  %652 = vmatpush.xpose.msra.mxu0 0.0
  %653 = vmatpush.xpose.msra.mxu0 0.0
  %654 = vmatpush.xpose.msra.mxu0 0.0
  %655 = vmatpush.xpose.msra.mxu0 0.0
  %656 = vmatpush.xpose.msra.mxu0 0.0
  %657 = vmatpush.xpose.msra.mxu0 0.0
  %658 = vmatpush.xpose.msra.mxu0 0.0
  %659 = vmatpush.xpose.msra.mxu0 0.0
  %660 = vmatpush.xpose.msra.mxu0 0.0
  %661 = vmatpush.xpose.msra.mxu0 0.0
  %662 = vmatpush.xpose.msra.mxu0 0.0
  %663 = vmatpush.xpose.msra.mxu0 %v647
  %664 = vmatpush.xpose.msra.mxu0 %v644
  %665 = vmatmul.f32.gmra.mxu0 %v641
  %v666 = vpop.f32.mrf.mxu0
  %v667 = vadd.f32 0.0, %v666
  %668 = vdwg.mxu0
  %v669 = vperm.slane %v667, 0
  %v670 = vadd.f32 %v636, %v669
  %v671 = vadd.f32 %v639, %v669
  %vm672 = vcmp.gt.f32.partialorder %v670, 0.0
  %vm673 = vcmp.gt.f32.partialorder %v671, 0.0
  %v674 = vmul.f32 %v670, 0.2
  %v675 = vmul.f32 %v671, 0.2
  %v676 = vsel %vm672, %v670, %v674
  %v677 = vsel %vm673, %v671, %v675
  %v678 = vsel %vm159, %v676, -1e+30
  %v679 = vsel %vm160, %v677, -1e+30
  %v680 = vsel %vm114, %v678, -inf
  %681 = vmax.xlane.f32.xlu0 %v680
  %v682 = vpop.xlane.xlu0 %681
  %v683 = vsel %vm114, %v679, -inf
  %684 = vmax.xlane.f32.xlu0 %v683
  %v685 = vpop.xlane.xlu0 %684
  %v686 = vsub.f32 %v678, %v682
  %v687 = vsub.f32 %v679, %v685
  %v688 = vmul.f32 %v686, 1.442695
  %v689 = vpow.pop %v688
  %v690 = vmul.f32 %v687, 1.442695
  %v691 = vpow.pop %v690
  %v692 = vsel %vm159, %v689, 0.0
  %v693 = vsel %vm160, %v691, 0.0
  %v694 = vsel %vm114, %v692, 0.0
  %695 = vadd.xlane.f32.xlu0 %v694
  %v696 = vpop.xlane.xlu0 %695
  %v697 = vsel %vm114, %v693, 0.0
  %698 = vadd.xlane.f32.xlu0 %v697
  %v699 = vpop.xlane.xlu0 %698
  %v700 = vrcp.pop %v696
  %v701 = vmul.f32 %v696, %v700
  %v702 = vsub.f32 1.0, %v701
  %v703 = vmul.f32 %v700, %v702
  %v704 = vadd.f32 %v700, %v703
  %vm705 = vweird.f32 %v696
  %vm706 = vweird.f32 %v700
  %vm707 = vmor %vm705, %vm706
  %v708 = vsel %vm707, %v700, %v704
  %v709 = vand.u32 2147483647, %v696
  %vm710 = vcmp.eq.f32.partialorder %v709, 8.507059e+37
  %v711 = vand.u32 %v696, 2147483648
  %v712 = vor.u32 1.1754944e-38, %v711
  %v713 = vsel %vm710, %v712, %v708
  %v714 = vmul.f32 %v692, %v713
  %v715 = vrcp.pop %v699
  %v716 = vmul.f32 %v699, %v715
  %v717 = vsub.f32 1.0, %v716
  %v718 = vmul.f32 %v715, %v717
  %v719 = vadd.f32 %v715, %v718
  %vm720 = vweird.f32 %v699
  %vm721 = vweird.f32 %v715
  %vm722 = vmor %vm720, %vm721
  %v723 = vsel %vm722, %v715, %v719
  %v724 = vand.u32 2147483647, %v699
  %vm725 = vcmp.eq.f32.partialorder %v724, 8.507059e+37
  %v726 = vand.u32 %v699, 2147483648
  %v727 = vor.u32 1.1754944e-38, %v726
  %v728 = vsel %vm725, %v727, %v723
  %v729 = vmul.f32 %v693, %v728
  %v731 = vperm.slane %v599, 0
  %v734 = vsel %vm114, %v714, 0
  %v737 = vsel %vm114, %v729, 0
  %739 = vmatpush.msra.mxu0 0.0
  %740 = vmatpush.msra.mxu0 0.0
  %741 = vmatpush.msra.mxu0 0.0
  %742 = vmatpush.msra.mxu0 0.0
  %743 = vmatpush.msra.mxu0 0.0
  %744 = vmatpush.msra.mxu0 0.0
  %745 = vmatpush.msra.mxu0 0.0
  %746 = vmatpush.msra.mxu0 0.0
  %747 = vmatpush.msra.mxu0 0.0
  %748 = vmatpush.msra.mxu0 0.0
  %749 = vmatpush.msra.mxu0 0.0
  %750 = vmatpush.msra.mxu0 0.0
  %751 = vmatpush.msra.mxu0 0.0
  %752 = vmatpush.msra.mxu0 0.0
  %753 = vmatpush.msra.mxu0 %v627
  %754 = vmatpush.msra.mxu0 %v624
  %755 = vmatmul.f32.gmra.mxu0 %v734
  %v756 = vpop.f32.mrf.mxu0
  %v757 = vadd.f32 %v731, %v756
  %758 = vmatmul.f32.gmra.mxu0 %v737
  %v759 = vpop.f32.mrf.mxu0
  %v760 = vadd.f32 %v731, %v759
  %761 = vdwg.mxu0
  %v762 = vxor.u32 %v757, 2147483648
  %v763 = vxor.u32 %v760, 2147483648
  %v764 = vmul.f32 %v762, 1.442695
  %v765 = vpow.pop %v764
  %v766 = vmul.f32 %v763, 1.442695
  %v767 = vpow.pop %v766
  %v768 = vadd.f32 %v765, 1.0
  %v769 = vadd.f32 %v767, 1.0
  %v770 = vrcp.pop %v768
  %v771 = vmul.f32 %v768, %v770
  %v772 = vsub.f32 1.0, %v771
  %v773 = vmul.f32 %v770, %v772
  %v774 = vadd.f32 %v770, %v773
  %vm775 = vweird.f32 %v768
  %vm776 = vweird.f32 %v770
  %vm777 = vmor %vm775, %vm776
  %v778 = vsel %vm777, %v770, %v774
  %v779 = vand.u32 2147483647, %v768
  %vm780 = vcmp.eq.f32.partialorder %v779, 8.507059e+37
  %v781 = vand.u32 %v768, 2147483648
  %v782 = vor.u32 1.1754944e-38, %v781
  %v783 = vsel %vm780, %v782, %v778
  %v784 = vmul.f32 1.0, %v783
  %v785 = vrcp.pop %v769
  %v786 = vmul.f32 %v769, %v785
  %v787 = vsub.f32 1.0, %v786
  %v788 = vmul.f32 %v785, %v787
  %v789 = vadd.f32 %v785, %v788
  %vm790 = vweird.f32 %v769
  %vm791 = vweird.f32 %v785
  %vm792 = vmor %vm790, %vm791
  %v793 = vsel %vm792, %v785, %v789
  %v794 = vand.u32 2147483647, %v769
  %vm795 = vcmp.eq.f32.partialorder %v794, 8.507059e+37
  %v796 = vand.u32 %v769, 2147483648
  %v797 = vor.u32 1.1754944e-38, %v796
  %v798 = vsel %vm795, %v797, %v793
  %v799 = vmul.f32 1.0, %v798
  %v800 = vld [vmem:[%s6] sm:$0xff]
  %v801 = vld [vmem:[%s6 + $0x8] sm:$0xff]
  %v802 = vld [vmem:[%s7] sm:$0xff]
  %v803 = vld [vmem:[%s7 + $0x8] sm:$0xff]
  %805 = vset.pattern.permute.xlu0 0
  %806 = vperm.xlu0 %805, %v802
  %v807 = vpop.permute.xlu0 %806
  %810 = vset.pattern.permute.xlu0 0
  %811 = vperm.xlu0 %810, %v803
  %v812 = vpop.permute.xlu0 %811
  %v815 = vsel %vm114, %v800, 0
  %v818 = vsel %vm114, %v801, 0
  %820 = vmatpush.msra.mxu0 0.0
  %821 = vmatpush.msra.mxu0 0.0
  %822 = vmatpush.msra.mxu0 0.0
  %823 = vmatpush.msra.mxu0 0.0
  %824 = vmatpush.msra.mxu0 0.0
  %825 = vmatpush.msra.mxu0 0.0
  %826 = vmatpush.msra.mxu0 0.0
  %827 = vmatpush.msra.mxu0 0.0
  %828 = vmatpush.msra.mxu0 0.0
  %829 = vmatpush.msra.mxu0 0.0
  %830 = vmatpush.msra.mxu0 0.0
  %831 = vmatpush.msra.mxu0 0.0
  %832 = vmatpush.msra.mxu0 0.0
  %833 = vmatpush.msra.mxu0 0.0
  %834 = vmatpush.msra.mxu0 %v246
  %835 = vmatpush.msra.mxu0 %v245
  %836 = vmatmul.f32.gmra.mxu0 %v815
  %v837 = vpop.f32.mrf.mxu0
  %v838 = vadd.f32 %v807, %v837
  %839 = vmatmul.f32.gmra.mxu0 %v818
  %v840 = vpop.f32.mrf.mxu0
  %v841 = vadd.f32 %v812, %v840
  %842 = vdwg.mxu0
  %v843 = vsel %vm114, %v838, 0.0
  %v844 = vsel %vm114, %v841, 0.0
  %v845 = vadd.f32 %v843, %v844
  %v846 = vrot.slane %v845, 4
  %v847 = vadd.f32 %v845, %v846
  %v848 = vrot.slane %v847, 2
  %v849 = vadd.f32 %v847, %v848
  %v850 = vrot.slane %v849, 1
  %v851 = vadd.f32 %v849, %v850
  %v852 = vrcp.pop 16.0
  %v853 = vmul.f32 16.0, %v852
  %v854 = vsub.f32 1.0, %v853
  %v855 = vmul.f32 %v852, %v854
  %v856 = vadd.f32 %v852, %v855
  %vm857 = vweird.f32 %v852
  %v858 = vsel %vm857, %v852, %v856
  %v859 = vmul.f32 %v851, %v858
  %v860 = vmul.f32 %v838, %v838
  %v861 = vmul.f32 %v841, %v841
  %v862 = vsel %vm114, %v860, 0.0
  %v863 = vsel %vm114, %v861, 0.0
  %v864 = vadd.f32 %v862, %v863
  %v865 = vrot.slane %v864, 4
  %v866 = vadd.f32 %v864, %v865
  %v867 = vrot.slane %v866, 2
  %v868 = vadd.f32 %v866, %v867
  %v869 = vrot.slane %v868, 1
  %v870 = vadd.f32 %v868, %v869
  %v871 = vmul.f32 %v870, %v858
  %v872 = vmul.f32 %v859, %v859
  %v873 = vsub.f32 %v871, %v872
  %v874 = vsub.f32 %v838, %v859
  %v875 = vsub.f32 %v841, %v859
  %v876 = vadd.f32 %v873, 1e-05
  %v877 = vrsqrt.pop %v876
  %v878 = vmul.f32 %v877, %v876
  %v879 = vmul.f32 %v878, %v877
  %v880 = vmul.f32 0.5, %v879
  %v881 = vsub.f32 1.5, %v880
  %v882 = vmul.f32 %v877, %v881
  %vm883 = vweird.f32 %v876
  %vm884 = vweird.f32 %v877
  %vm885 = vmor %vm883, %vm884
  %v886 = vsel %vm885, %v877, %v882
  %v887 = vmul.f32 %v874, %v886
  %v888 = vmul.f32 %v875, %v886
  %v889 = vld [vmem:[%s8] sm:$0x1]
  %v891 = vperm.slane %v889, 0
  %v893 = vmul.f32 %v887, %v891
  %v894 = vmul.f32 %v888, %v891
  %v895 = vld [vmem:[%s9] sm:$0x1]
  %v897 = vperm.slane %v895, 0
  %v899 = vadd.f32 %v893, %v897
  %v900 = vadd.f32 %v894, %v897
  %v901 = vmax.f32 %v899, 0.0
  %v902 = vmax.f32 %v900, 0.0
  %s903 = scalar_lea.vmem %s6, 16
  %v904 = vld [vmem:[%s903] sm:$0xff]
  %v905 = vld [vmem:[%s903 + $0x8] sm:$0xff]
  %s906 = scalar_lea.vmem %s7, 16
  %v907 = vld [vmem:[%s906] sm:$0xff]
  %v908 = vld [vmem:[%s906 + $0x8] sm:$0xff]
  %910 = vset.pattern.permute.xlu0 0
  %911 = vperm.xlu0 %910, %v907
  %v912 = vpop.permute.xlu0 %911
  %915 = vset.pattern.permute.xlu0 0
  %916 = vperm.xlu0 %915, %v908
  %v917 = vpop.permute.xlu0 %916
  %v920 = vsel %vm114, %v904, 0
  %v923 = vsel %vm114, %v905, 0
  %925 = vmatpush.msra.mxu0 0.0
  %926 = vmatpush.msra.mxu0 0.0
  %927 = vmatpush.msra.mxu0 0.0
  %928 = vmatpush.msra.mxu0 0.0
  %929 = vmatpush.msra.mxu0 0.0
  %930 = vmatpush.msra.mxu0 0.0
  %931 = vmatpush.msra.mxu0 0.0
  %932 = vmatpush.msra.mxu0 0.0
  %933 = vmatpush.msra.mxu0 0.0
  %934 = vmatpush.msra.mxu0 0.0
  %935 = vmatpush.msra.mxu0 0.0
  %936 = vmatpush.msra.mxu0 0.0
  %937 = vmatpush.msra.mxu0 0.0
  %938 = vmatpush.msra.mxu0 0.0
  %939 = vmatpush.msra.mxu0 %v902
  %940 = vmatpush.msra.mxu0 %v901
  %941 = vmatmul.f32.gmra.mxu0 %v920
  %v942 = vpop.f32.mrf.mxu0
  %v943 = vadd.f32 %v912, %v942
  %944 = vmatmul.f32.gmra.mxu0 %v923
  %v945 = vpop.f32.mrf.mxu0
  %v946 = vadd.f32 %v917, %v945
  %947 = vdwg.mxu0
  %v948 = vsel %vm114, %v943, 0.0
  %v949 = vsel %vm114, %v946, 0.0
  %v950 = vadd.f32 %v948, %v949
  %v951 = vrot.slane %v950, 4
  %v952 = vadd.f32 %v950, %v951
  %v953 = vrot.slane %v952, 2
  %v954 = vadd.f32 %v952, %v953
  %v955 = vrot.slane %v954, 1
  %v956 = vadd.f32 %v954, %v955
  %v957 = vmul.f32 %v956, %v858
  %v958 = vmul.f32 %v943, %v943
  %v959 = vmul.f32 %v946, %v946
  %v960 = vsel %vm114, %v958, 0.0
  %v961 = vsel %vm114, %v959, 0.0
  %v962 = vadd.f32 %v960, %v961
  %v963 = vrot.slane %v962, 4
  %v964 = vadd.f32 %v962, %v963
  %v965 = vrot.slane %v964, 2
  %v966 = vadd.f32 %v964, %v965
  %v967 = vrot.slane %v966, 1
  %v968 = vadd.f32 %v966, %v967
  %v969 = vmul.f32 %v968, %v858
  %v970 = vmul.f32 %v957, %v957
  %v971 = vsub.f32 %v969, %v970
  %v972 = vsub.f32 %v943, %v957
  %v973 = vsub.f32 %v946, %v957
  %v974 = vadd.f32 %v971, 1e-05
  %v975 = vrsqrt.pop %v974
  %v976 = vmul.f32 %v975, %v974
  %v977 = vmul.f32 %v976, %v975
  %v978 = vmul.f32 0.5, %v977
  %v979 = vsub.f32 1.5, %v978
  %v980 = vmul.f32 %v975, %v979
  %vm981 = vweird.f32 %v974
  %vm982 = vweird.f32 %v975
  %vm983 = vmor %vm981, %vm982
  %v984 = vsel %vm983, %v975, %v980
  %v985 = vmul.f32 %v972, %v984
  %v986 = vmul.f32 %v973, %v984
  %s987 = scalar_lea.vmem %s8, 1
  %v988 = vld [vmem:[%s987] sm:$0x1]
  %v990 = vperm.slane %v988, 0
  %v992 = vmul.f32 %v985, %v990
  %v993 = vmul.f32 %v986, %v990
  %s994 = scalar_lea.vmem %s9, 1
  %v995 = vld [vmem:[%s994] sm:$0x1]
  %v997 = vperm.slane %v995, 0
  %v999 = vadd.f32 %v992, %v997
  %v1000 = vadd.f32 %v993, %v997
  %v1001 = vxor.u32 %v999, 2147483648
  %v1002 = vxor.u32 %v1000, 2147483648
  %v1003 = vmul.f32 %v1001, 1.442695
  %v1004 = vpow.pop %v1003
  %v1005 = vmul.f32 %v1002, 1.442695
  %v1006 = vpow.pop %v1005
  %v1007 = vadd.f32 %v1004, 1.0
  %v1008 = vadd.f32 %v1006, 1.0
  %v1009 = vrcp.pop %v1007
  %v1010 = vmul.f32 %v1007, %v1009
  %v1011 = vsub.f32 1.0, %v1010
  %v1012 = vmul.f32 %v1009, %v1011
  %v1013 = vadd.f32 %v1009, %v1012
  %vm1014 = vweird.f32 %v1007
  %vm1015 = vweird.f32 %v1009
  %vm1016 = vmor %vm1014, %vm1015
  %v1017 = vsel %vm1016, %v1009, %v1013
  %v1018 = vand.u32 2147483647, %v1007
  %vm1019 = vcmp.eq.f32.partialorder %v1018, 8.507059e+37
  %v1020 = vand.u32 %v1007, 2147483648
  %v1021 = vor.u32 1.1754944e-38, %v1020
  %v1022 = vsel %vm1019, %v1021, %v1017
  %v1023 = vmul.f32 1.0, %v1022
  %v1024 = vrcp.pop %v1008
  %v1025 = vmul.f32 %v1008, %v1024
  %v1026 = vsub.f32 1.0, %v1025
  %v1027 = vmul.f32 %v1024, %v1026
  %v1028 = vadd.f32 %v1024, %v1027
  %vm1029 = vweird.f32 %v1008
  %vm1030 = vweird.f32 %v1024
  %vm1031 = vmor %vm1029, %vm1030
  %v1032 = vsel %vm1031, %v1024, %v1028
  %v1033 = vand.u32 2147483647, %v1008
  %vm1034 = vcmp.eq.f32.partialorder %v1033, 8.507059e+37
  %v1035 = vand.u32 %v1008, 2147483648
  %v1036 = vor.u32 1.1754944e-38, %v1035
  %v1037 = vsel %vm1034, %v1036, %v1032
  %v1038 = vmul.f32 1.0, %v1037
  %v1039 = vmul.f32 %v419, %v1023
  %v1040 = vmul.f32 %v420, %v1038
  %s1041 = scalar_lea.vmem %s10, 16
  %v1042 = vld [vmem:[%s1041] sm:$0xff]
  %v1043 = vld [vmem:[%s1041 + $0x8] sm:$0xff]
  %s1044 = scalar_lea.vmem %s11, 1
  %v1045 = vld [vmem:[%s1044] sm:$0x1]
  %s1046 = scalar_lea.vmem %s12, 1
  %v1047 = vld [vmem:[%s1046] sm:$0x1]
  %s1048 = scalar_lea.vmem %s13, 1
  %v1049 = vld [vmem:[%s1048] sm:$0x1]
  %v1051 = vsel %vm114, %v1039, 0
  %v1054 = vsel %vm114, %v1040, 0
  %1056 = vmatpush.msra.mxu0 0.0
  %1057 = vmatpush.msra.mxu0 0.0
  %1058 = vmatpush.msra.mxu0 0.0
  %1059 = vmatpush.msra.mxu0 0.0
  %1060 = vmatpush.msra.mxu0 0.0
  %1061 = vmatpush.msra.mxu0 0.0
  %1062 = vmatpush.msra.mxu0 0.0
  %1063 = vmatpush.msra.mxu0 0.0
  %1064 = vmatpush.msra.mxu0 0.0
  %1065 = vmatpush.msra.mxu0 0.0
  %1066 = vmatpush.msra.mxu0 0.0
  %1067 = vmatpush.msra.mxu0 0.0
  %1068 = vmatpush.msra.mxu0 0.0
  %1069 = vmatpush.msra.mxu0 0.0
  %1070 = vmatpush.msra.mxu0 %v1043
  %1071 = vmatpush.msra.mxu0 %v1042
  %1072 = vmatmul.f32.gmra.mxu0 %v1051
  %v1073 = vpop.f32.mrf.mxu0
  %v1074 = vadd.f32 0.0, %v1073
  %1075 = vmatmul.f32.gmra.mxu0 %v1054
  %v1076 = vpop.f32.mrf.mxu0
  %v1077 = vadd.f32 0.0, %v1076
  %1078 = vdwg.mxu0
  %v1080 = vperm.slane %v1047, 0
  %v1082 = vmul.f32 %v1074, %v1080
  %v1083 = vmul.f32 %v1077, %v1080
  %v1084 = vsel %vm79, %v1082, 0.0
  %1085 = vadd.xlane.f32.xlu0 %v1084
  %v1086 = vpop.xlane.xlu0 %1085
  %v1087 = vsel %vm79, %v1083, 0.0
  %1088 = vadd.xlane.f32.xlu0 %v1087
  %v1089 = vpop.xlane.xlu0 %1088
  %v1091 = vsel %vm79, %v1045, 0
  %v1094 = vsel %vm79, %v1074, 0
  %v1097 = vsel %vm79, %v1077, 0
  %1099 = vmatpush.xpose.msra.mxu0 0.0
  %1100 = vmatpush.xpose.msra.mxu0 0.0
  %1101 = vmatpush.xpose.msra.mxu0 0.0
  %1102 = vmatpush.xpose.msra.mxu0 0.0
  %1103 = vmatpush.xpose.msra.mxu0 0.0
  %1104 = vmatpush.xpose.msra.mxu0 0.0
  %1105 = vmatpush.xpose.msra.mxu0 0.0
  %1106 = vmatpush.xpose.msra.mxu0 0.0
  %1107 = vmatpush.xpose.msra.mxu0 0.0
  %1108 = vmatpush.xpose.msra.mxu0 0.0
  %1109 = vmatpush.xpose.msra.mxu0 0.0
  %1110 = vmatpush.xpose.msra.mxu0 0.0
  %1111 = vmatpush.xpose.msra.mxu0 0.0
  %1112 = vmatpush.xpose.msra.mxu0 0.0
  %1113 = vmatpush.xpose.msra.mxu0 %v1097
  %1114 = vmatpush.xpose.msra.mxu0 %v1094
  %1115 = vmatmul.f32.gmra.mxu0 %v1091
  %v1116 = vpop.f32.mrf.mxu0
  %v1117 = vadd.f32 0.0, %v1116
  %1118 = vdwg.mxu0
  %v1119 = vperm.slane %v1117, 0
  %v1120 = vadd.f32 %v1086, %v1119
  %v1121 = vadd.f32 %v1089, %v1119
  %vm1122 = vcmp.gt.f32.partialorder %v1120, 0.0
  %vm1123 = vcmp.gt.f32.partialorder %v1121, 0.0
  %v1124 = vmul.f32 %v1120, 0.2
  %v1125 = vmul.f32 %v1121, 0.2
  %v1126 = vsel %vm1122, %v1120, %v1124
  %v1127 = vsel %vm1123, %v1121, %v1125
  %v1128 = vsel %vm333, %v1126, -1e+30
  %v1129 = vsel %vm334, %v1127, -1e+30
  %v1130 = vsel %vm114, %v1128, -inf
  %1131 = vmax.xlane.f32.xlu0 %v1130
  %v1132 = vpop.xlane.xlu0 %1131
  %v1133 = vsel %vm114, %v1129, -inf
  %1134 = vmax.xlane.f32.xlu0 %v1133
  %v1135 = vpop.xlane.xlu0 %1134
  %v1136 = vsub.f32 %v1128, %v1132
  %v1137 = vsub.f32 %v1129, %v1135
  %v1138 = vmul.f32 %v1136, 1.442695
  %v1139 = vpow.pop %v1138
  %v1140 = vmul.f32 %v1137, 1.442695
  %v1141 = vpow.pop %v1140
  %v1142 = vsel %vm333, %v1139, 0.0
  %v1143 = vsel %vm334, %v1141, 0.0
  %v1144 = vsel %vm114, %v1142, 0.0
  %1145 = vadd.xlane.f32.xlu0 %v1144
  %v1146 = vpop.xlane.xlu0 %1145
  %v1147 = vsel %vm114, %v1143, 0.0
  %1148 = vadd.xlane.f32.xlu0 %v1147
  %v1149 = vpop.xlane.xlu0 %1148
  %v1150 = vrcp.pop %v1146
  %v1151 = vmul.f32 %v1146, %v1150
  %v1152 = vsub.f32 1.0, %v1151
  %v1153 = vmul.f32 %v1150, %v1152
  %v1154 = vadd.f32 %v1150, %v1153
  %vm1155 = vweird.f32 %v1146
  %vm1156 = vweird.f32 %v1150
  %vm1157 = vmor %vm1155, %vm1156
  %v1158 = vsel %vm1157, %v1150, %v1154
  %v1159 = vand.u32 2147483647, %v1146
  %vm1160 = vcmp.eq.f32.partialorder %v1159, 8.507059e+37
  %v1161 = vand.u32 %v1146, 2147483648
  %v1162 = vor.u32 1.1754944e-38, %v1161
  %v1163 = vsel %vm1160, %v1162, %v1158
  %v1164 = vmul.f32 %v1142, %v1163
  %v1165 = vrcp.pop %v1149
  %v1166 = vmul.f32 %v1149, %v1165
  %v1167 = vsub.f32 1.0, %v1166
  %v1168 = vmul.f32 %v1165, %v1167
  %v1169 = vadd.f32 %v1165, %v1168
  %vm1170 = vweird.f32 %v1149
  %vm1171 = vweird.f32 %v1165
  %vm1172 = vmor %vm1170, %vm1171
  %v1173 = vsel %vm1172, %v1165, %v1169
  %v1174 = vand.u32 2147483647, %v1149
  %vm1175 = vcmp.eq.f32.partialorder %v1174, 8.507059e+37
  %v1176 = vand.u32 %v1149, 2147483648
  %v1177 = vor.u32 1.1754944e-38, %v1176
  %v1178 = vsel %vm1175, %v1177, %v1173
  %v1179 = vmul.f32 %v1143, %v1178
  %v1181 = vperm.slane %v1049, 0
  %v1184 = vsel %vm114, %v1164, 0
  %v1187 = vsel %vm114, %v1179, 0
  %1189 = vmatpush.msra.mxu0 0.0
  %1190 = vmatpush.msra.mxu0 0.0
  %1191 = vmatpush.msra.mxu0 0.0
  %1192 = vmatpush.msra.mxu0 0.0
  %1193 = vmatpush.msra.mxu0 0.0
  %1194 = vmatpush.msra.mxu0 0.0
  %1195 = vmatpush.msra.mxu0 0.0
  %1196 = vmatpush.msra.mxu0 0.0
  %1197 = vmatpush.msra.mxu0 0.0
  %1198 = vmatpush.msra.mxu0 0.0
  %1199 = vmatpush.msra.mxu0 0.0
  %1200 = vmatpush.msra.mxu0 0.0
  %1201 = vmatpush.msra.mxu0 0.0
  %1202 = vmatpush.msra.mxu0 0.0
  %1203 = vmatpush.msra.mxu0 %v1077
  %1204 = vmatpush.msra.mxu0 %v1074
  %1205 = vmatmul.f32.gmra.mxu0 %v1184
  %v1206 = vpop.f32.mrf.mxu0
  %v1207 = vadd.f32 %v1181, %v1206
  %1208 = vmatmul.f32.gmra.mxu0 %v1187
  %v1209 = vpop.f32.mrf.mxu0
  %v1210 = vadd.f32 %v1181, %v1209
  %1211 = vdwg.mxu0
  %v1212 = vxor.u32 %v1207, 2147483648
  %v1213 = vxor.u32 %v1210, 2147483648
  %v1214 = vmul.f32 %v1212, 1.442695
  %v1215 = vpow.pop %v1214
  %v1216 = vmul.f32 %v1213, 1.442695
  %v1217 = vpow.pop %v1216
  %v1218 = vadd.f32 %v1215, 1.0
  %v1219 = vadd.f32 %v1217, 1.0
  %v1220 = vrcp.pop %v1218
  %v1221 = vmul.f32 %v1218, %v1220
  %v1222 = vsub.f32 1.0, %v1221
  %v1223 = vmul.f32 %v1220, %v1222
  %v1224 = vadd.f32 %v1220, %v1223
  %vm1225 = vweird.f32 %v1218
  %vm1226 = vweird.f32 %v1220
  %vm1227 = vmor %vm1225, %vm1226
  %v1228 = vsel %vm1227, %v1220, %v1224
  %v1229 = vand.u32 2147483647, %v1218
  %vm1230 = vcmp.eq.f32.partialorder %v1229, 8.507059e+37
  %v1231 = vand.u32 %v1218, 2147483648
  %v1232 = vor.u32 1.1754944e-38, %v1231
  %v1233 = vsel %vm1230, %v1232, %v1228
  %v1234 = vmul.f32 1.0, %v1233
  %v1235 = vrcp.pop %v1219
  %v1236 = vmul.f32 %v1219, %v1235
  %v1237 = vsub.f32 1.0, %v1236
  %v1238 = vmul.f32 %v1235, %v1237
  %v1239 = vadd.f32 %v1235, %v1238
  %vm1240 = vweird.f32 %v1219
  %vm1241 = vweird.f32 %v1235
  %vm1242 = vmor %vm1240, %vm1241
  %v1243 = vsel %vm1242, %v1235, %v1239
  %v1244 = vand.u32 2147483647, %v1219
  %vm1245 = vcmp.eq.f32.partialorder %v1244, 8.507059e+37
  %v1246 = vand.u32 %v1219, 2147483648
  %v1247 = vor.u32 1.1754944e-38, %v1246
  %v1248 = vsel %vm1245, %v1247, %v1243
  %v1249 = vmul.f32 1.0, %v1248
  %s1250 = scalar_lea.vmem %s6, 32
  %v1251 = vld [vmem:[%s1250] sm:$0xff]
  %v1252 = vld [vmem:[%s1250 + $0x8] sm:$0xff]
  %s1253 = scalar_lea.vmem %s7, 32
  %v1254 = vld [vmem:[%s1253] sm:$0xff]
  %v1255 = vld [vmem:[%s1253 + $0x8] sm:$0xff]
  %1257 = vset.pattern.permute.xlu0 0
  %1258 = vperm.xlu0 %1257, %v1254
  %v1259 = vpop.permute.xlu0 %1258
  %1262 = vset.pattern.permute.xlu0 0
  %1263 = vperm.xlu0 %1262, %v1255
  %v1264 = vpop.permute.xlu0 %1263
  %v1267 = vsel %vm114, %v1251, 0
  %v1270 = vsel %vm114, %v1252, 0
  %1272 = vmatpush.msra.mxu0 0.0
  %1273 = vmatpush.msra.mxu0 0.0
  %1274 = vmatpush.msra.mxu0 0.0
  %1275 = vmatpush.msra.mxu0 0.0
  %1276 = vmatpush.msra.mxu0 0.0
  %1277 = vmatpush.msra.mxu0 0.0
  %1278 = vmatpush.msra.mxu0 0.0
  %1279 = vmatpush.msra.mxu0 0.0
  %1280 = vmatpush.msra.mxu0 0.0
  %1281 = vmatpush.msra.mxu0 0.0
  %1282 = vmatpush.msra.mxu0 0.0
  %1283 = vmatpush.msra.mxu0 0.0
  %1284 = vmatpush.msra.mxu0 0.0
  %1285 = vmatpush.msra.mxu0 0.0
  %1286 = vmatpush.msra.mxu0 %v1040
  %1287 = vmatpush.msra.mxu0 %v1039
  %1288 = vmatmul.f32.gmra.mxu0 %v1267
  %v1289 = vpop.f32.mrf.mxu0
  %v1290 = vadd.f32 %v1259, %v1289
  %1291 = vmatmul.f32.gmra.mxu0 %v1270
  %v1292 = vpop.f32.mrf.mxu0
  %v1293 = vadd.f32 %v1264, %v1292
  %1294 = vdwg.mxu0
  %v1295 = vsel %vm114, %v1290, 0.0
  %v1296 = vsel %vm114, %v1293, 0.0
  %v1297 = vadd.f32 %v1295, %v1296
  %v1298 = vrot.slane %v1297, 4
  %v1299 = vadd.f32 %v1297, %v1298
  %v1300 = vrot.slane %v1299, 2
  %v1301 = vadd.f32 %v1299, %v1300
  %v1302 = vrot.slane %v1301, 1
  %v1303 = vadd.f32 %v1301, %v1302
  %v1304 = vmul.f32 %v1303, %v858
  %v1305 = vmul.f32 %v1290, %v1290
  %v1306 = vmul.f32 %v1293, %v1293
  %v1307 = vsel %vm114, %v1305, 0.0
  %v1308 = vsel %vm114, %v1306, 0.0
  %v1309 = vadd.f32 %v1307, %v1308
  %v1310 = vrot.slane %v1309, 4
  %v1311 = vadd.f32 %v1309, %v1310
  %v1312 = vrot.slane %v1311, 2
  %v1313 = vadd.f32 %v1311, %v1312
  %v1314 = vrot.slane %v1313, 1
  %v1315 = vadd.f32 %v1313, %v1314
  %v1316 = vmul.f32 %v1315, %v858
  %v1317 = vmul.f32 %v1304, %v1304
  %v1318 = vsub.f32 %v1316, %v1317
  %v1319 = vsub.f32 %v1290, %v1304
  %v1320 = vsub.f32 %v1293, %v1304
  %v1321 = vadd.f32 %v1318, 1e-05
  %v1322 = vrsqrt.pop %v1321
  %v1323 = vmul.f32 %v1322, %v1321
  %v1324 = vmul.f32 %v1323, %v1322
  %v1325 = vmul.f32 0.5, %v1324
  %v1326 = vsub.f32 1.5, %v1325
  %v1327 = vmul.f32 %v1322, %v1326
  %vm1328 = vweird.f32 %v1321
  %vm1329 = vweird.f32 %v1322
  %vm1330 = vmor %vm1328, %vm1329
  %v1331 = vsel %vm1330, %v1322, %v1327
  %v1332 = vmul.f32 %v1319, %v1331
  %v1333 = vmul.f32 %v1320, %v1331
  %s1334 = scalar_lea.vmem %s8, 2
  %v1335 = vld [vmem:[%s1334] sm:$0x1]
  %v1337 = vperm.slane %v1335, 0
  %v1339 = vmul.f32 %v1332, %v1337
  %v1340 = vmul.f32 %v1333, %v1337
  %s1341 = scalar_lea.vmem %s9, 2
  %v1342 = vld [vmem:[%s1341] sm:$0x1]
  %v1344 = vperm.slane %v1342, 0
  %v1346 = vadd.f32 %v1339, %v1344
  %v1347 = vadd.f32 %v1340, %v1344
  %v1348 = vmax.f32 %v1346, 0.0
  %v1349 = vmax.f32 %v1347, 0.0
  %s1350 = scalar_lea.vmem %s6, 48
  %v1351 = vld [vmem:[%s1350] sm:$0xff]
  %v1352 = vld [vmem:[%s1350 + $0x8] sm:$0xff]
  %s1353 = scalar_lea.vmem %s7, 48
  %v1354 = vld [vmem:[%s1353] sm:$0xff]
  %v1355 = vld [vmem:[%s1353 + $0x8] sm:$0xff]
  %1357 = vset.pattern.permute.xlu0 0
  %1358 = vperm.xlu0 %1357, %v1354
  %v1359 = vpop.permute.xlu0 %1358
  %1362 = vset.pattern.permute.xlu0 0
  %1363 = vperm.xlu0 %1362, %v1355
  %v1364 = vpop.permute.xlu0 %1363
  %v1367 = vsel %vm114, %v1351, 0
  %v1370 = vsel %vm114, %v1352, 0
  %1372 = vmatpush.msra.mxu0 0.0
  %1373 = vmatpush.msra.mxu0 0.0
  %1374 = vmatpush.msra.mxu0 0.0
  %1375 = vmatpush.msra.mxu0 0.0
  %1376 = vmatpush.msra.mxu0 0.0
  %1377 = vmatpush.msra.mxu0 0.0
  %1378 = vmatpush.msra.mxu0 0.0
  %1379 = vmatpush.msra.mxu0 0.0
  %1380 = vmatpush.msra.mxu0 0.0
  %1381 = vmatpush.msra.mxu0 0.0
  %1382 = vmatpush.msra.mxu0 0.0
  %1383 = vmatpush.msra.mxu0 0.0
  %1384 = vmatpush.msra.mxu0 0.0
  %1385 = vmatpush.msra.mxu0 0.0
  %1386 = vmatpush.msra.mxu0 %v1349
  %1387 = vmatpush.msra.mxu0 %v1348
  %1388 = vmatmul.f32.gmra.mxu0 %v1367
  %v1389 = vpop.f32.mrf.mxu0
  %v1390 = vadd.f32 %v1359, %v1389
  %1391 = vmatmul.f32.gmra.mxu0 %v1370
  %v1392 = vpop.f32.mrf.mxu0
  %v1393 = vadd.f32 %v1364, %v1392
  %1394 = vdwg.mxu0
  %v1395 = vsel %vm114, %v1390, 0.0
  %v1396 = vsel %vm114, %v1393, 0.0
  %v1397 = vadd.f32 %v1395, %v1396
  %v1398 = vrot.slane %v1397, 4
  %v1399 = vadd.f32 %v1397, %v1398
  %v1400 = vrot.slane %v1399, 2
  %v1401 = vadd.f32 %v1399, %v1400
  %v1402 = vrot.slane %v1401, 1
  %v1403 = vadd.f32 %v1401, %v1402
  %v1404 = vmul.f32 %v1403, %v858
  %v1405 = vmul.f32 %v1390, %v1390
  %v1406 = vmul.f32 %v1393, %v1393
  %v1407 = vsel %vm114, %v1405, 0.0
  %v1408 = vsel %vm114, %v1406, 0.0
  %v1409 = vadd.f32 %v1407, %v1408
  %v1410 = vrot.slane %v1409, 4
  %v1411 = vadd.f32 %v1409, %v1410
  %v1412 = vrot.slane %v1411, 2
  %v1413 = vadd.f32 %v1411, %v1412
  %v1414 = vrot.slane %v1413, 1
  %v1415 = vadd.f32 %v1413, %v1414
  %v1416 = vmul.f32 %v1415, %v858
  %v1417 = vmul.f32 %v1404, %v1404
  %v1418 = vsub.f32 %v1416, %v1417
  %v1419 = vsub.f32 %v1390, %v1404
  %v1420 = vsub.f32 %v1393, %v1404
  %v1421 = vadd.f32 %v1418, 1e-05
  %v1422 = vrsqrt.pop %v1421
  %v1423 = vmul.f32 %v1422, %v1421
  %v1424 = vmul.f32 %v1423, %v1422
  %v1425 = vmul.f32 0.5, %v1424
  %v1426 = vsub.f32 1.5, %v1425
  %v1427 = vmul.f32 %v1422, %v1426
  %vm1428 = vweird.f32 %v1421
  %vm1429 = vweird.f32 %v1422
  %vm1430 = vmor %vm1428, %vm1429
  %v1431 = vsel %vm1430, %v1422, %v1427
  %v1432 = vmul.f32 %v1419, %v1431
  %v1433 = vmul.f32 %v1420, %v1431
  %s1434 = scalar_lea.vmem %s8, 3
  %v1435 = vld [vmem:[%s1434] sm:$0x1]
  %v1437 = vperm.slane %v1435, 0
  %v1439 = vmul.f32 %v1432, %v1437
  %v1440 = vmul.f32 %v1433, %v1437
  %s1441 = scalar_lea.vmem %s9, 3
  %v1442 = vld [vmem:[%s1441] sm:$0x1]
  %v1444 = vperm.slane %v1442, 0
  %v1446 = vadd.f32 %v1439, %v1444
  %v1447 = vadd.f32 %v1440, %v1444
  %v1448 = vxor.u32 %v1446, 2147483648
  %v1449 = vxor.u32 %v1447, 2147483648
  %v1450 = vmul.f32 %v1448, 1.442695
  %v1451 = vpow.pop %v1450
  %v1452 = vmul.f32 %v1449, 1.442695
  %v1453 = vpow.pop %v1452
  %v1454 = vadd.f32 %v1451, 1.0
  %v1455 = vadd.f32 %v1453, 1.0
  %v1456 = vrcp.pop %v1454
  %v1457 = vmul.f32 %v1454, %v1456
  %v1458 = vsub.f32 1.0, %v1457
  %v1459 = vmul.f32 %v1456, %v1458
  %v1460 = vadd.f32 %v1456, %v1459
  %vm1461 = vweird.f32 %v1454
  %vm1462 = vweird.f32 %v1456
  %vm1463 = vmor %vm1461, %vm1462
  %v1464 = vsel %vm1463, %v1456, %v1460
  %v1465 = vand.u32 2147483647, %v1454
  %vm1466 = vcmp.eq.f32.partialorder %v1465, 8.507059e+37
  %v1467 = vand.u32 %v1454, 2147483648
  %v1468 = vor.u32 1.1754944e-38, %v1467
  %v1469 = vsel %vm1466, %v1468, %v1464
  %v1470 = vmul.f32 1.0, %v1469
  %v1471 = vrcp.pop %v1455
  %v1472 = vmul.f32 %v1455, %v1471
  %v1473 = vsub.f32 1.0, %v1472
  %v1474 = vmul.f32 %v1471, %v1473
  %v1475 = vadd.f32 %v1471, %v1474
  %vm1476 = vweird.f32 %v1455
  %vm1477 = vweird.f32 %v1471
  %vm1478 = vmor %vm1476, %vm1477
  %v1479 = vsel %vm1478, %v1471, %v1475
  %v1480 = vand.u32 2147483647, %v1455
  %vm1481 = vcmp.eq.f32.partialorder %v1480, 8.507059e+37
  %v1482 = vand.u32 %v1455, 2147483648
  %v1483 = vor.u32 1.1754944e-38, %v1482
  %v1484 = vsel %vm1481, %v1483, %v1479
  %v1485 = vmul.f32 1.0, %v1484
  %v1486 = vmul.f32 %v593, %v1470
  %v1487 = vmul.f32 %v594, %v1485
  %s1488 = scalar_lea.vmem %s10, 32
  %v1489 = vld [vmem:[%s1488] sm:$0xff]
  %v1490 = vld [vmem:[%s1488 + $0x8] sm:$0xff]
  %s1491 = scalar_lea.vmem %s11, 2
  %v1492 = vld [vmem:[%s1491] sm:$0x1]
  %s1493 = scalar_lea.vmem %s12, 2
  %v1494 = vld [vmem:[%s1493] sm:$0x1]
  %s1495 = scalar_lea.vmem %s13, 2
  %v1496 = vld [vmem:[%s1495] sm:$0x1]
  %v1498 = vsel %vm114, %v1486, 0
  %v1501 = vsel %vm114, %v1487, 0
  %1503 = vmatpush.msra.mxu0 0.0
  %1504 = vmatpush.msra.mxu0 0.0
  %1505 = vmatpush.msra.mxu0 0.0
  %1506 = vmatpush.msra.mxu0 0.0
  %1507 = vmatpush.msra.mxu0 0.0
  %1508 = vmatpush.msra.mxu0 0.0
  %1509 = vmatpush.msra.mxu0 0.0
  %1510 = vmatpush.msra.mxu0 0.0
  %1511 = vmatpush.msra.mxu0 0.0
  %1512 = vmatpush.msra.mxu0 0.0
  %1513 = vmatpush.msra.mxu0 0.0
  %1514 = vmatpush.msra.mxu0 0.0
  %1515 = vmatpush.msra.mxu0 0.0
  %1516 = vmatpush.msra.mxu0 0.0
  %1517 = vmatpush.msra.mxu0 %v1490
  %1518 = vmatpush.msra.mxu0 %v1489
  %1519 = vmatmul.f32.gmra.mxu0 %v1498
  %v1520 = vpop.f32.mrf.mxu0
  %v1521 = vadd.f32 0.0, %v1520
  %1522 = vmatmul.f32.gmra.mxu0 %v1501
  %v1523 = vpop.f32.mrf.mxu0
  %v1524 = vadd.f32 0.0, %v1523
  %1525 = vdwg.mxu0
  %v1527 = vperm.slane %v1494, 0
  %v1529 = vmul.f32 %v1521, %v1527
  %v1530 = vmul.f32 %v1524, %v1527
  %v1531 = vsel %vm79, %v1529, 0.0
  %1532 = vadd.xlane.f32.xlu0 %v1531
  %v1533 = vpop.xlane.xlu0 %1532
  %v1534 = vsel %vm79, %v1530, 0.0
  %1535 = vadd.xlane.f32.xlu0 %v1534
  %v1536 = vpop.xlane.xlu0 %1535
  %v1538 = vsel %vm79, %v1492, 0
  %v1541 = vsel %vm79, %v1521, 0
  %v1544 = vsel %vm79, %v1524, 0
  %1546 = vmatpush.xpose.msra.mxu0 0.0
  %1547 = vmatpush.xpose.msra.mxu0 0.0
  %1548 = vmatpush.xpose.msra.mxu0 0.0
  %1549 = vmatpush.xpose.msra.mxu0 0.0
  %1550 = vmatpush.xpose.msra.mxu0 0.0
  %1551 = vmatpush.xpose.msra.mxu0 0.0
  %1552 = vmatpush.xpose.msra.mxu0 0.0
  %1553 = vmatpush.xpose.msra.mxu0 0.0
  %1554 = vmatpush.xpose.msra.mxu0 0.0
  %1555 = vmatpush.xpose.msra.mxu0 0.0
  %1556 = vmatpush.xpose.msra.mxu0 0.0
  %1557 = vmatpush.xpose.msra.mxu0 0.0
  %1558 = vmatpush.xpose.msra.mxu0 0.0
  %1559 = vmatpush.xpose.msra.mxu0 0.0
  %1560 = vmatpush.xpose.msra.mxu0 %v1544
  %1561 = vmatpush.xpose.msra.mxu0 %v1541
  %1562 = vmatmul.f32.gmra.mxu0 %v1538
  %v1563 = vpop.f32.mrf.mxu0
  %v1564 = vadd.f32 0.0, %v1563
  %1565 = vdwg.mxu0
  %v1566 = vperm.slane %v1564, 0
  %v1567 = vadd.f32 %v1533, %v1566
  %v1568 = vadd.f32 %v1536, %v1566
  %vm1569 = vcmp.gt.f32.partialorder %v1567, 0.0
  %vm1570 = vcmp.gt.f32.partialorder %v1568, 0.0
  %v1571 = vmul.f32 %v1567, 0.2
  %v1572 = vmul.f32 %v1568, 0.2
  %v1573 = vsel %vm1569, %v1567, %v1571
  %v1574 = vsel %vm1570, %v1568, %v1572
  %v1575 = vsel %vm507, %v1573, -1e+30
  %v1576 = vsel %vm508, %v1574, -1e+30
  %v1577 = vsel %vm114, %v1575, -inf
  %1578 = vmax.xlane.f32.xlu0 %v1577
  %v1579 = vpop.xlane.xlu0 %1578
  %v1580 = vsel %vm114, %v1576, -inf
  %1581 = vmax.xlane.f32.xlu0 %v1580
  %v1582 = vpop.xlane.xlu0 %1581
  %v1583 = vsub.f32 %v1575, %v1579
  %v1584 = vsub.f32 %v1576, %v1582
  %v1585 = vmul.f32 %v1583, 1.442695
  %v1586 = vpow.pop %v1585
  %v1587 = vmul.f32 %v1584, 1.442695
  %v1588 = vpow.pop %v1587
  %v1589 = vsel %vm507, %v1586, 0.0
  %v1590 = vsel %vm508, %v1588, 0.0
  %v1591 = vsel %vm114, %v1589, 0.0
  %1592 = vadd.xlane.f32.xlu0 %v1591
  %v1593 = vpop.xlane.xlu0 %1592
  %v1594 = vsel %vm114, %v1590, 0.0
  %1595 = vadd.xlane.f32.xlu0 %v1594
  %v1596 = vpop.xlane.xlu0 %1595
  %v1597 = vrcp.pop %v1593
  %v1598 = vmul.f32 %v1593, %v1597
  %v1599 = vsub.f32 1.0, %v1598
  %v1600 = vmul.f32 %v1597, %v1599
  %v1601 = vadd.f32 %v1597, %v1600
  %vm1602 = vweird.f32 %v1593
  %vm1603 = vweird.f32 %v1597
  %vm1604 = vmor %vm1602, %vm1603
  %v1605 = vsel %vm1604, %v1597, %v1601
  %v1606 = vand.u32 2147483647, %v1593
  %vm1607 = vcmp.eq.f32.partialorder %v1606, 8.507059e+37
  %v1608 = vand.u32 %v1593, 2147483648
  %v1609 = vor.u32 1.1754944e-38, %v1608
  %v1610 = vsel %vm1607, %v1609, %v1605
  %v1611 = vmul.f32 %v1589, %v1610
  %v1612 = vrcp.pop %v1596
  %v1613 = vmul.f32 %v1596, %v1612
  %v1614 = vsub.f32 1.0, %v1613
  %v1615 = vmul.f32 %v1612, %v1614
  %v1616 = vadd.f32 %v1612, %v1615
  %vm1617 = vweird.f32 %v1596
  %vm1618 = vweird.f32 %v1612
  %vm1619 = vmor %vm1617, %vm1618
  %v1620 = vsel %vm1619, %v1612, %v1616
  %v1621 = vand.u32 2147483647, %v1596
  %vm1622 = vcmp.eq.f32.partialorder %v1621, 8.507059e+37
  %v1623 = vand.u32 %v1596, 2147483648
  %v1624 = vor.u32 1.1754944e-38, %v1623
  %v1625 = vsel %vm1622, %v1624, %v1620
  %v1626 = vmul.f32 %v1590, %v1625
  %v1628 = vperm.slane %v1496, 0
  %v1631 = vsel %vm114, %v1611, 0
  %v1634 = vsel %vm114, %v1626, 0
  %1636 = vmatpush.msra.mxu0 0.0
  %1637 = vmatpush.msra.mxu0 0.0
  %1638 = vmatpush.msra.mxu0 0.0
  %1639 = vmatpush.msra.mxu0 0.0
  %1640 = vmatpush.msra.mxu0 0.0
  %1641 = vmatpush.msra.mxu0 0.0
  %1642 = vmatpush.msra.mxu0 0.0
  %1643 = vmatpush.msra.mxu0 0.0
  %1644 = vmatpush.msra.mxu0 0.0
  %1645 = vmatpush.msra.mxu0 0.0
  %1646 = vmatpush.msra.mxu0 0.0
  %1647 = vmatpush.msra.mxu0 0.0
  %1648 = vmatpush.msra.mxu0 0.0
  %1649 = vmatpush.msra.mxu0 0.0
  %1650 = vmatpush.msra.mxu0 %v1524
  %1651 = vmatpush.msra.mxu0 %v1521
  %1652 = vmatmul.f32.gmra.mxu0 %v1631
  %v1653 = vpop.f32.mrf.mxu0
  %v1654 = vadd.f32 %v1628, %v1653
  %1655 = vmatmul.f32.gmra.mxu0 %v1634
  %v1656 = vpop.f32.mrf.mxu0
  %v1657 = vadd.f32 %v1628, %v1656
  %1658 = vdwg.mxu0
  %v1659 = vxor.u32 %v1654, 2147483648
  %v1660 = vxor.u32 %v1657, 2147483648
  %v1661 = vmul.f32 %v1659, 1.442695
  %v1662 = vpow.pop %v1661
  %v1663 = vmul.f32 %v1660, 1.442695
  %v1664 = vpow.pop %v1663
  %v1665 = vadd.f32 %v1662, 1.0
  %v1666 = vadd.f32 %v1664, 1.0
  %v1667 = vrcp.pop %v1665
  %v1668 = vmul.f32 %v1665, %v1667
  %v1669 = vsub.f32 1.0, %v1668
  %v1670 = vmul.f32 %v1667, %v1669
  %v1671 = vadd.f32 %v1667, %v1670
  %vm1672 = vweird.f32 %v1665
  %vm1673 = vweird.f32 %v1667
  %vm1674 = vmor %vm1672, %vm1673
  %v1675 = vsel %vm1674, %v1667, %v1671
  %v1676 = vand.u32 2147483647, %v1665
  %vm1677 = vcmp.eq.f32.partialorder %v1676, 8.507059e+37
  %v1678 = vand.u32 %v1665, 2147483648
  %v1679 = vor.u32 1.1754944e-38, %v1678
  %v1680 = vsel %vm1677, %v1679, %v1675
  %v1681 = vmul.f32 1.0, %v1680
  %v1682 = vrcp.pop %v1666
  %v1683 = vmul.f32 %v1666, %v1682
  %v1684 = vsub.f32 1.0, %v1683
  %v1685 = vmul.f32 %v1682, %v1684
  %v1686 = vadd.f32 %v1682, %v1685
  %vm1687 = vweird.f32 %v1666
  %vm1688 = vweird.f32 %v1682
  %vm1689 = vmor %vm1687, %vm1688
  %v1690 = vsel %vm1689, %v1682, %v1686
  %v1691 = vand.u32 2147483647, %v1666
  %vm1692 = vcmp.eq.f32.partialorder %v1691, 8.507059e+37
  %v1693 = vand.u32 %v1666, 2147483648
  %v1694 = vor.u32 1.1754944e-38, %v1693
  %v1695 = vsel %vm1692, %v1694, %v1690
  %v1696 = vmul.f32 1.0, %v1695
  %1697 = vst.msk [vmem:[%s18] sm:$0xff] %vm79, %v784
  %1698 = vst.msk [vmem:[%s18 + $0x8] sm:$0xff] %vm79, %v799
  %v1699 = vld [vmem:[%s14] sm:$0xff]
  %v1700 = vld [vmem:[%s14 + $0x8] sm:$0xff]
  %v1701 = vld [vmem:[%s15] sm:$0xff]
  %v1702 = vld [vmem:[%s15 + $0x8] sm:$0xff]
  %1704 = vset.pattern.permute.xlu0 0
  %1705 = vperm.xlu0 %1704, %v1701
  %v1706 = vpop.permute.xlu0 %1705
  %1709 = vset.pattern.permute.xlu0 0
  %1710 = vperm.xlu0 %1709, %v1702
  %v1711 = vpop.permute.xlu0 %1710
  %v1714 = vsel %vm114, %v1699, 0
  %v1717 = vsel %vm114, %v1700, 0
  %1719 = vmatpush.msra.mxu0 0.0
  %1720 = vmatpush.msra.mxu0 0.0
  %1721 = vmatpush.msra.mxu0 0.0
  %1722 = vmatpush.msra.mxu0 0.0
  %1723 = vmatpush.msra.mxu0 0.0
  %1724 = vmatpush.msra.mxu0 0.0
  %1725 = vmatpush.msra.mxu0 0.0
  %1726 = vmatpush.msra.mxu0 0.0
  %1727 = vmatpush.msra.mxu0 0.0
  %1728 = vmatpush.msra.mxu0 0.0
  %1729 = vmatpush.msra.mxu0 0.0
  %1730 = vmatpush.msra.mxu0 0.0
  %1731 = vmatpush.msra.mxu0 0.0
  %1732 = vmatpush.msra.mxu0 0.0
  %1733 = vmatpush.msra.mxu0 %v799
  %1734 = vmatpush.msra.mxu0 %v784
  %1735 = vmatmul.f32.gmra.mxu0 %v1714
  %v1736 = vpop.f32.mrf.mxu0
  %v1737 = vadd.f32 %v1706, %v1736
  %1738 = vmatmul.f32.gmra.mxu0 %v1717
  %v1739 = vpop.f32.mrf.mxu0
  %v1740 = vadd.f32 %v1711, %v1739
  %1741 = vdwg.mxu0
  %v1742 = vsel %vm79, %v1737, 0.0
  %v1743 = vsel %vm79, %v1740, 0.0
  %v1744 = vadd.f32 %v1742, %v1743
  %v1745 = vrot.slane %v1744, 4
  %v1746 = vadd.f32 %v1744, %v1745
  %v1747 = vrot.slane %v1746, 2
  %v1748 = vadd.f32 %v1746, %v1747
  %v1749 = vrot.slane %v1748, 1
  %v1750 = vadd.f32 %v1748, %v1749
  %v1751 = vmul.f32 %v1750, %v858
  %v1752 = vmul.f32 %v1737, %v1737
  %v1753 = vmul.f32 %v1740, %v1740
  %v1754 = vsel %vm79, %v1752, 0.0
  %v1755 = vsel %vm79, %v1753, 0.0
  %v1756 = vadd.f32 %v1754, %v1755
  %v1757 = vrot.slane %v1756, 4
  %v1758 = vadd.f32 %v1756, %v1757
  %v1759 = vrot.slane %v1758, 2
  %v1760 = vadd.f32 %v1758, %v1759
  %v1761 = vrot.slane %v1760, 1
  %v1762 = vadd.f32 %v1760, %v1761
  %v1763 = vmul.f32 %v1762, %v858
  %v1764 = vmul.f32 %v1751, %v1751
  %v1765 = vsub.f32 %v1763, %v1764
  %v1766 = vsub.f32 %v1737, %v1751
  %v1767 = vsub.f32 %v1740, %v1751
  %v1768 = vadd.f32 %v1765, 1e-05
  %v1769 = vrsqrt.pop %v1768
  %v1770 = vmul.f32 %v1769, %v1768
  %v1771 = vmul.f32 %v1770, %v1769
  %v1772 = vmul.f32 0.5, %v1771
  %v1773 = vsub.f32 1.5, %v1772
  %v1774 = vmul.f32 %v1769, %v1773
  %vm1775 = vweird.f32 %v1768
  %vm1776 = vweird.f32 %v1769
  %vm1777 = vmor %vm1775, %vm1776
  %v1778 = vsel %vm1777, %v1769, %v1774
  %v1779 = vmul.f32 %v1766, %v1778
  %v1780 = vmul.f32 %v1767, %v1778
  %v1781 = vld [vmem:[%s16] sm:$0x1]
  %v1783 = vperm.slane %v1781, 0
  %v1785 = vmul.f32 %v1779, %v1783
  %v1786 = vmul.f32 %v1780, %v1783
  %v1787 = vld [vmem:[%s17] sm:$0x1]
  %v1789 = vperm.slane %v1787, 0
  %v1791 = vadd.f32 %v1785, %v1789
  %v1792 = vadd.f32 %v1786, %v1789
  %v1793 = vmax.f32 %v1791, 0.0
  %v1794 = vmax.f32 %v1792, 0.0
  %s1795 = scalar_lea.vmem %s14, 16
  %v1796 = vld [vmem:[%s1795] sm:$0xff]
  %v1797 = vld [vmem:[%s1795 + $0x8] sm:$0xff]
  %s1798 = scalar_lea.vmem %s15, 16
  %v1799 = vld [vmem:[%s1798] sm:$0xff]
  %v1800 = vld [vmem:[%s1798 + $0x8] sm:$0xff]
  %1802 = vset.pattern.permute.xlu0 0
  %1803 = vperm.xlu0 %1802, %v1799
  %v1804 = vpop.permute.xlu0 %1803
  %1807 = vset.pattern.permute.xlu0 0
  %1808 = vperm.xlu0 %1807, %v1800
  %v1809 = vpop.permute.xlu0 %1808
  %v1812 = vsel %vm114, %v1796, 0
  %v1815 = vsel %vm114, %v1797, 0
  %1817 = vmatpush.msra.mxu0 0.0
  %1818 = vmatpush.msra.mxu0 0.0
  %1819 = vmatpush.msra.mxu0 0.0
  %1820 = vmatpush.msra.mxu0 0.0
  %1821 = vmatpush.msra.mxu0 0.0
  %1822 = vmatpush.msra.mxu0 0.0
  %1823 = vmatpush.msra.mxu0 0.0
  %1824 = vmatpush.msra.mxu0 0.0
  %1825 = vmatpush.msra.mxu0 0.0
  %1826 = vmatpush.msra.mxu0 0.0
  %1827 = vmatpush.msra.mxu0 0.0
  %1828 = vmatpush.msra.mxu0 0.0
  %1829 = vmatpush.msra.mxu0 0.0
  %1830 = vmatpush.msra.mxu0 0.0
  %1831 = vmatpush.msra.mxu0 %v1794
  %1832 = vmatpush.msra.mxu0 %v1793
  %1833 = vmatmul.f32.gmra.mxu0 %v1812
  %v1834 = vpop.f32.mrf.mxu0
  %v1835 = vadd.f32 %v1804, %v1834
  %1836 = vmatmul.f32.gmra.mxu0 %v1815
  %v1837 = vpop.f32.mrf.mxu0
  %v1838 = vadd.f32 %v1809, %v1837
  %1839 = vdwg.mxu0
  %v1840 = vsel %vm79, %v1835, 0.0
  %v1841 = vsel %vm79, %v1838, 0.0
  %v1842 = vadd.f32 %v1840, %v1841
  %v1843 = vrot.slane %v1842, 4
  %v1844 = vadd.f32 %v1842, %v1843
  %v1845 = vrot.slane %v1844, 2
  %v1846 = vadd.f32 %v1844, %v1845
  %v1847 = vrot.slane %v1846, 1
  %v1848 = vadd.f32 %v1846, %v1847
  %v1849 = vmul.f32 %v1848, %v858
  %v1850 = vmul.f32 %v1835, %v1835
  %v1851 = vmul.f32 %v1838, %v1838
  %v1852 = vsel %vm79, %v1850, 0.0
  %v1853 = vsel %vm79, %v1851, 0.0
  %v1854 = vadd.f32 %v1852, %v1853
  %v1855 = vrot.slane %v1854, 4
  %v1856 = vadd.f32 %v1854, %v1855
  %v1857 = vrot.slane %v1856, 2
  %v1858 = vadd.f32 %v1856, %v1857
  %v1859 = vrot.slane %v1858, 1
  %v1860 = vadd.f32 %v1858, %v1859
  %v1861 = vmul.f32 %v1860, %v858
  %v1862 = vmul.f32 %v1849, %v1849
  %v1863 = vsub.f32 %v1861, %v1862
  %v1864 = vsub.f32 %v1835, %v1849
  %v1865 = vsub.f32 %v1838, %v1849
  %v1866 = vadd.f32 %v1863, 1e-05
  %v1867 = vrsqrt.pop %v1866
  %v1868 = vmul.f32 %v1867, %v1866
  %v1869 = vmul.f32 %v1868, %v1867
  %v1870 = vmul.f32 0.5, %v1869
  %v1871 = vsub.f32 1.5, %v1870
  %v1872 = vmul.f32 %v1867, %v1871
  %vm1873 = vweird.f32 %v1866
  %vm1874 = vweird.f32 %v1867
  %vm1875 = vmor %vm1873, %vm1874
  %v1876 = vsel %vm1875, %v1867, %v1872
  %v1877 = vmul.f32 %v1864, %v1876
  %v1878 = vmul.f32 %v1865, %v1876
  %s1879 = scalar_lea.vmem %s16, 1
  %v1880 = vld [vmem:[%s1879] sm:$0x1]
  %v1882 = vperm.slane %v1880, 0
  %v1884 = vmul.f32 %v1877, %v1882
  %v1885 = vmul.f32 %v1878, %v1882
  %s1886 = scalar_lea.vmem %s17, 1
  %v1887 = vld [vmem:[%s1886] sm:$0x1]
  %v1889 = vperm.slane %v1887, 0
  %v1891 = vadd.f32 %v1884, %v1889
  %v1892 = vadd.f32 %v1885, %v1889
  %v1893 = vxor.u32 %v1891, 2147483648
  %v1894 = vxor.u32 %v1892, 2147483648
  %v1895 = vmul.f32 %v1893, 1.442695
  %v1896 = vpow.pop %v1895
  %v1897 = vmul.f32 %v1894, 1.442695
  %v1898 = vpow.pop %v1897
  %v1899 = vadd.f32 %v1896, 1.0
  %v1900 = vadd.f32 %v1898, 1.0
  %v1901 = vrcp.pop %v1899
  %v1902 = vmul.f32 %v1899, %v1901
  %v1903 = vsub.f32 1.0, %v1902
  %v1904 = vmul.f32 %v1901, %v1903
  %v1905 = vadd.f32 %v1901, %v1904
  %vm1906 = vweird.f32 %v1899
  %vm1907 = vweird.f32 %v1901
  %vm1908 = vmor %vm1906, %vm1907
  %v1909 = vsel %vm1908, %v1901, %v1905
  %v1910 = vand.u32 2147483647, %v1899
  %vm1911 = vcmp.eq.f32.partialorder %v1910, 8.507059e+37
  %v1912 = vand.u32 %v1899, 2147483648
  %v1913 = vor.u32 1.1754944e-38, %v1912
  %v1914 = vsel %vm1911, %v1913, %v1909
  %v1915 = vmul.f32 1.0, %v1914
  %v1916 = vrcp.pop %v1900
  %v1917 = vmul.f32 %v1900, %v1916
  %v1918 = vsub.f32 1.0, %v1917
  %v1919 = vmul.f32 %v1916, %v1918
  %v1920 = vadd.f32 %v1916, %v1919
  %vm1921 = vweird.f32 %v1900
  %vm1922 = vweird.f32 %v1916
  %vm1923 = vmor %vm1921, %vm1922
  %v1924 = vsel %vm1923, %v1916, %v1920
  %v1925 = vand.u32 2147483647, %v1900
  %vm1926 = vcmp.eq.f32.partialorder %v1925, 8.507059e+37
  %v1927 = vand.u32 %v1900, 2147483648
  %v1928 = vor.u32 1.1754944e-38, %v1927
  %v1929 = vsel %vm1926, %v1928, %v1924
  %v1930 = vmul.f32 1.0, %v1929
  %v1931 = vmul.f32 %v1234, %v1915
  %v1932 = vmul.f32 %v1249, %v1930
  %s1933 = scalar_lea.vmem %s18, 16
  %1934 = vst.msk [vmem:[%s1933] sm:$0xff] %vm79, %v1931
  %1935 = vst.msk [vmem:[%s1933 + $0x8] sm:$0xff] %vm79, %v1932
  %s1936 = scalar_lea.vmem %s14, 32
  %v1937 = vld [vmem:[%s1936] sm:$0xff]
  %v1938 = vld [vmem:[%s1936 + $0x8] sm:$0xff]
  %s1939 = scalar_lea.vmem %s15, 32
  %v1940 = vld [vmem:[%s1939] sm:$0xff]
  %v1941 = vld [vmem:[%s1939 + $0x8] sm:$0xff]
  %1943 = vset.pattern.permute.xlu0 0
  %1944 = vperm.xlu0 %1943, %v1940
  %v1945 = vpop.permute.xlu0 %1944
  %1948 = vset.pattern.permute.xlu0 0
  %1949 = vperm.xlu0 %1948, %v1941
  %v1950 = vpop.permute.xlu0 %1949
  %v1953 = vsel %vm114, %v1937, 0
  %v1956 = vsel %vm114, %v1938, 0
  %1958 = vmatpush.msra.mxu0 0.0
  %1959 = vmatpush.msra.mxu0 0.0
  %1960 = vmatpush.msra.mxu0 0.0
  %1961 = vmatpush.msra.mxu0 0.0
  %1962 = vmatpush.msra.mxu0 0.0
  %1963 = vmatpush.msra.mxu0 0.0
  %1964 = vmatpush.msra.mxu0 0.0
  %1965 = vmatpush.msra.mxu0 0.0
  %1966 = vmatpush.msra.mxu0 0.0
  %1967 = vmatpush.msra.mxu0 0.0
  %1968 = vmatpush.msra.mxu0 0.0
  %1969 = vmatpush.msra.mxu0 0.0
  %1970 = vmatpush.msra.mxu0 0.0
  %1971 = vmatpush.msra.mxu0 0.0
  %1972 = vmatpush.msra.mxu0 %v1932
  %1973 = vmatpush.msra.mxu0 %v1931
  %1974 = vmatmul.f32.gmra.mxu0 %v1953
  %v1975 = vpop.f32.mrf.mxu0
  %v1976 = vadd.f32 %v1945, %v1975
  %1977 = vmatmul.f32.gmra.mxu0 %v1956
  %v1978 = vpop.f32.mrf.mxu0
  %v1979 = vadd.f32 %v1950, %v1978
  %1980 = vdwg.mxu0
  %v1981 = vsel %vm79, %v1976, 0.0
  %v1982 = vsel %vm79, %v1979, 0.0
  %v1983 = vadd.f32 %v1981, %v1982
  %v1984 = vrot.slane %v1983, 4
  %v1985 = vadd.f32 %v1983, %v1984
  %v1986 = vrot.slane %v1985, 2
  %v1987 = vadd.f32 %v1985, %v1986
  %v1988 = vrot.slane %v1987, 1
  %v1989 = vadd.f32 %v1987, %v1988
  %v1990 = vmul.f32 %v1989, %v858
  %v1991 = vmul.f32 %v1976, %v1976
  %v1992 = vmul.f32 %v1979, %v1979
  %v1993 = vsel %vm79, %v1991, 0.0
  %v1994 = vsel %vm79, %v1992, 0.0
  %v1995 = vadd.f32 %v1993, %v1994
  %v1996 = vrot.slane %v1995, 4
  %v1997 = vadd.f32 %v1995, %v1996
  %v1998 = vrot.slane %v1997, 2
  %v1999 = vadd.f32 %v1997, %v1998
  %v2000 = vrot.slane %v1999, 1
  %v2001 = vadd.f32 %v1999, %v2000
  %v2002 = vmul.f32 %v2001, %v858
  %v2003 = vmul.f32 %v1990, %v1990
  %v2004 = vsub.f32 %v2002, %v2003
  %v2005 = vsub.f32 %v1976, %v1990
  %v2006 = vsub.f32 %v1979, %v1990
  %v2007 = vadd.f32 %v2004, 1e-05
  %v2008 = vrsqrt.pop %v2007
  %v2009 = vmul.f32 %v2008, %v2007
  %v2010 = vmul.f32 %v2009, %v2008
  %v2011 = vmul.f32 0.5, %v2010
  %v2012 = vsub.f32 1.5, %v2011
  %v2013 = vmul.f32 %v2008, %v2012
  %vm2014 = vweird.f32 %v2007
  %vm2015 = vweird.f32 %v2008
  %vm2016 = vmor %vm2014, %vm2015
  %v2017 = vsel %vm2016, %v2008, %v2013
  %v2018 = vmul.f32 %v2005, %v2017
  %v2019 = vmul.f32 %v2006, %v2017
  %s2020 = scalar_lea.vmem %s16, 2
  %v2021 = vld [vmem:[%s2020] sm:$0x1]
  %v2023 = vperm.slane %v2021, 0
  %v2025 = vmul.f32 %v2018, %v2023
  %v2026 = vmul.f32 %v2019, %v2023
  %s2027 = scalar_lea.vmem %s17, 2
  %v2028 = vld [vmem:[%s2027] sm:$0x1]
  %v2030 = vperm.slane %v2028, 0
  %v2032 = vadd.f32 %v2025, %v2030
  %v2033 = vadd.f32 %v2026, %v2030
  %v2034 = vmax.f32 %v2032, 0.0
  %v2035 = vmax.f32 %v2033, 0.0
  %s2036 = scalar_lea.vmem %s14, 48
  %v2037 = vld [vmem:[%s2036] sm:$0xff]
  %v2038 = vld [vmem:[%s2036 + $0x8] sm:$0xff]
  %s2039 = scalar_lea.vmem %s15, 48
  %v2040 = vld [vmem:[%s2039] sm:$0xff]
  %v2041 = vld [vmem:[%s2039 + $0x8] sm:$0xff]
  %2043 = vset.pattern.permute.xlu0 0
  %2044 = vperm.xlu0 %2043, %v2040
  %v2045 = vpop.permute.xlu0 %2044
  %2048 = vset.pattern.permute.xlu0 0
  %2049 = vperm.xlu0 %2048, %v2041
  %v2050 = vpop.permute.xlu0 %2049
  %v2053 = vsel %vm114, %v2037, 0
  %v2056 = vsel %vm114, %v2038, 0
  %2058 = vmatpush.msra.mxu0 0.0
  %2059 = vmatpush.msra.mxu0 0.0
  %2060 = vmatpush.msra.mxu0 0.0
  %2061 = vmatpush.msra.mxu0 0.0
  %2062 = vmatpush.msra.mxu0 0.0
  %2063 = vmatpush.msra.mxu0 0.0
  %2064 = vmatpush.msra.mxu0 0.0
  %2065 = vmatpush.msra.mxu0 0.0
  %2066 = vmatpush.msra.mxu0 0.0
  %2067 = vmatpush.msra.mxu0 0.0
  %2068 = vmatpush.msra.mxu0 0.0
  %2069 = vmatpush.msra.mxu0 0.0
  %2070 = vmatpush.msra.mxu0 0.0
  %2071 = vmatpush.msra.mxu0 0.0
  %2072 = vmatpush.msra.mxu0 %v2035
  %2073 = vmatpush.msra.mxu0 %v2034
  %2074 = vmatmul.f32.gmra.mxu0 %v2053
  %v2075 = vpop.f32.mrf.mxu0
  %v2076 = vadd.f32 %v2045, %v2075
  %2077 = vmatmul.f32.gmra.mxu0 %v2056
  %v2078 = vpop.f32.mrf.mxu0
  %v2079 = vadd.f32 %v2050, %v2078
  %2080 = vdwg.mxu0
  %v2081 = vsel %vm79, %v2076, 0.0
  %v2082 = vsel %vm79, %v2079, 0.0
  %v2083 = vadd.f32 %v2081, %v2082
  %v2084 = vrot.slane %v2083, 4
  %v2085 = vadd.f32 %v2083, %v2084
  %v2086 = vrot.slane %v2085, 2
  %v2087 = vadd.f32 %v2085, %v2086
  %v2088 = vrot.slane %v2087, 1
  %v2089 = vadd.f32 %v2087, %v2088
  %v2090 = vmul.f32 %v2089, %v858
  %v2091 = vmul.f32 %v2076, %v2076
  %v2092 = vmul.f32 %v2079, %v2079
  %v2093 = vsel %vm79, %v2091, 0.0
  %v2094 = vsel %vm79, %v2092, 0.0
  %v2095 = vadd.f32 %v2093, %v2094
  %v2096 = vrot.slane %v2095, 4
  %v2097 = vadd.f32 %v2095, %v2096
  %v2098 = vrot.slane %v2097, 2
  %v2099 = vadd.f32 %v2097, %v2098
  %v2100 = vrot.slane %v2099, 1
  %v2101 = vadd.f32 %v2099, %v2100
  %v2102 = vmul.f32 %v2101, %v858
  %v2103 = vmul.f32 %v2090, %v2090
  %v2104 = vsub.f32 %v2102, %v2103
  %v2105 = vsub.f32 %v2076, %v2090
  %v2106 = vsub.f32 %v2079, %v2090
  %v2107 = vadd.f32 %v2104, 1e-05
  %v2108 = vrsqrt.pop %v2107
  %v2109 = vmul.f32 %v2108, %v2107
  %v2110 = vmul.f32 %v2109, %v2108
  %v2111 = vmul.f32 0.5, %v2110
  %v2112 = vsub.f32 1.5, %v2111
  %v2113 = vmul.f32 %v2108, %v2112
  %vm2114 = vweird.f32 %v2107
  %vm2115 = vweird.f32 %v2108
  %vm2116 = vmor %vm2114, %vm2115
  %v2117 = vsel %vm2116, %v2108, %v2113
  %v2118 = vmul.f32 %v2105, %v2117
  %v2119 = vmul.f32 %v2106, %v2117
  %s2120 = scalar_lea.vmem %s16, 3
  %v2121 = vld [vmem:[%s2120] sm:$0x1]
  %v2123 = vperm.slane %v2121, 0
  %v2125 = vmul.f32 %v2118, %v2123
  %v2126 = vmul.f32 %v2119, %v2123
  %s2127 = scalar_lea.vmem %s17, 3
  %v2128 = vld [vmem:[%s2127] sm:$0x1]
  %v2130 = vperm.slane %v2128, 0
  %v2132 = vadd.f32 %v2125, %v2130
  %v2133 = vadd.f32 %v2126, %v2130
  %v2134 = vxor.u32 %v2132, 2147483648
  %v2135 = vxor.u32 %v2133, 2147483648
  %v2136 = vmul.f32 %v2134, 1.442695
  %v2137 = vpow.pop %v2136
  %v2138 = vmul.f32 %v2135, 1.442695
  %v2139 = vpow.pop %v2138
  %v2140 = vadd.f32 %v2137, 1.0
  %v2141 = vadd.f32 %v2139, 1.0
  %v2142 = vrcp.pop %v2140
  %v2143 = vmul.f32 %v2140, %v2142
  %v2144 = vsub.f32 1.0, %v2143
  %v2145 = vmul.f32 %v2142, %v2144
  %v2146 = vadd.f32 %v2142, %v2145
  %vm2147 = vweird.f32 %v2140
  %vm2148 = vweird.f32 %v2142
  %vm2149 = vmor %vm2147, %vm2148
  %v2150 = vsel %vm2149, %v2142, %v2146
  %v2151 = vand.u32 2147483647, %v2140
  %vm2152 = vcmp.eq.f32.partialorder %v2151, 8.507059e+37
  %v2153 = vand.u32 %v2140, 2147483648
  %v2154 = vor.u32 1.1754944e-38, %v2153
  %v2155 = vsel %vm2152, %v2154, %v2150
  %v2156 = vmul.f32 1.0, %v2155
  %v2157 = vrcp.pop %v2141
  %v2158 = vmul.f32 %v2141, %v2157
  %v2159 = vsub.f32 1.0, %v2158
  %v2160 = vmul.f32 %v2157, %v2159
  %v2161 = vadd.f32 %v2157, %v2160
  %vm2162 = vweird.f32 %v2141
  %vm2163 = vweird.f32 %v2157
  %vm2164 = vmor %vm2162, %vm2163
  %v2165 = vsel %vm2164, %v2157, %v2161
  %v2166 = vand.u32 2147483647, %v2141
  %vm2167 = vcmp.eq.f32.partialorder %v2166, 8.507059e+37
  %v2168 = vand.u32 %v2141, 2147483648
  %v2169 = vor.u32 1.1754944e-38, %v2168
  %v2170 = vsel %vm2167, %v2169, %v2165
  %v2171 = vmul.f32 1.0, %v2170
  %v2172 = vmul.f32 %v1681, %v2156
  %v2173 = vmul.f32 %v1696, %v2171
  %s2174 = scalar_lea.vmem %s18, 32
  %2175 = vst.msk [vmem:[%s2174] sm:$0xff] %vm79, %v2172
  %2176 = vst.msk [vmem:[%s2174 + $0x8] sm:$0xff] %vm79, %v2173
  // Predicated region
  $region74: #{tpu_custom_call.1} parent=0 // pred_check
    _
  $region75: #{tpu_custom_call.1} parent=0 // pred_check_branch
    %2178 = sbr.rel (0) target = $region77
  $region76: #{tpu_custom_call.1} parent=0 // pred_region
    _
  $region77: #{tpu_custom_call.1} parent=0 // pred_fallthru
    _
  // Predicated region
  $region78: #{tpu_custom_call.1} parent=0 // pred_check
    _
  $region79: #{tpu_custom_call.1} parent=0 // pred_check_branch
    %2180 = sbr.rel (0) target = $region81
  $region80: #{tpu_custom_call.1} parent=0 // pred_region
    _
  $region81: #{tpu_custom_call.1} parent=0 // pred_fallthru
    _

</llo_original>
